<compile_context>
chip_gen: v7x
topology: tpu7x:2x2x1
jax: 0.10.0
libtpu: 0.0.40
codegen_flags: <defaults>
</compile_context>

<pallas_src>
import inspect

import jax
import jax.numpy as jnp
from jax import lax
from jax.experimental import pallas as pl
from jax.experimental.pallas import tpu as pltpu


def _round_up(x: int, m: int) -> int:
    return (x + m - 1) // m * m


def _vmem_capacity_bytes() -> int:
    """Per-core VMEM capacity; conservative fallback if the query is unavailable."""
    try:
        return int(pltpu.get_tpu_info().vmem_capacity_bytes)
    except Exception:
        return 64 << 20  # v7x per-TensorCore figure (most restrictive generation)


try:
    _PIPELINE_MODE_OK = (
        hasattr(pl, "Buffered")
        and "pipeline_mode" in inspect.signature(pl.BlockSpec).parameters
    )
except (TypeError, ValueError):
    _PIPELINE_MODE_OK = False


def mamba_embedding_forward(
    input_ids,
    embedding_table,
    *,
    block_tokens=None,
    onehot_max_vocab: int = 4096,
    force_row_gather: bool = False,
    force_manual_dma: bool = False,
    dma_ring: int = 32,
):
    """Pallas equivalent of nn.Embedding(vocab_size, d_model)(input_ids)."""
    B, S = input_ids.shape
    V, D = embedding_table.shape
    dtype = embedding_table.dtype
    itemsize = jnp.dtype(dtype).itemsize

    N = B * S
    # Clamp ids so a bad token id can never produce an out-of-bounds access.
    ids = jnp.clip(input_ids.reshape(N).astype(jnp.int32), 0, V - 1)

    # Token block: multiple of 8 (sublane-dense (T, D) tiles); amortize the
    # ~0.35us per-grid-step overhead over more tokens when N is large.
    if block_tokens is None:
        block_tokens = 256 if N >= 2048 else 128
    T = min(int(block_tokens), _round_up(N, 8))
    T = _round_up(max(T, 8), 8)
    n_blocks = -(-N // T)
    N_pad = n_blocks * T
    if N_pad != N:
        ids = jnp.pad(ids, (0, N_pad - N))  # padded tokens read row 0; sliced off later

    table_bytes = V * D * itemsize
    out_block_bytes = T * D * itemsize

    vmem_cap = _vmem_capacity_bytes()                     # per core (64 MiB on v7x)
    cap = max(vmem_cap - (8 << 20), 16 << 20)             # leave ~8 MiB headroom

    def _limit(need: int) -> int:
        # Always-set, generation-aware scoped-VMEM limit (never above capacity).
        return int(min(max(need + (4 << 20), 32 << 20), cap))

    # ------------------------------------------------------------------ kernels
    def onehot_kernel(ids_ref, table_ref, out_ref):
        # ids_ref: VMEM (T, 1) int32; table_ref: VMEM (V, D); out_ref: (T, D).
        ids_col = ids_ref[...]                                    # (T, 1)
        iota = lax.broadcasted_iota(jnp.int32, (T, V), 1)
        one_hot = (ids_col == iota).astype(table_ref.dtype)      # exactly one 1.0/row
        acc = jnp.dot(
            one_hot,
            table_ref[...],
            preferred_element_type=jnp.float32,
            precision=lax.Precision.HIGHEST,                     # keep the gather exact
        )
        out_ref[...] = acc.astype(out_ref.dtype)

    def gather_kernel(ids_ref, table_ref, out_ref):
        # ids_ref: SMEM (N_pad,) int32 (scalar prefetch); table_ref: VMEM (V, D).
        base = pl.program_id(0) * T

        def body(t, carry):
            tok = ids_ref[base + t]
            out_ref[pl.ds(t, 1), :] = table_ref[pl.ds(tok, 1), :]
            return carry

        # unroll=8 lets the LLO scheduler co-issue the 1-row loads/stores.
        lax.fori_loop(0, T, body, 0, unroll=8)

    K = max(1, min(int(dma_ring), T))

    def dma_kernel(ids_ref, table_hbm, out_ref, sems):
        # table_hbm: HBM ref (V, D).  Per-row DMAs straight into out_ref with a
        # ring of K copies in flight (no intermediate VMEM staging buffer).
        base = pl.program_id(0) * T

        def issue(t, tok):
            pltpu.make_async_copy(
                table_hbm.at[pl.ds(tok, 1)],
                out_ref.at[pl.ds(t, 1)],
                sems.at[t % K],
            ).start()

        for t0 in range(K):  # prime the ring (static unroll)
            issue(t0, ids_ref[base + t0])

        def body(t, carry):
            # Scalar SMEM reads hoisted above the wait (wait breaks sst->sld fwd).
            tok_cur = ids_ref[base + t]
            nxt_idx = jnp.minimum(base + t + K, N_pad - 1)
            tok_nxt = ids_ref[nxt_idx]

            pltpu.make_async_copy(                 # wait for row t (same descriptor)
                table_hbm.at[pl.ds(tok_cur, 1)],
                out_ref.at[pl.ds(t, 1)],
                sems.at[t % K],
            ).wait()

            @pl.when(t + K < T)
            def _():
                issue(t + K, tok_nxt)

            return carry

        lax.fori_loop(0, T, body, 0)

    # -------------------------------------------------------------- call builders
    out_shape = jax.ShapeDtypeStruct((N_pad, D), dtype)

    def _table_spec(single_buffer: bool, with_prefetch: bool):
        idx = (lambda i, ids_s: (0, 0)) if with_prefetch else (lambda i: (0, 0))
        if single_buffer and _PIPELINE_MODE_OK:
            # Constant index_map -> the block never changes; double-buffering it
            # would just waste table_bytes of VMEM.
            return pl.BlockSpec((V, D), idx, pipeline_mode=pl.Buffered(1))
        return pl.BlockSpec((V, D), idx)

    def _params(need: int):
        return pltpu.CompilerParams(
            dimension_semantics=("parallel",),
            vmem_limit_bytes=_limit(need),
        )

    def _call_onehot(single_buffer: bool):
        bufs = 1 if (single_buffer and _PIPELINE_MODE_OK) else 2
        need = (bufs * table_bytes + 2 * out_block_bytes
                + T * V * 4 + T * D * 4 + 4 * T * 4 + (1 << 20))
        if need > cap:
            raise ValueError("one-hot path does not fit in VMEM")
        ids2d = ids.reshape(N_pad, 1)
        return pl.pallas_call(
            onehot_kernel,
            out_shape=out_shape,
            grid_spec=pltpu.PrefetchScalarGridSpec(
                num_scalar_prefetch=0,
                grid=(n_blocks,),
                in_specs=[
                    pl.BlockSpec((T, 1), lambda i: (i, 0)),           # ids block (VMEM)
                    _table_spec(single_buffer, with_prefetch=False),  # resident table
                ],
                out_specs=pl.BlockSpec((T, D), lambda i: (i, 0)),
            ),
            compiler_params=_params(need),
        )(ids2d, embedding_table)

    def _call_gather(single_buffer: bool):
        bufs = 1 if (single_buffer and _PIPELINE_MODE_OK) else 2
        need = bufs * table_bytes + 2 * out_block_bytes + (1 << 20)
        if need > cap:
            raise ValueError("resident-gather path does not fit in VMEM")
        return pl.pallas_call(
            gather_kernel,
            out_shape=out_shape,
            grid_spec=pltpu.PrefetchScalarGridSpec(
                num_scalar_prefetch=1,                                # ids -> SMEM
                grid=(n_blocks,),
                in_specs=[_table_spec(single_buffer, with_prefetch=True)],
                out_specs=pl.BlockSpec((T, D), lambda i, ids_s: (i, 0)),
            ),
            compiler_params=_params(need),
        )(ids, embedding_table)

    def _call_dma():
        need = 2 * out_block_bytes + (1 << 20)
        return pl.pallas_call(
            dma_kernel,
            out_shape=out_shape,
            grid_spec=pltpu.PrefetchScalarGridSpec(
                num_scalar_prefetch=1,                                # ids -> SMEM
                grid=(n_blocks,),
                in_specs=[pl.BlockSpec(memory_space=pl.ANY)],         # table in HBM
                out_specs=pl.BlockSpec((T, D), lambda i, ids_s: (i, 0)),
                scratch_shapes=[pltpu.SemaphoreType.DMA((K,))],
            ),
            compiler_params=_params(need),
        )(ids, embedding_table)

    # ---------------------------------------------------------- path selection
    table_bufs_plan = 1 if _PIPELINE_MODE_OK else 2
    resident_fits = (table_bufs_plan * table_bytes + 2 * out_block_bytes
                     + (1 << 20)) <= cap
    onehot_ok = resident_fits and (not force_row_gather) and V <= onehot_max_vocab

    attempts = []
    if not force_manual_dma:
        if onehot_ok:
            attempts.append(lambda: _call_onehot(True))
            if _PIPELINE_MODE_OK:
                attempts.append(lambda: _call_onehot(False))
        if resident_fits:
            attempts.append(lambda: _call_gather(True))
            if _PIPELINE_MODE_OK:
                attempts.append(lambda: _call_gather(False))
    attempts.append(_call_dma)

    out_flat = None
    last_err = None
    for attempt in attempts:
        try:
            out_flat = attempt()
            break
        except Exception as e:  # degrade to the next (more conservative) path
            last_err = e
            out_flat = None
    if out_flat is None:
        raise last_err

    return out_flat[:N].reshape(B, S, D)


def init_mamba_embedding_params(key, vocab_size, d_model, pad_token_id=None):
    """Deterministic re-implementation of MambaEmbedding.__init__ weight init."""
    w = 0.02 * jax.random.normal(key, (vocab_size, d_model), dtype=jnp.float32)
    if pad_token_id is not None:
        w = w.at[pad_token_id].set(0.0)
    return w


if __name__ == "__main__":
    vocab_size = 256
    d_model = 128          # lane-friendly last dim
    pad_token_id = 0

    key = jax.random.PRNGKey(0)
    k_w, k_ids_a, k_ids_b = jax.random.split(key, 3)

    table = init_mamba_embedding_params(k_w, vocab_size, d_model, pad_token_id)

    # Case A: canonical small shape (B=2, S=8) -> one-hot MXU resident fast path.
    ids_a = jax.random.randint(k_ids_a, (2, 8), 0, vocab_size, dtype=jnp.int32)
    ids_a = ids_a.at[0, 0].set(pad_token_id)     # make sure the pad token appears
    out_a = jax.block_until_ready(mamba_embedding_forward(ids_a, table))
    ref_a = jnp.take(table, ids_a, axis=0)
    assert out_a.shape == (2, 8, d_model), out_a.shape
    # Exact with Precision.HIGHEST; tolerance only covers MXU pass decomposition.
    assert jnp.allclose(out_a, ref_a, rtol=1e-2, atol=1e-4), "one-hot path mismatch (A)"
    assert jnp.all(out_a[0, 0] == 0.0), "pad row not zero"

    # Case B: N not a multiple of the token block (remainder/padding handling).
    ids_b = jax.random.randint(k_ids_b, (2, 77), 0, vocab_size, dtype=jnp.int32)
    ref_b = jnp.take(table, ids_b, axis=0)
    out_b = jax.block_until_ready(
        mamba_embedding_forward(ids_b, table, block_tokens=64))
    assert out_b.shape == (2, 77, d_model), out_b.shape
    assert jnp.allclose(out_b, ref_b, rtol=1e-2, atol=1e-4), "one-hot path mismatch (B)"

    # Case C: VMEM-resident unrolled row-gather path (mid-size vocabularies).
    out_c = jax.block_until_ready(
        mamba_embedding_forward(ids_b, table, block_tokens=64,
                                force_row_gather=True))
    assert jnp.allclose(out_c, ref_b), "resident row-gather path mismatch"

    # Case D: manual-DMA fallback (table stays in HBM, e.g. huge vocab on v7x).
    out_d = jax.block_until_ready(
        mamba_embedding_forward(ids_b, table, block_tokens=64,
                                force_manual_dma=True))
    assert jnp.allclose(out_d, ref_b), "manual-DMA path mismatch"

    print("KERNEL_OK")
</pallas_src>

<mosaic_0001>
module attributes {stable_mosaic.version = 11 : i64} {
  func.func @onehot_kernel(%arg0: i32, %arg1: memref<16x1xi32, #tpu.memory_space<vmem>>, %arg2: memref<256x128xf32, #tpu.memory_space<vmem>>, %arg3: memref<16x128xf32, #tpu.memory_space<vmem>>) attributes {dimension_semantics = [#tpu.dimension_semantics<parallel>], iteration_bounds = array<i64: 1>, scalar_prefetch = 0 : i64, scratch_operands = 0 : i64, tpu.core_type = #tpu.core_type<tc>, window_params = [{transform_indices = @transform_0, window_bounds = array<i64: 16, 1>}, {pipeline_mode = #tpu.pipeline_mode<synchronous>, transform_indices = @transform_1, window_bounds = array<i64: 256, 128>}, {transform_indices = @transform_2, window_bounds = array<i64: 16, 128>}]} {
    %c0 = arith.constant 0 : index
    %c0_0 = arith.constant 0 : index
    %0 = vector.load %arg1[%c0, %c0_0] : memref<16x1xi32, #tpu.memory_space<vmem>>, vector<16x1xi32>
    %1 = tpu.iota {dimensions = array<i32: 1>} : vector<16x256xi32>
    %2 = vector.broadcast %0 : vector<16x1xi32> to vector<16x256xi32>
    %3 = arith.cmpi eq, %2, %1 : vector<16x256xi32>
    %4 = arith.extui %3 : vector<16x256xi1> to vector<16x256xi32>
    %5 = arith.sitofp %4 : vector<16x256xi32> to vector<16x256xf32>
    %c0_1 = arith.constant 0 : index
    %c0_2 = arith.constant 0 : index
    %6 = vector.load %arg2[%c0_1, %c0_2] : memref<256x128xf32, #tpu.memory_space<vmem>>, vector<256x128xf32>
    %cst = arith.constant dense<0.000000e+00> : vector<16x128xf32>
    %7 = tpu.matmul %5, %6, %cst {dimension_numbers = #tpu.dot_dimension_numbers<[1], [0], [0], [1], [0, 0, 1, 1], [], []>, precision = #tpu.contract_precision<fp32>} : vector<16x256xf32>, vector<256x128xf32>, vector<16x128xf32> -> vector<16x128xf32>
    %c0_3 = arith.constant 0 : index
    %c0_4 = arith.constant 0 : index
    %8 = vector.load %arg3[%c0_3, %c0_4] : memref<16x128xf32, #tpu.memory_space<vmem>>, vector<16x128xf32>
    tpu.vector_store %arg3[%c0_3, %c0_4], %7 {strides = array<i32>} : memref<16x128xf32, #tpu.memory_space<vmem>>, vector<16x128xf32>,
    return
  }
  func.func @transform_0(%arg0: i32) -> (i32, i32) {
    %c0_i32 = arith.constant 0 : i32
    %c0_i32_0 = arith.constant 0 : i32
    return %arg0, %c0_i32 : i32, i32
  }
  func.func @transform_1(%arg0: i32) -> (i32, i32) {
    %c0_i32 = arith.constant 0 : i32
    %c0_i32_0 = arith.constant 0 : i32
    %c0_i32_1 = arith.constant 0 : i32
    return %c0_i32, %c0_i32_0 : i32, i32
  }
  func.func @transform_2(%arg0: i32) -> (i32, i32) {
    %c0_i32 = arith.constant 0 : i32
    %c0_i32_0 = arith.constant 0 : i32
    return %arg0, %c0_i32 : i32, i32
  }
}

module attributes {stable_mosaic.version = 11 : i64} {
  func.func @onehot_kernel(%arg0: i32, %arg1: memref<16x1xi32, #tpu.memory_space<vmem>>, %arg2: memref<256x128xf32, #tpu.memory_space<vmem>>, %arg3: memref<16x128xf32, #tpu.memory_space<vmem>>) attributes {dimension_semantics = [#tpu.dimension_semantics<parallel>], iteration_bounds = array<i64: 1>, scalar_prefetch = 0 : i64, scratch_operands = 0 : i64, tpu.core_type = #tpu.core_type<tc>, window_params = [{transform_indices = @transform_0, window_bounds = array<i64: 16, 1>}, {pipeline_mode = #tpu.pipeline_mode<synchronous>, transform_indices = @transform_1, window_bounds = array<i64: 256, 128>}, {transform_indices = @transform_2, window_bounds = array<i64: 16, 128>}]} {
    %c0 = arith.constant 0 : index
    %c0_0 = arith.constant 0 : index
    %0 = vector.load %arg1[%c0, %c0_0] : memref<16x1xi32, #tpu.memory_space<vmem>>, vector<16x1xi32>
    %1 = tpu.iota {dimensions = array<i32: 1>} : vector<16x256xi32>
    %2 = vector.broadcast %0 : vector<16x1xi32> to vector<16x256xi32>
    %3 = arith.cmpi eq, %2, %1 : vector<16x256xi32>
    %4 = arith.extui %3 : vector<16x256xi1> to vector<16x256xi32>
    %5 = arith.sitofp %4 : vector<16x256xi32> to vector<16x256xf32>
    %c0_1 = arith.constant 0 : index
    %c0_2 = arith.constant 0 : index
    %6 = vector.load %arg2[%c0_1, %c0_2] : memref<256x128xf32, #tpu.memory_space<vmem>>, vector<256x128xf32>
    %cst = arith.constant dense<0.000000e+00> : vector<16x128xf32>
    %7 = tpu.matmul %5, %6, %cst {dimension_numbers = #tpu.dot_dimension_numbers<[1], [0], [0], [1], [0, 0, 1, 1], [], []>, precision = #tpu.contract_precision<fp32>} : vector<16x256xf32>, vector<256x128xf32>, vector<16x128xf32> -> vector<16x128xf32>
    %c0_3 = arith.constant 0 : index
    %c0_4 = arith.constant 0 : index
    %8 = vector.load %arg3[%c0_3, %c0_4] : memref<16x128xf32, #tpu.memory_space<vmem>>, vector<16x128xf32>
    tpu.vector_store %arg3[%c0_3, %c0_4], %7 {strides = array<i32>} : memref<16x128xf32, #tpu.memory_space<vmem>>, vector<16x128xf32>,
    return
  }
  func.func @transform_0(%arg0: i32) -> (i32, i32) {
    %c0_i32 = arith.constant 0 : i32
    %c0_i32_0 = arith.constant 0 : i32
    return %arg0, %c0_i32 : i32, i32
  }
  func.func @transform_1(%arg0: i32) -> (i32, i32) {
    %c0_i32 = arith.constant 0 : i32
    %c0_i32_0 = arith.constant 0 : i32
    %c0_i32_1 = arith.constant 0 : i32
    return %c0_i32, %c0_i32_0 : i32, i32
  }
  func.func @transform_2(%arg0: i32) -> (i32, i32) {
    %c0_i32 = arith.constant 0 : i32
    %c0_i32_0 = arith.constant 0 : i32
    return %arg0, %c0_i32 : i32, i32
  }
}

module attributes {stable_mosaic.version = 11 : i64} {
  func.func @dma_kernel(%arg0: i32, %arg1: memref<16xi32, #tpu.memory_space<smem>>, %arg2: memref<256x128xf32, #tpu.memory_space<any>>, %arg3: memref<16x128xf32, #tpu.memory_space<vmem>>, %arg4: memref<16x!tpu.dma_semaphore, #tpu.memory_space<semaphore_mem>>) attributes {dimension_semantics = [#tpu.dimension_semantics<parallel>], iteration_bounds = array<i64: 1>, scalar_prefetch = 1 : i64, scratch_operands = 1 : i64, tpu.core_type = #tpu.core_type<tc>, window_params = [{}, {transform_indices = @transform_1, window_bounds = array<i64: 16, 128>}]} {
    %c16_i32 = arith.constant 16 : i32
    %0 = arith.muli %arg0, %c16_i32 : i32
    %c0_i32 = arith.constant 0 : i32
    %1 = arith.addi %0, %c0_i32 : i32
    %2 = arith.index_cast %1 : i32 to index
    %3 = memref.load %arg1[%2] : memref<16xi32, #tpu.memory_space<smem>>
    %c0_i32_0 = arith.constant 0 : i32
    %c0_i32_1 = arith.constant 0 : i32
    %4 = tpu.memref_slice %arg2[%3, %c0_i32_1] : memref<256x128xf32, #tpu.memory_space<any>> -> memref<1x128xf32, #tpu.memory_space<any>>
    %c0_i32_2 = arith.constant 0 : i32
    %c0_i32_3 = arith.constant 0 : i32
    %5 = tpu.memref_slice %arg3[%c0_i32_2, %c0_i32_3] : memref<16x128xf32, #tpu.memory_space<vmem>> -> memref<1x128xf32, #tpu.memory_space<vmem>>
    %6 = tpu.memref_slice %arg4[%c0_i32_0] : memref<16x!tpu.dma_semaphore, #tpu.memory_space<semaphore_mem>> -> memref<1x!tpu.dma_semaphore, #tpu.memory_space<semaphore_mem>>
    %7 = tpu.memref_squeeze %6 : memref<1x!tpu.dma_semaphore, #tpu.memory_space<semaphore_mem>> -> memref<!tpu.dma_semaphore, #tpu.memory_space<semaphore_mem>>
    tpu.enqueue_dma source(%4 : memref<1x128xf32, #tpu.memory_space<any>>) target(%5 : memref<1x128xf32, #tpu.memory_space<vmem>>) target_semaphore(%7 : memref<!tpu.dma_semaphore, #tpu.memory_space<semaphore_mem>>)
    %c1_i32 = arith.constant 1 : i32
    %8 = arith.addi %0, %c1_i32 : i32
    %9 = arith.index_cast %8 : i32 to index
    %10 = memref.load %arg1[%9] : memref<16xi32, #tpu.memory_space<smem>>
    %c1_i32_4 = arith.constant 1 : i32
    %c0_i32_5 = arith.constant 0 : i32
    %11 = tpu.memref_slice %arg2[%10, %c0_i32_5] : memref<256x128xf32, #tpu.memory_space<any>> -> memref<1x128xf32, #tpu.memory_space<any>>
    %c1_i32_6 = arith.constant 1 : i32
    %c0_i32_7 = arith.constant 0 : i32
    %12 = tpu.memref_slice %arg3[%c1_i32_6, %c0_i32_7] : memref<16x128xf32, #tpu.memory_space<vmem>> -> memref<1x128xf32, #tpu.memory_space<vmem>>
    %13 = tpu.memref_slice %arg4[%c1_i32_4] : memref<16x!tpu.dma_semaphore, #tpu.memory_space<semaphore_mem>> -> memref<1x!tpu.dma_semaphore, #tpu.memory_space<semaphore_mem>>
    %14 = tpu.memref_squeeze %13 : memref<1x!tpu.dma_semaphore, #tpu.memory_space<semaphore_mem>> -> memref<!tpu.dma_semaphore, #tpu.memory_space<semaphore_mem>>
    tpu.enqueue_dma source(%11 : memref<1x128xf32, #tpu.memory_space<any>>) target(%12 : memref<1x128xf32, #tpu.memory_space<vmem>>) target_semaphore(%14 : memref<!tpu.dma_semaphore, #tpu.memory_space<semaphore_mem>>)
    %c2_i32 = arith.constant 2 : i32
    %15 = arith.addi %0, %c2_i32 : i32
    %16 = arith.index_cast %15 : i32 to index
    %17 = memref.load %arg1[%16] : memref<16xi32, #tpu.memory_space<smem>>
    %c2_i32_8 = arith.constant 2 : i32
    %c0_i32_9 = arith.constant 0 : i32
    %18 = tpu.memref_slice %arg2[%17, %c0_i32_9] : memref<256x128xf32, #tpu.memory_space<any>> -> memref<1x128xf32, #tpu.memory_space<any>>
    %c2_i32_10 = arith.constant 2 : i32
    %c0_i32_11 = arith.constant 0 : i32
    %19 = tpu.memref_slice %arg3[%c2_i32_10, %c0_i32_11] : memref<16x128xf32, #tpu.memory_space<vmem>> -> memref<1x128xf32, #tpu.memory_space<vmem>>
    %20 = tpu.memref_slice %arg4[%c2_i32_8] : memref<16x!tpu.dma_semaphore, #tpu.memory_space<semaphore_mem>> -> memref<1x!tpu.dma_semaphore, #tpu.memory_space<semaphore_mem>>
    %21 = tpu.memref_squeeze %20 : memref<1x!tpu.dma_semaphore, #tpu.memory_space<semaphore_mem>> -> memref<!tpu.dma_semaphore, #tpu.memory_space<semaphore_mem>>
    tpu.enqueue_dma source(%18 : memref<1x128xf32, #tpu.memory_space<any>>) target(%19 : memref<1x128xf32, #tpu.memory_space<vmem>>) target_semaphore(%21 : memref<!tpu.dma_semaphore, #tpu.memory_space<semaphore_mem>>)
    %c3_i32 = arith.constant 3 : i32
    %22 = arith.addi %0, %c3_i32 : i32
    %23 = arith.index_cast %22 : i32 to index
    %24 = memref.load %arg1[%23] : memref<16xi32, #tpu.memory_space<smem>>
    %c3_i32_12 = arith.constant 3 : i32
    %c0_i32_13 = arith.constant 0 : i32
    %25 = tpu.memref_slice %arg2[%24, %c0_i32_13] : memref<256x128xf32, #tpu.memory_space<any>> -> memref<1x128xf32, #tpu.memory_space<any>>
    %c3_i32_14 = arith.constant 3 : i32
    %c0_i32_15 = arith.constant 0 : i32
    %26 = tpu.memref_slice %arg3[%c3_i32_14, %c0_i32_15] : memref<16x128xf32, #tpu.memory_space<vmem>> -> memref<1x128xf32, #tpu.memory_space<vmem>>
    %27 = tpu.memref_slice %arg4[%c3_i32_12] : memref<16x!tpu.dma_semaphore, #tpu.memory_space<semaphore_mem>> -> memref<1x!tpu.dma_semaphore, #tpu.memory_space<semaphore_mem>>
    %28 = tpu.memref_squeeze %27 : memref<1x!tpu.dma_semaphore, #tpu.memory_space<semaphore_mem>> -> memref<!tpu.dma_semaphore, #tpu.memory_space<semaphore_mem>>
    tpu.enqueue_dma source(%25 : memref<1x128xf32, #tpu.memory_space<any>>) target(%26 : memref<1x128xf32, #tpu.memory_space<vmem>>) target_semaphore(%28 : memref<!tpu.dma_semaphore, #tpu.memory_space<semaphore_mem>>)
    %c4_i32 = arith.constant 4 : i32
    %29 = arith.addi %0, %c4_i32 : i32
    %30 = arith.index_cast %29 : i32 to index
    %31 = memref.load %arg1[%30] : memref<16xi32, #tpu.memory_space<smem>>
    %c4_i32_16 = arith.constant 4 : i32
    %c0_i32_17 = arith.constant 0 : i32
    %32 = tpu.memref_slice %arg2[%31, %c0_i32_17] : memref<256x128xf32, #tpu.memory_space<any>> -> memref<1x128xf32, #tpu.memory_space<any>>
    %c4_i32_18 = arith.constant 4 : i32
    %c0_i32_19 = arith.constant 0 : i32
    %33 = tpu.memref_slice %arg3[%c4_i32_18, %c0_i32_19] : memref<16x128xf32, #tpu.memory_space<vmem>> -> memref<1x128xf32, #tpu.memory_space<vmem>>
    %34 = tpu.memref_slice %arg4[%c4_i32_16] : memref<16x!tpu.dma_semaphore, #tpu.memory_space<semaphore_mem>> -> memref<1x!tpu.dma_semaphore, #tpu.memory_space<semaphore_mem>>
    %35 = tpu.memref_squeeze %34 : memref<1x!tpu.dma_semaphore, #tpu.memory_space<semaphore_mem>> -> memref<!tpu.dma_semaphore, #tpu.memory_space<semaphore_mem>>
    tpu.enqueue_dma source(%32 : memref<1x128xf32, #tpu.memory_space<any>>) target(%33 : memref<1x128xf32, #tpu.memory_space<vmem>>) target_semaphore(%35 : memref<!tpu.dma_semaphore, #tpu.memory_space<semaphore_mem>>)
    %c5_i32 = arith.constant 5 : i32
    %36 = arith.addi %0, %c5_i32 : i32
    %37 = arith.index_cast %36 : i32 to index
    %38 = memref.load %arg1[%37] : memref<16xi32, #tpu.memory_space<smem>>
    %c5_i32_20 = arith.constant 5 : i32
    %c0_i32_21 = arith.constant 0 : i32
    %39 = tpu.memref_slice %arg2[%38, %c0_i32_21] : memref<256x128xf32, #tpu.memory_space<any>> -> memref<1x128xf32, #tpu.memory_space<any>>
    %c5_i32_22 = arith.constant 5 : i32
    %c0_i32_23 = arith.constant 0 : i32
    %40 = tpu.memref_slice %arg3[%c5_i32_22, %c0_i32_23] : memref<16x128xf32, #tpu.memory_space<vmem>> -> memref<1x128xf32, #tpu.memory_space<vmem>>
    %41 = tpu.memref_slice %arg4[%c5_i32_20] : memref<16x!tpu.dma_semaphore, #tpu.memory_space<semaphore_mem>> -> memref<1x!tpu.dma_semaphore, #tpu.memory_space<semaphore_mem>>
    %42 = tpu.memref_squeeze %41 : memref<1x!tpu.dma_semaphore, #tpu.memory_space<semaphore_mem>> -> memref<!tpu.dma_semaphore, #tpu.memory_space<semaphore_mem>>
    tpu.enqueue_dma source(%39 : memref<1x128xf32, #tpu.memory_space<any>>) target(%40 : memref<1x128xf32, #tpu.memory_space<vmem>>) target_semaphore(%42 : memref<!tpu.dma_semaphore, #tpu.memory_space<semaphore_mem>>)
    %c6_i32 = arith.constant 6 : i32
    %43 = arith.addi %0, %c6_i32 : i32
    %44 = arith.index_cast %43 : i32 to index
    %45 = memref.load %arg1[%44] : memref<16xi32, #tpu.memory_space<smem>>
    %c6_i32_24 = arith.constant 6 : i32
    %c0_i32_25 = arith.constant 0 : i32
    %46 = tpu.memref_slice %arg2[%45, %c0_i32_25] : memref<256x128xf32, #tpu.memory_space<any>> -> memref<1x128xf32, #tpu.memory_space<any>>
    %c6_i32_26 = arith.constant 6 : i32
    %c0_i32_27 = arith.constant 0 : i32
    %47 = tpu.memref_slice %arg3[%c6_i32_26, %c0_i32_27] : memref<16x128xf32, #tpu.memory_space<vmem>> -> memref<1x128xf32, #tpu.memory_space<vmem>>
    %48 = tpu.memref_slice %arg4[%c6_i32_24] : memref<16x!tpu.dma_semaphore, #tpu.memory_space<semaphore_mem>> -> memref<1x!tpu.dma_semaphore, #tpu.memory_space<semaphore_mem>>
    %49 = tpu.memref_squeeze %48 : memref<1x!tpu.dma_semaphore, #tpu.memory_space<semaphore_mem>> -> memref<!tpu.dma_semaphore, #tpu.memory_space<semaphore_mem>>
    tpu.enqueue_dma source(%46 : memref<1x128xf32, #tpu.memory_space<any>>) target(%47 : memref<1x128xf32, #tpu.memory_space<vmem>>) target_semaphore(%49 : memref<!tpu.dma_semaphore, #tpu.memory_space<semaphore_mem>>)
    %c7_i32 = arith.constant 7 : i32
    %50 = arith.addi %0, %c7_i32 : i32
    %51 = arith.index_cast %50 : i32 to index
    %52 = memref.load %arg1[%51] : memref<16xi32, #tpu.memory_space<smem>>
    %c7_i32_28 = arith.constant 7 : i32
    %c0_i32_29 = arith.constant 0 : i32
    %53 = tpu.memref_slice %arg2[%52, %c0_i32_29] : memref<256x128xf32, #tpu.memory_space<any>> -> memref<1x128xf32, #tpu.memory_space<any>>
    %c7_i32_30 = arith.constant 7 : i32
    %c0_i32_31 = arith.constant 0 : i32
    %54 = tpu.memref_slice %arg3[%c7_i32_30, %c0_i32_31] : memref<16x128xf32, #tpu.memory_space<vmem>> -> memref<1x128xf32, #tpu.memory_space<vmem>>
    %55 = tpu.memref_slice %arg4[%c7_i32_28] : memref<16x!tpu.dma_semaphore, #tpu.memory_space<semaphore_mem>> -> memref<1x!tpu.dma_semaphore, #tpu.memory_space<semaphore_mem>>
    %56 = tpu.memref_squeeze %55 : memref<1x!tpu.dma_semaphore, #tpu.memory_space<semaphore_mem>> -> memref<!tpu.dma_semaphore, #tpu.memory_space<semaphore_mem>>
    tpu.enqueue_dma source(%53 : memref<1x128xf32, #tpu.memory_space<any>>) target(%54 : memref<1x128xf32, #tpu.memory_space<vmem>>) target_semaphore(%56 : memref<!tpu.dma_semaphore, #tpu.memory_space<semaphore_mem>>)
    %c8_i32 = arith.constant 8 : i32
    %57 = arith.addi %0, %c8_i32 : i32
    %58 = arith.index_cast %57 : i32 to index
    %59 = memref.load %arg1[%58] : memref<16xi32, #tpu.memory_space<smem>>
    %c8_i32_32 = arith.constant 8 : i32
    %c0_i32_33 = arith.constant 0 : i32
    %60 = tpu.memref_slice %arg2[%59, %c0_i32_33] : memref<256x128xf32, #tpu.memory_space<any>> -> memref<1x128xf32, #tpu.memory_space<any>>
    %c8_i32_34 = arith.constant 8 : i32
    %c0_i32_35 = arith.constant 0 : i32
    %61 = tpu.memref_slice %arg3[%c8_i32_34, %c0_i32_35] : memref<16x128xf32, #tpu.memory_space<vmem>> -> memref<1x128xf32, #tpu.memory_space<vmem>>
    %62 = tpu.memref_slice %arg4[%c8_i32_32] : memref<16x!tpu.dma_semaphore, #tpu.memory_space<semaphore_mem>> -> memref<1x!tpu.dma_semaphore, #tpu.memory_space<semaphore_mem>>
    %63 = tpu.memref_squeeze %62 : memref<1x!tpu.dma_semaphore, #tpu.memory_space<semaphore_mem>> -> memref<!tpu.dma_semaphore, #tpu.memory_space<semaphore_mem>>
    tpu.enqueue_dma source(%60 : memref<1x128xf32, #tpu.memory_space<any>>) target(%61 : memref<1x128xf32, #tpu.memory_space<vmem>>) target_semaphore(%63 : memref<!tpu.dma_semaphore, #tpu.memory_space<semaphore_mem>>)
    %c9_i32 = arith.constant 9 : i32
    %64 = arith.addi %0, %c9_i32 : i32
    %65 = arith.index_cast %64 : i32 to index
    %66 = memref.load %arg1[%65] : memref<16xi32, #tpu.memory_space<smem>>
    %c9_i32_36 = arith.constant 9 : i32
    %c0_i32_37 = arith.constant 0 : i32
    %67 = tpu.memref_slice %arg2[%66, %c0_i32_37] : memref<256x128xf32, #tpu.memory_space<any>> -> memref<1x128xf32, #tpu.memory_space<any>>
    %c9_i32_38 = arith.constant 9 : i32
    %c0_i32_39 = arith.constant 0 : i32
    %68 = tpu.memref_slice %arg3[%c9_i32_38, %c0_i32_39] : memref<16x128xf32, #tpu.memory_space<vmem>> -> memref<1x128xf32, #tpu.memory_space<vmem>>
    %69 = tpu.memref_slice %arg4[%c9_i32_36] : memref<16x!tpu.dma_semaphore, #tpu.memory_space<semaphore_mem>> -> memref<1x!tpu.dma_semaphore, #tpu.memory_space<semaphore_mem>>
    %70 = tpu.memref_squeeze %69 : memref<1x!tpu.dma_semaphore, #tpu.memory_space<semaphore_mem>> -> memref<!tpu.dma_semaphore, #tpu.memory_space<semaphore_mem>>
    tpu.enqueue_dma source(%67 : memref<1x128xf32, #tpu.memory_space<any>>) target(%68 : memref<1x128xf32, #tpu.memory_space<vmem>>) target_semaphore(%70 : memref<!tpu.dma_semaphore, #tpu.memory_space<semaphore_mem>>)
    %c10_i32 = arith.constant 10 : i32
    %71 = arith.addi %0, %c10_i32 : i32
    %72 = arith.index_cast %71 : i32 to index
    %73 = memref.load %arg1[%72] : memref<16xi32, #tpu.memory_space<smem>>
    %c10_i32_40 = arith.constant 10 : i32
    %c0_i32_41 = arith.constant 0 : i32
    %74 = tpu.memref_slice %arg2[%73, %c0_i32_41] : memref<256x128xf32, #tpu.memory_space<any>> -> memref<1x128xf32, #tpu.memory_space<any>>
    %c10_i32_42 = arith.constant 10 : i32
    %c0_i32_43 = arith.constant 0 : i32
    %75 = tpu.memref_slice %arg3[%c10_i32_42, %c0_i32_43] : memref<16x128xf32, #tpu.memory_space<vmem>> -> memref<1x128xf32, #tpu.memory_space<vmem>>
    %76 = tpu.memref_slice %arg4[%c10_i32_40] : memref<16x!tpu.dma_semaphore, #tpu.memory_space<semaphore_mem>> -> memref<1x!tpu.dma_semaphore, #tpu.memory_space<semaphore_mem>>
    %77 = tpu.memref_squeeze %76 : memref<1x!tpu.dma_semaphore, #tpu.memory_space<semaphore_mem>> -> memref<!tpu.dma_semaphore, #tpu.memory_space<semaphore_mem>>
    tpu.enqueue_dma source(%74 : memref<1x128xf32, #tpu.memory_space<any>>) target(%75 : memref<1x128xf32, #tpu.memory_space<vmem>>) target_semaphore(%77 : memref<!tpu.dma_semaphore, #tpu.memory_space<semaphore_mem>>)
    %c11_i32 = arith.constant 11 : i32
    %78 = arith.addi %0, %c11_i32 : i32
    %79 = arith.index_cast %78 : i32 to index
    %80 = memref.load %arg1[%79] : memref<16xi32, #tpu.memory_space<smem>>
    %c11_i32_44 = arith.constant 11 : i32
    %c0_i32_45 = arith.constant 0 : i32
    %81 = tpu.memref_slice %arg2[%80, %c0_i32_45] : memref<256x128xf32, #tpu.memory_space<any>> -> memref<1x128xf32, #tpu.memory_space<any>>
    %c11_i32_46 = arith.constant 11 : i32
    %c0_i32_47 = arith.constant 0 : i32
    %82 = tpu.memref_slice %arg3[%c11_i32_46, %c0_i32_47] : memref<16x128xf32, #tpu.memory_space<vmem>> -> memref<1x128xf32, #tpu.memory_space<vmem>>
    %83 = tpu.memref_slice %arg4[%c11_i32_44] : memref<16x!tpu.dma_semaphore, #tpu.memory_space<semaphore_mem>> -> memref<1x!tpu.dma_semaphore, #tpu.memory_space<semaphore_mem>>
    %84 = tpu.memref_squeeze %83 : memref<1x!tpu.dma_semaphore, #tpu.memory_space<semaphore_mem>> -> memref<!tpu.dma_semaphore, #tpu.memory_space<semaphore_mem>>
    tpu.enqueue_dma source(%81 : memref<1x128xf32, #tpu.memory_space<any>>) target(%82 : memref<1x128xf32, #tpu.memory_space<vmem>>) target_semaphore(%84 : memref<!tpu.dma_semaphore, #tpu.memory_space<semaphore_mem>>)
    %c12_i32 = arith.constant 12 : i32
    %85 = arith.addi %0, %c12_i32 : i32
    %86 = arith.index_cast %85 : i32 to index
    %87 = memref.load %arg1[%86] : memref<16xi32, #tpu.memory_space<smem>>
    %c12_i32_48 = arith.constant 12 : i32
    %c0_i32_49 = arith.constant 0 : i32
    %88 = tpu.memref_slice %arg2[%87, %c0_i32_49] : memref<256x128xf32, #tpu.memory_space<any>> -> memref<1x128xf32, #tpu.memory_space<any>>
    %c12_i32_50 = arith.constant 12 : i32
    %c0_i32_51 = arith.constant 0 : i32
    %89 = tpu.memref_slice %arg3[%c12_i32_50, %c0_i32_51] : memref<16x128xf32, #tpu.memory_space<vmem>> -> memref<1x128xf32, #tpu.memory_space<vmem>>
    %90 = tpu.memref_slice %arg4[%c12_i32_48] : memref<16x!tpu.dma_semaphore, #tpu.memory_space<semaphore_mem>> -> memref<1x!tpu.dma_semaphore, #tpu.memory_space<semaphore_mem>>
    %91 = tpu.memref_squeeze %90 : memref<1x!tpu.dma_semaphore, #tpu.memory_space<semaphore_mem>> -> memref<!tpu.dma_semaphore, #tpu.memory_space<semaphore_mem>>
    tpu.enqueue_dma source(%88 : memref<1x128xf32, #tpu.memory_space<any>>) target(%89 : memref<1x128xf32, #tpu.memory_space<vmem>>) target_semaphore(%91 : memref<!tpu.dma_semaphore, #tpu.memory_space<semaphore_mem>>)
    %c13_i32 = arith.constant 13 : i32
    %92 = arith.addi %0, %c13_i32 : i32
    %93 = arith.index_cast %92 : i32 to index
    %94 = memref.load %arg1[%93] : memref<16xi32, #tpu.memory_space<smem>>
    %c13_i32_52 = arith.constant 13 : i32
    %c0_i32_53 = arith.constant 0 : i32
    %95 = tpu.memref_slice %arg2[%94, %c0_i32_53] : memref<256x128xf32, #tpu.memory_space<any>> -> memref<1x128xf32, #tpu.memory_space<any>>
    %c13_i32_54 = arith.constant 13 : i32
    %c0_i32_55 = arith.constant 0 : i32
    %96 = tpu.memref_slice %arg3[%c13_i32_54, %c0_i32_55] : memref<16x128xf32, #tpu.memory_space<vmem>> -> memref<1x128xf32, #tpu.memory_space<vmem>>
    %97 = tpu.memref_slice %arg4[%c13_i32_52] : memref<16x!tpu.dma_semaphore, #tpu.memory_space<semaphore_mem>> -> memref<1x!tpu.dma_semaphore, #tpu.memory_space<semaphore_mem>>
    %98 = tpu.memref_squeeze %97 : memref<1x!tpu.dma_semaphore, #tpu.memory_space<semaphore_mem>> -> memref<!tpu.dma_semaphore, #tpu.memory_space<semaphore_mem>>
    tpu.enqueue_dma source(%95 : memref<1x128xf32, #tpu.memory_space<any>>) target(%96 : memref<1x128xf32, #tpu.memory_space<vmem>>) target_semaphore(%98 : memref<!tpu.dma_semaphore, #tpu.memory_space<semaphore_mem>>)
    %c14_i32 = arith.constant 14 : i32
    %99 = arith.addi %0, %c14_i32 : i32
    %100 = arith.index_cast %99 : i32 to index
    %101 = memref.load %arg1[%100] : memref<16xi32, #tpu.memory_space<smem>>
    %c14_i32_56 = arith.constant 14 : i32
    %c0_i32_57 = arith.constant 0 : i32
    %102 = tpu.memref_slice %arg2[%101, %c0_i32_57] : memref<256x128xf32, #tpu.memory_space<any>> -> memref<1x128xf32, #tpu.memory_space<any>>
    %c14_i32_58 = arith.constant 14 : i32
    %c0_i32_59 = arith.constant 0 : i32
    %103 = tpu.memref_slice %arg3[%c14_i32_58, %c0_i32_59] : memref<16x128xf32, #tpu.memory_space<vmem>> -> memref<1x128xf32, #tpu.memory_space<vmem>>
    %104 = tpu.memref_slice %arg4[%c14_i32_56] : memref<16x!tpu.dma_semaphore, #tpu.memory_space<semaphore_mem>> -> memref<1x!tpu.dma_semaphore, #tpu.memory_space<semaphore_mem>>
    %105 = tpu.memref_squeeze %104 : memref<1x!tpu.dma_semaphore, #tpu.memory_space<semaphore_mem>> -> memref<!tpu.dma_semaphore, #tpu.memory_space<semaphore_mem>>
    tpu.enqueue_dma source(%102 : memref<1x128xf32, #tpu.memory_space<any>>) target(%103 : memref<1x128xf32, #tpu.memory_space<vmem>>) target_semaphore(%105 : memref<!tpu.dma_semaphore, #tpu.memory_space<semaphore_mem>>)
    %c15_i32 = arith.constant 15 : i32
    %106 = arith.addi %0, %c15_i32 : i32
    %107 = arith.index_cast %106 : i32 to index
    %108 = memref.load %arg1[%107] : memref<16xi32, #tpu.memory_space<smem>>
    %c15_i32_60 = arith.constant 15 : i32
    %c0_i32_61 = arith.constant 0 : i32
    %109 = tpu.memref_slice %arg2[%108, %c0_i32_61] : memref<256x128xf32, #tpu.memory_space<any>> -> memref<1x128xf32, #tpu.memory_space<any>>
    %c15_i32_62 = arith.constant 15 : i32
    %c0_i32_63 = arith.constant 0 : i32
    %110 = tpu.memref_slice %arg3[%c15_i32_62, %c0_i32_63] : memref<16x128xf32, #tpu.memory_space<vmem>> -> memref<1x128xf32, #tpu.memory_space<vmem>>
    %111 = tpu.memref_slice %arg4[%c15_i32_60] : memref<16x!tpu.dma_semaphore, #tpu.memory_space<semaphore_mem>> -> memref<1x!tpu.dma_semaphore, #tpu.memory_space<semaphore_mem>>
    %112 = tpu.memref_squeeze %111 : memref<1x!tpu.dma_semaphore, #tpu.memory_space<semaphore_mem>> -> memref<!tpu.dma_semaphore, #tpu.memory_space<semaphore_mem>>
    tpu.enqueue_dma source(%109 : memref<1x128xf32, #tpu.memory_space<any>>) target(%110 : memref<1x128xf32, #tpu.memory_space<vmem>>) target_semaphore(%112 : memref<!tpu.dma_semaphore, #tpu.memory_space<semaphore_mem>>)
    %c0_i32_64 = arith.constant 0 : i32
    %c16_i32_65 = arith.constant 16 : i32
    %113 = arith.addi %c0_i32_64, %c16_i32_65 : i32
    %c1_i32_66 = arith.constant 1 : i32
    scf.for %arg5 = %c0_i32_64 to %113 step %c1_i32_66  : i32 {
      %114 = arith.addi %0, %arg5 : i32
      %115 = arith.index_cast %114 : i32 to index
      %116 = memref.load %arg1[%115] : memref<16xi32, #tpu.memory_space<smem>>
      %117 = arith.addi %0, %arg5 : i32
      %c16_i32_68 = arith.constant 16 : i32
      %118 = arith.addi %117, %c16_i32_68 : i32
      %c15_i32_69 = arith.constant 15 : i32
      %119 = arith.minsi %118, %c15_i32_69 : i32
      %120 = arith.index_cast %119 : i32 to index
      %121 = memref.load %arg1[%120] : memref<16xi32, #tpu.memory_space<smem>>
      %c16_i32_70 = arith.constant 16 : i32
      %c0_i32_71 = arith.constant 0 : i32
      %122 = arith.cmpi eq, %c16_i32_70, %c0_i32_71 : i32
      %c1_i32_72 = arith.constant 1 : i32
      %123 = arith.select %122, %c1_i32_72, %c16_i32_70 : i32
      %124 = arith.remsi %arg5, %123 : i32
      %c0_i32_73 = arith.constant 0 : i32
      %125 = arith.cmpi ne, %124, %c0_i32_73 : i32
      %c0_i32_74 = arith.constant 0 : i32
      %126 = arith.cmpi slt, %124, %c0_i32_74 : i32
      %c0_i32_75 = arith.constant 0 : i32
      %127 = arith.cmpi slt, %123, %c0_i32_75 : i32
      %128 = arith.xori %126, %127 : i1
      %129 = arith.andi %128, %125 : i1
      %130 = arith.addi %124, %123 : i32
      %131 = arith.select %129, %130, %124 : i32
      %c0_i32_76 = arith.constant 0 : i32
      %132 = tpu.memref_slice %arg2[%116, %c0_i32_76] : memref<256x128xf32, #tpu.memory_space<any>> -> memref<1x128xf32, #tpu.memory_space<any>>
      %c0_i32_77 = arith.constant 0 : i32
      %133 = tpu.memref_slice %arg3[%arg5, %c0_i32_77] : memref<16x128xf32, #tpu.memory_space<vmem>> -> memref<1x128xf32, #tpu.memory_space<vmem>>
      %134 = tpu.memref_slice %arg4[%131] : memref<16x!tpu.dma_semaphore, #tpu.memory_space<semaphore_mem>> -> memref<1x!tpu.dma_semaphore, #tpu.memory_space<semaphore_mem>>
      %135 = tpu.memref_squeeze %134 : memref<1x!tpu.dma_semaphore, #tpu.memory_space<semaphore_mem>> -> memref<!tpu.dma_semaphore, #tpu.memory_space<semaphore_mem>>
      tpu.wait_dma2 semaphore(%135 : memref<!tpu.dma_semaphore, #tpu.memory_space<semaphore_mem>>) src(%132 : memref<1x128xf32, #tpu.memory_space<any>>) dst(%133 : memref<1x128xf32, #tpu.memory_space<vmem>>)
      %c16_i32_78 = arith.constant 16 : i32
      %136 = arith.addi %arg5, %c16_i32_78 : i32
      %c16_i32_79 = arith.constant 16 : i32
      %137 = arith.cmpi slt, %136, %c16_i32_79 : i32
      %138 = arith.extui %137 : i1 to i32
      %c0_i32_80 = arith.constant 0 : i32
      %139 = arith.cmpi ne, %138, %c0_i32_80 : i32
      scf.if %139 {
        %c16_i32_81 = arith.constant 16 : i32
        %140 = arith.addi %arg5, %c16_i32_81 : i32
        %c16_i32_82 = arith.constant 16 : i32
        %c0_i32_83 = arith.constant 0 : i32
        %141 = arith.cmpi eq, %c16_i32_82, %c0_i32_83 : i32
        %c1_i32_84 = arith.constant 1 : i32
        %142 = arith.select %141, %c1_i32_84, %c16_i32_82 : i32
        %143 = arith.remsi %140, %142 : i32
        %c0_i32_85 = arith.constant 0 : i32
        %144 = arith.cmpi ne, %143, %c0_i32_85 : i32
        %c0_i32_86 = arith.constant 0 : i32
        %145 = arith.cmpi slt, %143, %c0_i32_86 : i32
        %c0_i32_87 = arith.constant 0 : i32
        %146 = arith.cmpi slt, %142, %c0_i32_87 : i32
        %147 = arith.xori %145, %146 : i1
        %148 = arith.andi %147, %144 : i1
        %149 = arith.addi %143, %142 : i32
        %150 = arith.select %148, %149, %143 : i32
        %c0_i32_88 = arith.constant 0 : i32
        %151 = tpu.memref_slice %arg2[%121, %c0_i32_88] : memref<256x128xf32, #tpu.memory_space<any>> -> memref<1x128xf32, #tpu.memory_space<any>>
        %c0_i32_89 = arith.constant 0 : i32
        %152 = tpu.memref_slice %arg3[%140, %c0_i32_89] : memref<16x128xf32, #tpu.memory_space<vmem>> -> memref<1x128xf32, #tpu.memory_space<vmem>>
        %153 = tpu.memref_slice %arg4[%150] : memref<16x!tpu.dma_semaphore, #tpu.memory_space<semaphore_mem>> -> memref<1x!tpu.dma_semaphore, #tpu.memory_space<semaphore_mem>>
        %154 = tpu.memref_squeeze %153 : memref<1x!tpu.dma_semaphore, #tpu.memory_space<semaphore_mem>> -> memref<!tpu.dma_semaphore, #tpu.memory_space<semaphore_mem>>
        tpu.enqueue_dma source(%151 : memref<1x128xf32, #tpu.memory_space<any>>) target(%152 : memref<1x128xf32, #tpu.memory_space<vmem>>) target_semaphore(%154 : memref<!tpu.dma_semaphore, #tpu.memory_space<semaphore_mem>>)
      } else {
      }
    }
    %c16_i32_67 = arith.constant 16 : i32
    return
  }
  func.func @transform_1(%arg0: i32, %arg1: memref<16xi32, #tpu.memory_space<smem>>) -> (i32, i32) {
    %c0_i32 = arith.constant 0 : i32
    %c0_i32_0 = arith.constant 0 : i32
    return %arg0, %c0_i32 : i32, i32
  }
}

</mosaic_0001>

<llo_original>
// kernel: tpu_custom_call.1
$region0: #{tpu_custom_call.1}
  #allocation0 [shape = 'u32[]', space=smem, size = 0x4, offset = 0x4, fixed_abs, tag = 'smem constant byte address 0x4 - core index']
  #allocation1 [shape = 'u32[144,128]{1,0:T(1,128)}', space=vmem, size = 0x12000, scoped, tag = 'internal scratch']
  %s0 = inlined_call_operand.vmem [shape: s32[16,1], index: 0, kind: input, shape index: {}]
  %s1 = inlined_call_operand.hbm [shape: f32[256,128], index: 1, kind: input, shape index: {}]
  %s2 = inlined_call_operand.hbm [shape: f32[16,128], index: 2, kind: output, shape index: {}]
  %s3 = sld [smem:[#allocation0]]
  $region22: #{tpu_custom_call.1} parent=0
    _
  %s5 = ssub.s32 1, %s3
  %s6 = scalar_select 0, %s5, %s3
  $region1: #{tpu_custom_call.1} parent=0
    #allocation2 [shape = 'u8[131072]{0}', space=vmem, size = 0x20000, scoped, tag = 'input window, operand 1, single buffered']
    #allocation3 [shape = 's32[1]{0}', space=sflag, size = 0x4, scoped, tag = 'scoped memory for tpu_custom_call.1']
    #allocation4 [shape = 's32[1]{0}', space=sflag, size = 0x4, scoped, tag = 'scoped memory for tpu_custom_call.1']
    #allocation5 [shape = 'u8[8192]{0}', space=vmem, size = 0x2000, scoped, tag = 'output window, operand 0, single buffered']
    %7 = vsyncpa [#allocation3], 0
    %8 = vsyncpa [#allocation4], 0
    // Predicated region
    $region2: #{tpu_custom_call.1} parent=1 // pred_check
      _
    $region3: #{tpu_custom_call.1} parent=1 // pred_check_branch
      %10 = sbr.rel (0) target = $region5
    $region4: #{tpu_custom_call.1} parent=1 // pred_region
      _
    $region5: #{tpu_custom_call.1} parent=1 // pred_fallthru
      _
    // Predicated region
    $region6: #{tpu_custom_call.1} parent=1 // pred_check
      _
    $region7: #{tpu_custom_call.1} parent=1 // pred_check_branch
      %12 = sbr.rel (0) target = $region9
    $region8: #{tpu_custom_call.1} parent=1 // pred_region
      %s14 = ssub.s32 4096, 4096
      %15 = vsyncadd [#allocation3], %s14
      %s16 = sshll.u32 [#allocation2], 4
      %s17 = int_to_ptr.vmem [resolvable:$true] %s16
      %22 = dma.hbm_to_vmem [thread:$0]  %s1, 4096, %s17, [#allocation3], 128, 128, 8
    $region9: #{tpu_custom_call.1} parent=1 // pred_fallthru
      _
    // Predicated region
    $region10: #{tpu_custom_call.1} parent=1 // pred_check
      _
    $region11: #{tpu_custom_call.1} parent=1 // pred_check_branch
      %24 = sbr.rel (0) target = $region13
    $region12: #{tpu_custom_call.1} parent=1 // pred_region
      %25 = dma.done [#allocation3], 4096
    $region13: #{tpu_custom_call.1} parent=1 // pred_fallthru
      _
    %v26 = vld [vmem:[%s0] sm:$0xff]
    %v27 = vld [vmem:[%s0 + $0x8] sm:$0xff]
    %v28 = vlaneseq
    %v29 = vand.u32 %v28, 127
    %v30 = vadd.s32 %v29, 128
    %31 = vset.pattern.permute.xlu0 0
    %32 = vperm.xlu0 %31, %v26
    %v33 = vpop.permute.xlu0 %32
    %34 = vset.pattern.permute.xlu0 0
    %35 = vperm.xlu0 %34, %v27
    %v36 = vpop.permute.xlu0 %35
    %vm37 = vcmp.eq.s32.totalorder %v33, %v29
    %vm38 = vcmp.eq.s32.totalorder %v33, %v30
    %vm39 = vcmp.eq.s32.totalorder %v36, %v29
    %vm40 = vcmp.eq.s32.totalorder %v36, %v30
    %v41 = vsel %vm37, 1, 0
    %v42 = vsel %vm38, 1, 0
    %v43 = vsel %vm39, 1, 0
    %v44 = vsel %vm40, 1, 0
    %v45 = vcvt.s32.f32 %v41
    %v46 = vcvt.s32.f32 %v42
    %v47 = vcvt.s32.f32 %v43
    %v48 = vcvt.s32.f32 %v44
    %v49 = vld [vmem:[#allocation2] sm:$0xff]
    %v50 = vld [vmem:[#allocation2 + $0x8] sm:$0xff]
    %v51 = vld [vmem:[#allocation2 + $0x10] sm:$0xff]
    %v52 = vld [vmem:[#allocation2 + $0x18] sm:$0xff]
    %v53 = vld [vmem:[#allocation2 + $0x20] sm:$0xff]
    %v54 = vld [vmem:[#allocation2 + $0x28] sm:$0xff]
    %v55 = vld [vmem:[#allocation2 + $0x30] sm:$0xff]
    %v56 = vld [vmem:[#allocation2 + $0x38] sm:$0xff]
    %v57 = vld [vmem:[#allocation2 + $0x40] sm:$0xff]
    %v58 = vld [vmem:[#allocation2 + $0x48] sm:$0xff]
    %v59 = vld [vmem:[#allocation2 + $0x50] sm:$0xff]
    %v60 = vld [vmem:[#allocation2 + $0x58] sm:$0xff]
    %v61 = vld [vmem:[#allocation2 + $0x60] sm:$0xff]
    %v62 = vld [vmem:[#allocation2 + $0x68] sm:$0xff]
    %v63 = vld [vmem:[#allocation2 + $0x70] sm:$0xff]
    %v64 = vld [vmem:[#allocation2 + $0x78] sm:$0xff]
    %v65 = vld [vmem:[#allocation2 + $0x80] sm:$0xff]
    %v66 = vld [vmem:[#allocation2 + $0x88] sm:$0xff]
    %v67 = vld [vmem:[#allocation2 + $0x90] sm:$0xff]
    %v68 = vld [vmem:[#allocation2 + $0x98] sm:$0xff]
    %v69 = vld [vmem:[#allocation2 + $0xa0] sm:$0xff]
    %v70 = vld [vmem:[#allocation2 + $0xa8] sm:$0xff]
    %v71 = vld [vmem:[#allocation2 + $0xb0] sm:$0xff]
    %v72 = vld [vmem:[#allocation2 + $0xb8] sm:$0xff]
    %v73 = vld [vmem:[#allocation2 + $0xc0] sm:$0xff]
    %v74 = vld [vmem:[#allocation2 + $0xc8] sm:$0xff]
    %v75 = vld [vmem:[#allocation2 + $0xd0] sm:$0xff]
    %v76 = vld [vmem:[#allocation2 + $0xd8] sm:$0xff]
    %v77 = vld [vmem:[#allocation2 + $0xe0] sm:$0xff]
    %v78 = vld [vmem:[#allocation2 + $0xe8] sm:$0xff]
    %v79 = vld [vmem:[#allocation2 + $0xf0] sm:$0xff]
    %v80 = vld [vmem:[#allocation2 + $0xf8] sm:$0xff]
    %81 = vmatprep.subr.mxu0 0.0
    %v82 = vand.u32 %v49, 4294901760
    %83 = vmatpush1.msra.mxu0 %v82
    %84 = vmatprep.subr.mxu0 0.0
    %v85 = vand.u32 %v50, 4294901760
    %86 = vmatpush1.msra.mxu0 %v85
    %87 = vmatprep.subr.mxu0 0.0
    %v88 = vand.u32 %v51, 4294901760
    %89 = vmatpush1.msra.mxu0 %v88
    %90 = vmatprep.subr.mxu0 0.0
    %v91 = vand.u32 %v52, 4294901760
    %92 = vmatpush1.msra.mxu0 %v91
    %93 = vmatprep.subr.mxu0 0.0
    %v94 = vand.u32 %v53, 4294901760
    %95 = vmatpush1.msra.mxu0 %v94
    %96 = vmatprep.subr.mxu0 0.0
    %v97 = vand.u32 %v54, 4294901760
    %98 = vmatpush1.msra.mxu0 %v97
    %99 = vmatprep.subr.mxu0 0.0
    %v100 = vand.u32 %v55, 4294901760
    %101 = vmatpush1.msra.mxu0 %v100
    %102 = vmatprep.subr.mxu0 0.0
    %v103 = vand.u32 %v56, 4294901760
    %104 = vmatpush1.msra.mxu0 %v103
    %105 = vmatprep.subr.mxu0 0.0
    %v106 = vand.u32 %v57, 4294901760
    %107 = vmatpush1.msra.mxu0 %v106
    %108 = vmatprep.subr.mxu0 0.0
    %v109 = vand.u32 %v58, 4294901760
    %110 = vmatpush1.msra.mxu0 %v109
    %111 = vmatprep.subr.mxu0 0.0
    %v112 = vand.u32 %v59, 4294901760
    %113 = vmatpush1.msra.mxu0 %v112
    %114 = vmatprep.subr.mxu0 0.0
    %v115 = vand.u32 %v60, 4294901760
    %116 = vmatpush1.msra.mxu0 %v115
    %117 = vmatprep.subr.mxu0 0.0
    %v118 = vand.u32 %v61, 4294901760
    %119 = vmatpush1.msra.mxu0 %v118
    %120 = vmatprep.subr.mxu0 0.0
    %v121 = vand.u32 %v62, 4294901760
    %122 = vmatpush1.msra.mxu0 %v121
    %123 = vmatprep.subr.mxu0 0.0
    %v124 = vand.u32 %v63, 4294901760
    %125 = vmatpush1.msra.mxu0 %v124
    %126 = vmatprep.subr.mxu0 0.0
    %v127 = vand.u32 %v64, 4294901760
    %128 = vmatpush1.msra.mxu0 %v127
    %129 = vmatprep.subr.mxu0 0.0
    %v130 = vand.u32 %v65, 4294901760
    %131 = vmatpush1.msra.mxu0 %v130
    %132 = vmatprep.subr.mxu0 0.0
    %v133 = vand.u32 %v66, 4294901760
    %134 = vmatpush1.msra.mxu0 %v133
    %135 = vmatprep.subr.mxu0 0.0
    %v136 = vand.u32 %v67, 4294901760
    %137 = vmatpush1.msra.mxu0 %v136
    %138 = vmatprep.subr.mxu0 0.0
    %v139 = vand.u32 %v68, 4294901760
    %140 = vmatpush1.msra.mxu0 %v139
    %141 = vmatprep.subr.mxu0 0.0
    %v142 = vand.u32 %v69, 4294901760
    %143 = vmatpush1.msra.mxu0 %v142
    %144 = vmatprep.subr.mxu0 0.0
    %v145 = vand.u32 %v70, 4294901760
    %146 = vmatpush1.msra.mxu0 %v145
    %147 = vmatprep.subr.mxu0 0.0
    %v148 = vand.u32 %v71, 4294901760
    %149 = vmatpush1.msra.mxu0 %v148
    %150 = vmatprep.subr.mxu0 0.0
    %v151 = vand.u32 %v72, 4294901760
    %152 = vmatpush1.msra.mxu0 %v151
    %153 = vmatprep.subr.mxu0 0.0
    %v154 = vand.u32 %v73, 4294901760
    %155 = vmatpush1.msra.mxu0 %v154
    %156 = vmatprep.subr.mxu0 0.0
    %v157 = vand.u32 %v74, 4294901760
    %158 = vmatpush1.msra.mxu0 %v157
    %159 = vmatprep.subr.mxu0 0.0
    %v160 = vand.u32 %v75, 4294901760
    %161 = vmatpush1.msra.mxu0 %v160
    %162 = vmatprep.subr.mxu0 0.0
    %v163 = vand.u32 %v76, 4294901760
    %164 = vmatpush1.msra.mxu0 %v163
    %165 = vmatprep.subr.mxu0 0.0
    %v166 = vand.u32 %v77, 4294901760
    %167 = vmatpush1.msra.mxu0 %v166
    %168 = vmatprep.subr.mxu0 0.0
    %v169 = vand.u32 %v78, 4294901760
    %170 = vmatpush1.msra.mxu0 %v169
    %171 = vmatprep.subr.mxu0 0.0
    %v172 = vand.u32 %v79, 4294901760
    %173 = vmatpush1.msra.mxu0 %v172
    %174 = vmatprep.subr.mxu0 0.0
    %v175 = vand.u32 %v80, 4294901760
    %176 = vmatpush1.msra.mxu0 %v175
    %v177 = vand.u32 %v46, 4294901760
    %v178 = vsub.f32 %v46, %v177
    %v179 = vand.u32 %v178, 4294901760
    %v180 = vsub.f32 %v178, %v179
    %v181 = vand.u32 %v180, 4294901760
    %182 = vmatprep.mubr.f32.mxu0 %v181
    %v183 = vand.u32 %v45, 4294901760
    %v184 = vsub.f32 %v45, %v183
    %v185 = vand.u32 %v184, 4294901760
    %v186 = vsub.f32 %v184, %v185
    %v187 = vand.u32 %v186, 4294901760
    %188 = vmatmul.mubr.f32.gmra.mrb[0].mxu0 %v187
    %v189 = vpop.f32.mrb[0].mxu0
    %v190 = vadd.f32 0.0, %v189
    %v191 = vpop.f32.mrb[0].mxu0
    %v192 = vand.u32 %v48, 4294901760
    %v193 = vsub.f32 %v48, %v192
    %v194 = vand.u32 %v193, 4294901760
    %v195 = vsub.f32 %v193, %v194
    %v196 = vand.u32 %v195, 4294901760
    %197 = vmatprep.mubr.f32.mxu0 %v196
    %v198 = vand.u32 %v47, 4294901760
    %v199 = vsub.f32 %v47, %v198
    %v200 = vand.u32 %v199, 4294901760
    %v201 = vsub.f32 %v199, %v200
    %v202 = vand.u32 %v201, 4294901760
    %203 = vmatmul.mubr.f32.gmra.mrb[0].mxu0 %v202
    %v204 = vpop.f32.mrb[0].mxu0
    %v205 = vadd.f32 0.0, %v204
    %v206 = vpop.f32.mrb[0].mxu0
    %207 = vdwg.mxu0
    %208 = vmatprep.subr.mxu0 0.0
    %v209 = vand.u32 %v49, 4294901760
    %v210 = vsub.f32 %v49, %v209
    %v211 = vand.u32 %v210, 4294901760
    %v212 = vsub.f32 %v210, %v211
    %v213 = vand.u32 %v212, 4294901760
    %214 = vmatpush1.msra.mxu0 %v213
    %215 = vmatprep.subr.mxu0 0.0
    %v216 = vand.u32 %v50, 4294901760
    %v217 = vsub.f32 %v50, %v216
    %v218 = vand.u32 %v217, 4294901760
    %v219 = vsub.f32 %v217, %v218
    %v220 = vand.u32 %v219, 4294901760
    %221 = vmatpush1.msra.mxu0 %v220
    %222 = vmatprep.subr.mxu0 0.0
    %v223 = vand.u32 %v51, 4294901760
    %v224 = vsub.f32 %v51, %v223
    %v225 = vand.u32 %v224, 4294901760
    %v226 = vsub.f32 %v224, %v225
    %v227 = vand.u32 %v226, 4294901760
    %228 = vmatpush1.msra.mxu0 %v227
    %229 = vmatprep.subr.mxu0 0.0
    %v230 = vand.u32 %v52, 4294901760
    %v231 = vsub.f32 %v52, %v230
    %v232 = vand.u32 %v231, 4294901760
    %v233 = vsub.f32 %v231, %v232
    %v234 = vand.u32 %v233, 4294901760
    %235 = vmatpush1.msra.mxu0 %v234
    %236 = vmatprep.subr.mxu0 0.0
    %v237 = vand.u32 %v53, 4294901760
    %v238 = vsub.f32 %v53, %v237
    %v239 = vand.u32 %v238, 4294901760
    %v240 = vsub.f32 %v238, %v239
    %v241 = vand.u32 %v240, 4294901760
    %242 = vmatpush1.msra.mxu0 %v241
    %243 = vmatprep.subr.mxu0 0.0
    %v244 = vand.u32 %v54, 4294901760
    %v245 = vsub.f32 %v54, %v244
    %v246 = vand.u32 %v245, 4294901760
    %v247 = vsub.f32 %v245, %v246
    %v248 = vand.u32 %v247, 4294901760
    %249 = vmatpush1.msra.mxu0 %v248
    %250 = vmatprep.subr.mxu0 0.0
    %v251 = vand.u32 %v55, 4294901760
    %v252 = vsub.f32 %v55, %v251
    %v253 = vand.u32 %v252, 4294901760
    %v254 = vsub.f32 %v252, %v253
    %v255 = vand.u32 %v254, 4294901760
    %256 = vmatpush1.msra.mxu0 %v255
    %257 = vmatprep.subr.mxu0 0.0
    %v258 = vand.u32 %v56, 4294901760
    %v259 = vsub.f32 %v56, %v258
    %v260 = vand.u32 %v259, 4294901760
    %v261 = vsub.f32 %v259, %v260
    %v262 = vand.u32 %v261, 4294901760
    %263 = vmatpush1.msra.mxu0 %v262
    %264 = vmatprep.subr.mxu0 0.0
    %v265 = vand.u32 %v57, 4294901760
    %v266 = vsub.f32 %v57, %v265
    %v267 = vand.u32 %v266, 4294901760
    %v268 = vsub.f32 %v266, %v267
    %v269 = vand.u32 %v268, 4294901760
    %270 = vmatpush1.msra.mxu0 %v269
    %271 = vmatprep.subr.mxu0 0.0
    %v272 = vand.u32 %v58, 4294901760
    %v273 = vsub.f32 %v58, %v272
    %v274 = vand.u32 %v273, 4294901760
    %v275 = vsub.f32 %v273, %v274
    %v276 = vand.u32 %v275, 4294901760
    %277 = vmatpush1.msra.mxu0 %v276
    %278 = vmatprep.subr.mxu0 0.0
    %v279 = vand.u32 %v59, 4294901760
    %v280 = vsub.f32 %v59, %v279
    %v281 = vand.u32 %v280, 4294901760
    %v282 = vsub.f32 %v280, %v281
    %v283 = vand.u32 %v282, 4294901760
    %284 = vmatpush1.msra.mxu0 %v283
    %285 = vmatprep.subr.mxu0 0.0
    %v286 = vand.u32 %v60, 4294901760
    %v287 = vsub.f32 %v60, %v286
    %v288 = vand.u32 %v287, 4294901760
    %v289 = vsub.f32 %v287, %v288
    %v290 = vand.u32 %v289, 4294901760
    %291 = vmatpush1.msra.mxu0 %v290
    %292 = vmatprep.subr.mxu0 0.0
    %v293 = vand.u32 %v61, 4294901760
    %v294 = vsub.f32 %v61, %v293
    %v295 = vand.u32 %v294, 4294901760
    %v296 = vsub.f32 %v294, %v295
    %v297 = vand.u32 %v296, 4294901760
    %298 = vmatpush1.msra.mxu0 %v297
    %299 = vmatprep.subr.mxu0 0.0
    %v300 = vand.u32 %v62, 4294901760
    %v301 = vsub.f32 %v62, %v300
    %v302 = vand.u32 %v301, 4294901760
    %v303 = vsub.f32 %v301, %v302
    %v304 = vand.u32 %v303, 4294901760
    %305 = vmatpush1.msra.mxu0 %v304
    %306 = vmatprep.subr.mxu0 0.0
    %v307 = vand.u32 %v63, 4294901760
    %v308 = vsub.f32 %v63, %v307
    %v309 = vand.u32 %v308, 4294901760
    %v310 = vsub.f32 %v308, %v309
    %v311 = vand.u32 %v310, 4294901760
    %312 = vmatpush1.msra.mxu0 %v311
    %313 = vmatprep.subr.mxu0 0.0
    %v314 = vand.u32 %v64, 4294901760
    %v315 = vsub.f32 %v64, %v314
    %v316 = vand.u32 %v315, 4294901760
    %v317 = vsub.f32 %v315, %v316
    %v318 = vand.u32 %v317, 4294901760
    %319 = vmatpush1.msra.mxu0 %v318
    %320 = vmatprep.subr.mxu0 0.0
    %v321 = vand.u32 %v65, 4294901760
    %v322 = vsub.f32 %v65, %v321
    %v323 = vand.u32 %v322, 4294901760
    %v324 = vsub.f32 %v322, %v323
    %v325 = vand.u32 %v324, 4294901760
    %326 = vmatpush1.msra.mxu0 %v325
    %327 = vmatprep.subr.mxu0 0.0
    %v328 = vand.u32 %v66, 4294901760
    %v329 = vsub.f32 %v66, %v328
    %v330 = vand.u32 %v329, 4294901760
    %v331 = vsub.f32 %v329, %v330
    %v332 = vand.u32 %v331, 4294901760
    %333 = vmatpush1.msra.mxu0 %v332
    %334 = vmatprep.subr.mxu0 0.0
    %v335 = vand.u32 %v67, 4294901760
    %v336 = vsub.f32 %v67, %v335
    %v337 = vand.u32 %v336, 4294901760
    %v338 = vsub.f32 %v336, %v337
    %v339 = vand.u32 %v338, 4294901760
    %340 = vmatpush1.msra.mxu0 %v339
    %341 = vmatprep.subr.mxu0 0.0
    %v342 = vand.u32 %v68, 4294901760
    %v343 = vsub.f32 %v68, %v342
    %v344 = vand.u32 %v343, 4294901760
    %v345 = vsub.f32 %v343, %v344
    %v346 = vand.u32 %v345, 4294901760
    %347 = vmatpush1.msra.mxu0 %v346
    %348 = vmatprep.subr.mxu0 0.0
    %v349 = vand.u32 %v69, 4294901760
    %v350 = vsub.f32 %v69, %v349
    %v351 = vand.u32 %v350, 4294901760
    %v352 = vsub.f32 %v350, %v351
    %v353 = vand.u32 %v352, 4294901760
    %354 = vmatpush1.msra.mxu0 %v353
    %355 = vmatprep.subr.mxu0 0.0
    %v356 = vand.u32 %v70, 4294901760
    %v357 = vsub.f32 %v70, %v356
    %v358 = vand.u32 %v357, 4294901760
    %v359 = vsub.f32 %v357, %v358
    %v360 = vand.u32 %v359, 4294901760
    %361 = vmatpush1.msra.mxu0 %v360
    %362 = vmatprep.subr.mxu0 0.0
    %v363 = vand.u32 %v71, 4294901760
    %v364 = vsub.f32 %v71, %v363
    %v365 = vand.u32 %v364, 4294901760
    %v366 = vsub.f32 %v364, %v365
    %v367 = vand.u32 %v366, 4294901760
    %368 = vmatpush1.msra.mxu0 %v367
    %369 = vmatprep.subr.mxu0 0.0
    %v370 = vand.u32 %v72, 4294901760
    %v371 = vsub.f32 %v72, %v370
    %v372 = vand.u32 %v371, 4294901760
    %v373 = vsub.f32 %v371, %v372
    %v374 = vand.u32 %v373, 4294901760
    %375 = vmatpush1.msra.mxu0 %v374
    %376 = vmatprep.subr.mxu0 0.0
    %v377 = vand.u32 %v73, 4294901760
    %v378 = vsub.f32 %v73, %v377
    %v379 = vand.u32 %v378, 4294901760
    %v380 = vsub.f32 %v378, %v379
    %v381 = vand.u32 %v380, 4294901760
    %382 = vmatpush1.msra.mxu0 %v381
    %383 = vmatprep.subr.mxu0 0.0
    %v384 = vand.u32 %v74, 4294901760
    %v385 = vsub.f32 %v74, %v384
    %v386 = vand.u32 %v385, 4294901760
    %v387 = vsub.f32 %v385, %v386
    %v388 = vand.u32 %v387, 4294901760
    %389 = vmatpush1.msra.mxu0 %v388
    %390 = vmatprep.subr.mxu0 0.0
    %v391 = vand.u32 %v75, 4294901760
    %v392 = vsub.f32 %v75, %v391
    %v393 = vand.u32 %v392, 4294901760
    %v394 = vsub.f32 %v392, %v393
    %v395 = vand.u32 %v394, 4294901760
    %396 = vmatpush1.msra.mxu0 %v395
    %397 = vmatprep.subr.mxu0 0.0
    %v398 = vand.u32 %v76, 4294901760
    %v399 = vsub.f32 %v76, %v398
    %v400 = vand.u32 %v399, 4294901760
    %v401 = vsub.f32 %v399, %v400
    %v402 = vand.u32 %v401, 4294901760
    %403 = vmatpush1.msra.mxu0 %v402
    %404 = vmatprep.subr.mxu0 0.0
    %v405 = vand.u32 %v77, 4294901760
    %v406 = vsub.f32 %v77, %v405
    %v407 = vand.u32 %v406, 4294901760
    %v408 = vsub.f32 %v406, %v407
    %v409 = vand.u32 %v408, 4294901760
    %410 = vmatpush1.msra.mxu0 %v409
    %411 = vmatprep.subr.mxu0 0.0
    %v412 = vand.u32 %v78, 4294901760
    %v413 = vsub.f32 %v78, %v412
    %v414 = vand.u32 %v413, 4294901760
    %v415 = vsub.f32 %v413, %v414
    %v416 = vand.u32 %v415, 4294901760
    %417 = vmatpush1.msra.mxu0 %v416
    %418 = vmatprep.subr.mxu0 0.0
    %v419 = vand.u32 %v79, 4294901760
    %v420 = vsub.f32 %v79, %v419
    %v421 = vand.u32 %v420, 4294901760
    %v422 = vsub.f32 %v420, %v421
    %v423 = vand.u32 %v422, 4294901760
    %424 = vmatpush1.msra.mxu0 %v423
    %425 = vmatprep.subr.mxu0 0.0
    %v426 = vand.u32 %v80, 4294901760
    %v427 = vsub.f32 %v80, %v426
    %v428 = vand.u32 %v427, 4294901760
    %v429 = vsub.f32 %v427, %v428
    %v430 = vand.u32 %v429, 4294901760
    %431 = vmatpush1.msra.mxu0 %v430
    %v432 = vand.u32 %v46, 4294901760
    %433 = vmatprep.mubr.f32.mxu0 %v432
    %v434 = vand.u32 %v45, 4294901760
    %435 = vmatmul.mubr.f32.gmra.mrb[0].mxu0 %v434
    %v436 = vpop.f32.mrb[0].mxu0
    %v437 = vadd.f32 %v190, %v436
    %v438 = vpop.f32.mrb[0].mxu0
    %v439 = vand.u32 %v48, 4294901760
    %440 = vmatprep.mubr.f32.mxu0 %v439
    %v441 = vand.u32 %v47, 4294901760
    %442 = vmatmul.mubr.f32.gmra.mrb[0].mxu0 %v441
    %v443 = vpop.f32.mrb[0].mxu0
    %v444 = vadd.f32 %v205, %v443
    %v445 = vpop.f32.mrb[0].mxu0
    %446 = vdwg.mxu0
    %447 = vmatprep.subr.mxu0 0.0
    %v448 = vand.u32 %v49, 4294901760
    %v449 = vsub.f32 %v49, %v448
    %450 = vmatpush1.msra.mxu0 %v449
    %451 = vmatprep.subr.mxu0 0.0
    %v452 = vand.u32 %v50, 4294901760
    %v453 = vsub.f32 %v50, %v452
    %454 = vmatpush1.msra.mxu0 %v453
    %455 = vmatprep.subr.mxu0 0.0
    %v456 = vand.u32 %v51, 4294901760
    %v457 = vsub.f32 %v51, %v456
    %458 = vmatpush1.msra.mxu0 %v457
    %459 = vmatprep.subr.mxu0 0.0
    %v460 = vand.u32 %v52, 4294901760
    %v461 = vsub.f32 %v52, %v460
    %462 = vmatpush1.msra.mxu0 %v461
    %463 = vmatprep.subr.mxu0 0.0
    %v464 = vand.u32 %v53, 4294901760
    %v465 = vsub.f32 %v53, %v464
    %466 = vmatpush1.msra.mxu0 %v465
    %467 = vmatprep.subr.mxu0 0.0
    %v468 = vand.u32 %v54, 4294901760
    %v469 = vsub.f32 %v54, %v468
    %470 = vmatpush1.msra.mxu0 %v469
    %471 = vmatprep.subr.mxu0 0.0
    %v472 = vand.u32 %v55, 4294901760
    %v473 = vsub.f32 %v55, %v472
    %474 = vmatpush1.msra.mxu0 %v473
    %475 = vmatprep.subr.mxu0 0.0
    %v476 = vand.u32 %v56, 4294901760
    %v477 = vsub.f32 %v56, %v476
    %478 = vmatpush1.msra.mxu0 %v477
    %479 = vmatprep.subr.mxu0 0.0
    %v480 = vand.u32 %v57, 4294901760
    %v481 = vsub.f32 %v57, %v480
    %482 = vmatpush1.msra.mxu0 %v481
    %483 = vmatprep.subr.mxu0 0.0
    %v484 = vand.u32 %v58, 4294901760
    %v485 = vsub.f32 %v58, %v484
    %486 = vmatpush1.msra.mxu0 %v485
    %487 = vmatprep.subr.mxu0 0.0
    %v488 = vand.u32 %v59, 4294901760
    %v489 = vsub.f32 %v59, %v488
    %490 = vmatpush1.msra.mxu0 %v489
    %491 = vmatprep.subr.mxu0 0.0
    %v492 = vand.u32 %v60, 4294901760
    %v493 = vsub.f32 %v60, %v492
    %494 = vmatpush1.msra.mxu0 %v493
    %495 = vmatprep.subr.mxu0 0.0
    %v496 = vand.u32 %v61, 4294901760
    %v497 = vsub.f32 %v61, %v496
    %498 = vmatpush1.msra.mxu0 %v497
    %499 = vmatprep.subr.mxu0 0.0
    %v500 = vand.u32 %v62, 4294901760
    %v501 = vsub.f32 %v62, %v500
    %502 = vmatpush1.msra.mxu0 %v501
    %503 = vmatprep.subr.mxu0 0.0
    %v504 = vand.u32 %v63, 4294901760
    %v505 = vsub.f32 %v63, %v504
    %506 = vmatpush1.msra.mxu0 %v505
    %507 = vmatprep.subr.mxu0 0.0
    %v508 = vand.u32 %v64, 4294901760
    %v509 = vsub.f32 %v64, %v508
    %510 = vmatpush1.msra.mxu0 %v509
    %511 = vmatprep.subr.mxu0 0.0
    %v512 = vand.u32 %v65, 4294901760
    %v513 = vsub.f32 %v65, %v512
    %514 = vmatpush1.msra.mxu0 %v513
    %515 = vmatprep.subr.mxu0 0.0
    %v516 = vand.u32 %v66, 4294901760
    %v517 = vsub.f32 %v66, %v516
    %518 = vmatpush1.msra.mxu0 %v517
    %519 = vmatprep.subr.mxu0 0.0
    %v520 = vand.u32 %v67, 4294901760
    %v521 = vsub.f32 %v67, %v520
    %522 = vmatpush1.msra.mxu0 %v521
    %523 = vmatprep.subr.mxu0 0.0
    %v524 = vand.u32 %v68, 4294901760
    %v525 = vsub.f32 %v68, %v524
    %526 = vmatpush1.msra.mxu0 %v525
    %527 = vmatprep.subr.mxu0 0.0
    %v528 = vand.u32 %v69, 4294901760
    %v529 = vsub.f32 %v69, %v528
    %530 = vmatpush1.msra.mxu0 %v529
    %531 = vmatprep.subr.mxu0 0.0
    %v532 = vand.u32 %v70, 4294901760
    %v533 = vsub.f32 %v70, %v532
    %534 = vmatpush1.msra.mxu0 %v533
    %535 = vmatprep.subr.mxu0 0.0
    %v536 = vand.u32 %v71, 4294901760
    %v537 = vsub.f32 %v71, %v536
    %538 = vmatpush1.msra.mxu0 %v537
    %539 = vmatprep.subr.mxu0 0.0
    %v540 = vand.u32 %v72, 4294901760
    %v541 = vsub.f32 %v72, %v540
    %542 = vmatpush1.msra.mxu0 %v541
    %543 = vmatprep.subr.mxu0 0.0
    %v544 = vand.u32 %v73, 4294901760
    %v545 = vsub.f32 %v73, %v544
    %546 = vmatpush1.msra.mxu0 %v545
    %547 = vmatprep.subr.mxu0 0.0
    %v548 = vand.u32 %v74, 4294901760
    %v549 = vsub.f32 %v74, %v548
    %550 = vmatpush1.msra.mxu0 %v549
    %551 = vmatprep.subr.mxu0 0.0
    %v552 = vand.u32 %v75, 4294901760
    %v553 = vsub.f32 %v75, %v552
    %554 = vmatpush1.msra.mxu0 %v553
    %555 = vmatprep.subr.mxu0 0.0
    %v556 = vand.u32 %v76, 4294901760
    %v557 = vsub.f32 %v76, %v556
    %558 = vmatpush1.msra.mxu0 %v557
    %559 = vmatprep.subr.mxu0 0.0
    %v560 = vand.u32 %v77, 4294901760
    %v561 = vsub.f32 %v77, %v560
    %562 = vmatpush1.msra.mxu0 %v561
    %563 = vmatprep.subr.mxu0 0.0
    %v564 = vand.u32 %v78, 4294901760
    %v565 = vsub.f32 %v78, %v564
    %566 = vmatpush1.msra.mxu0 %v565
    %567 = vmatprep.subr.mxu0 0.0
    %v568 = vand.u32 %v79, 4294901760
    %v569 = vsub.f32 %v79, %v568
    %570 = vmatpush1.msra.mxu0 %v569
    %571 = vmatprep.subr.mxu0 0.0
    %v572 = vand.u32 %v80, 4294901760
    %v573 = vsub.f32 %v80, %v572
    %574 = vmatpush1.msra.mxu0 %v573
    %v575 = vand.u32 %v46, 4294901760
    %v576 = vsub.f32 %v46, %v575
    %577 = vmatprep.mubr.f32.mxu0 %v576
    %v578 = vand.u32 %v45, 4294901760
    %v579 = vsub.f32 %v45, %v578
    %580 = vmatmul.mubr.f32.gmra.mrb[0].mxu0 %v579
    %v581 = vpop.f32.mrb[0].mxu0
    %v582 = vadd.f32 %v437, %v581
    %v583 = vpop.f32.mrb[0].mxu0
    %v584 = vand.u32 %v48, 4294901760
    %v585 = vsub.f32 %v48, %v584
    %586 = vmatprep.mubr.f32.mxu0 %v585
    %v587 = vand.u32 %v47, 4294901760
    %v588 = vsub.f32 %v47, %v587
    %589 = vmatmul.mubr.f32.gmra.mrb[0].mxu0 %v588
    %v590 = vpop.f32.mrb[0].mxu0
    %v591 = vadd.f32 %v444, %v590
    %v592 = vpop.f32.mrb[0].mxu0
    %593 = vdwg.mxu0
    %594 = vmatprep.subr.mxu0 0.0
    %v595 = vand.u32 %v49, 4294901760
    %596 = vmatpush1.msra.mxu0 %v595
    %597 = vmatprep.subr.mxu0 0.0
    %v598 = vand.u32 %v50, 4294901760
    %599 = vmatpush1.msra.mxu0 %v598
    %600 = vmatprep.subr.mxu0 0.0
    %v601 = vand.u32 %v51, 4294901760
    %602 = vmatpush1.msra.mxu0 %v601
    %603 = vmatprep.subr.mxu0 0.0
    %v604 = vand.u32 %v52, 4294901760
    %605 = vmatpush1.msra.mxu0 %v604
    %606 = vmatprep.subr.mxu0 0.0
    %v607 = vand.u32 %v53, 4294901760
    %608 = vmatpush1.msra.mxu0 %v607
    %609 = vmatprep.subr.mxu0 0.0
    %v610 = vand.u32 %v54, 4294901760
    %611 = vmatpush1.msra.mxu0 %v610
    %612 = vmatprep.subr.mxu0 0.0
    %v613 = vand.u32 %v55, 4294901760
    %614 = vmatpush1.msra.mxu0 %v613
    %615 = vmatprep.subr.mxu0 0.0
    %v616 = vand.u32 %v56, 4294901760
    %617 = vmatpush1.msra.mxu0 %v616
    %618 = vmatprep.subr.mxu0 0.0
    %v619 = vand.u32 %v57, 4294901760
    %620 = vmatpush1.msra.mxu0 %v619
    %621 = vmatprep.subr.mxu0 0.0
    %v622 = vand.u32 %v58, 4294901760
    %623 = vmatpush1.msra.mxu0 %v622
    %624 = vmatprep.subr.mxu0 0.0
    %v625 = vand.u32 %v59, 4294901760
    %626 = vmatpush1.msra.mxu0 %v625
    %627 = vmatprep.subr.mxu0 0.0
    %v628 = vand.u32 %v60, 4294901760
    %629 = vmatpush1.msra.mxu0 %v628
    %630 = vmatprep.subr.mxu0 0.0
    %v631 = vand.u32 %v61, 4294901760
    %632 = vmatpush1.msra.mxu0 %v631
    %633 = vmatprep.subr.mxu0 0.0
    %v634 = vand.u32 %v62, 4294901760
    %635 = vmatpush1.msra.mxu0 %v634
    %636 = vmatprep.subr.mxu0 0.0
    %v637 = vand.u32 %v63, 4294901760
    %638 = vmatpush1.msra.mxu0 %v637
    %639 = vmatprep.subr.mxu0 0.0
    %v640 = vand.u32 %v64, 4294901760
    %641 = vmatpush1.msra.mxu0 %v640
    %642 = vmatprep.subr.mxu0 0.0
    %v643 = vand.u32 %v65, 4294901760
    %644 = vmatpush1.msra.mxu0 %v643
    %645 = vmatprep.subr.mxu0 0.0
    %v646 = vand.u32 %v66, 4294901760
    %647 = vmatpush1.msra.mxu0 %v646
    %648 = vmatprep.subr.mxu0 0.0
    %v649 = vand.u32 %v67, 4294901760
    %650 = vmatpush1.msra.mxu0 %v649
    %651 = vmatprep.subr.mxu0 0.0
    %v652 = vand.u32 %v68, 4294901760
    %653 = vmatpush1.msra.mxu0 %v652
    %654 = vmatprep.subr.mxu0 0.0
    %v655 = vand.u32 %v69, 4294901760
    %656 = vmatpush1.msra.mxu0 %v655
    %657 = vmatprep.subr.mxu0 0.0
    %v658 = vand.u32 %v70, 4294901760
    %659 = vmatpush1.msra.mxu0 %v658
    %660 = vmatprep.subr.mxu0 0.0
    %v661 = vand.u32 %v71, 4294901760
    %662 = vmatpush1.msra.mxu0 %v661
    %663 = vmatprep.subr.mxu0 0.0
    %v664 = vand.u32 %v72, 4294901760
    %665 = vmatpush1.msra.mxu0 %v664
    %666 = vmatprep.subr.mxu0 0.0
    %v667 = vand.u32 %v73, 4294901760
    %668 = vmatpush1.msra.mxu0 %v667
    %669 = vmatprep.subr.mxu0 0.0
    %v670 = vand.u32 %v74, 4294901760
    %671 = vmatpush1.msra.mxu0 %v670
    %672 = vmatprep.subr.mxu0 0.0
    %v673 = vand.u32 %v75, 4294901760
    %674 = vmatpush1.msra.mxu0 %v673
    %675 = vmatprep.subr.mxu0 0.0
    %v676 = vand.u32 %v76, 4294901760
    %677 = vmatpush1.msra.mxu0 %v676
    %678 = vmatprep.subr.mxu0 0.0
    %v679 = vand.u32 %v77, 4294901760
    %680 = vmatpush1.msra.mxu0 %v679
    %681 = vmatprep.subr.mxu0 0.0
    %v682 = vand.u32 %v78, 4294901760
    %683 = vmatpush1.msra.mxu0 %v682
    %684 = vmatprep.subr.mxu0 0.0
    %v685 = vand.u32 %v79, 4294901760
    %686 = vmatpush1.msra.mxu0 %v685
    %687 = vmatprep.subr.mxu0 0.0
    %v688 = vand.u32 %v80, 4294901760
    %689 = vmatpush1.msra.mxu0 %v688
    %v690 = vand.u32 %v46, 4294901760
    %v691 = vsub.f32 %v46, %v690
    %v692 = vand.u32 %v691, 4294901760
    %693 = vmatprep.mubr.f32.mxu0 %v692
    %v694 = vand.u32 %v45, 4294901760
    %v695 = vsub.f32 %v45, %v694
    %v696 = vand.u32 %v695, 4294901760
    %697 = vmatmul.mubr.f32.gmra.mrb[0].mxu0 %v696
    %v698 = vpop.f32.mrb[0].mxu0
    %v699 = vadd.f32 %v582, %v698
    %v700 = vpop.f32.mrb[0].mxu0
    %v701 = vand.u32 %v48, 4294901760
    %v702 = vsub.f32 %v48, %v701
    %v703 = vand.u32 %v702, 4294901760
    %704 = vmatprep.mubr.f32.mxu0 %v703
    %v705 = vand.u32 %v47, 4294901760
    %v706 = vsub.f32 %v47, %v705
    %v707 = vand.u32 %v706, 4294901760
    %708 = vmatmul.mubr.f32.gmra.mrb[0].mxu0 %v707
    %v709 = vpop.f32.mrb[0].mxu0
    %v710 = vadd.f32 %v591, %v709
    %v711 = vpop.f32.mrb[0].mxu0
    %712 = vdwg.mxu0
    %713 = vmatprep.subr.mxu0 0.0
    %v714 = vand.u32 %v49, 4294901760
    %v715 = vsub.f32 %v49, %v714
    %v716 = vand.u32 %v715, 4294901760
    %717 = vmatpush1.msra.mxu0 %v716
    %718 = vmatprep.subr.mxu0 0.0
    %v719 = vand.u32 %v50, 4294901760
    %v720 = vsub.f32 %v50, %v719
    %v721 = vand.u32 %v720, 4294901760
    %722 = vmatpush1.msra.mxu0 %v721
    %723 = vmatprep.subr.mxu0 0.0
    %v724 = vand.u32 %v51, 4294901760
    %v725 = vsub.f32 %v51, %v724
    %v726 = vand.u32 %v725, 4294901760
    %727 = vmatpush1.msra.mxu0 %v726
    %728 = vmatprep.subr.mxu0 0.0
    %v729 = vand.u32 %v52, 4294901760
    %v730 = vsub.f32 %v52, %v729
    %v731 = vand.u32 %v730, 4294901760
    %732 = vmatpush1.msra.mxu0 %v731
    %733 = vmatprep.subr.mxu0 0.0
    %v734 = vand.u32 %v53, 4294901760
    %v735 = vsub.f32 %v53, %v734
    %v736 = vand.u32 %v735, 4294901760
    %737 = vmatpush1.msra.mxu0 %v736
    %738 = vmatprep.subr.mxu0 0.0
    %v739 = vand.u32 %v54, 4294901760
    %v740 = vsub.f32 %v54, %v739
    %v741 = vand.u32 %v740, 4294901760
    %742 = vmatpush1.msra.mxu0 %v741
    %743 = vmatprep.subr.mxu0 0.0
    %v744 = vand.u32 %v55, 4294901760
    %v745 = vsub.f32 %v55, %v744
    %v746 = vand.u32 %v745, 4294901760
    %747 = vmatpush1.msra.mxu0 %v746
    %748 = vmatprep.subr.mxu0 0.0
    %v749 = vand.u32 %v56, 4294901760
    %v750 = vsub.f32 %v56, %v749
    %v751 = vand.u32 %v750, 4294901760
    %752 = vmatpush1.msra.mxu0 %v751
    %753 = vmatprep.subr.mxu0 0.0
    %v754 = vand.u32 %v57, 4294901760
    %v755 = vsub.f32 %v57, %v754
    %v756 = vand.u32 %v755, 4294901760
    %757 = vmatpush1.msra.mxu0 %v756
    %758 = vmatprep.subr.mxu0 0.0
    %v759 = vand.u32 %v58, 4294901760
    %v760 = vsub.f32 %v58, %v759
    %v761 = vand.u32 %v760, 4294901760
    %762 = vmatpush1.msra.mxu0 %v761
    %763 = vmatprep.subr.mxu0 0.0
    %v764 = vand.u32 %v59, 4294901760
    %v765 = vsub.f32 %v59, %v764
    %v766 = vand.u32 %v765, 4294901760
    %767 = vmatpush1.msra.mxu0 %v766
    %768 = vmatprep.subr.mxu0 0.0
    %v769 = vand.u32 %v60, 4294901760
    %v770 = vsub.f32 %v60, %v769
    %v771 = vand.u32 %v770, 4294901760
    %772 = vmatpush1.msra.mxu0 %v771
    %773 = vmatprep.subr.mxu0 0.0
    %v774 = vand.u32 %v61, 4294901760
    %v775 = vsub.f32 %v61, %v774
    %v776 = vand.u32 %v775, 4294901760
    %777 = vmatpush1.msra.mxu0 %v776
    %778 = vmatprep.subr.mxu0 0.0
    %v779 = vand.u32 %v62, 4294901760
    %v780 = vsub.f32 %v62, %v779
    %v781 = vand.u32 %v780, 4294901760
    %782 = vmatpush1.msra.mxu0 %v781
    %783 = vmatprep.subr.mxu0 0.0
    %v784 = vand.u32 %v63, 4294901760
    %v785 = vsub.f32 %v63, %v784
    %v786 = vand.u32 %v785, 4294901760
    %787 = vmatpush1.msra.mxu0 %v786
    %788 = vmatprep.subr.mxu0 0.0
    %v789 = vand.u32 %v64, 4294901760
    %v790 = vsub.f32 %v64, %v789
    %v791 = vand.u32 %v790, 4294901760
    %792 = vmatpush1.msra.mxu0 %v791
    %793 = vmatprep.subr.mxu0 0.0
    %v794 = vand.u32 %v65, 4294901760
    %v795 = vsub.f32 %v65, %v794
    %v796 = vand.u32 %v795, 4294901760
    %797 = vmatpush1.msra.mxu0 %v796
    %798 = vmatprep.subr.mxu0 0.0
    %v799 = vand.u32 %v66, 4294901760
    %v800 = vsub.f32 %v66, %v799
    %v801 = vand.u32 %v800, 4294901760
    %802 = vmatpush1.msra.mxu0 %v801
    %803 = vmatprep.subr.mxu0 0.0
    %v804 = vand.u32 %v67, 4294901760
    %v805 = vsub.f32 %v67, %v804
    %v806 = vand.u32 %v805, 4294901760
    %807 = vmatpush1.msra.mxu0 %v806
    %808 = vmatprep.subr.mxu0 0.0
    %v809 = vand.u32 %v68, 4294901760
    %v810 = vsub.f32 %v68, %v809
    %v811 = vand.u32 %v810, 4294901760
    %812 = vmatpush1.msra.mxu0 %v811
    %813 = vmatprep.subr.mxu0 0.0
    %v814 = vand.u32 %v69, 4294901760
    %v815 = vsub.f32 %v69, %v814
    %v816 = vand.u32 %v815, 4294901760
    %817 = vmatpush1.msra.mxu0 %v816
    %818 = vmatprep.subr.mxu0 0.0
    %v819 = vand.u32 %v70, 4294901760
    %v820 = vsub.f32 %v70, %v819
    %v821 = vand.u32 %v820, 4294901760
    %822 = vmatpush1.msra.mxu0 %v821
    %823 = vmatprep.subr.mxu0 0.0
    %v824 = vand.u32 %v71, 4294901760
    %v825 = vsub.f32 %v71, %v824
    %v826 = vand.u32 %v825, 4294901760
    %827 = vmatpush1.msra.mxu0 %v826
    %828 = vmatprep.subr.mxu0 0.0
    %v829 = vand.u32 %v72, 4294901760
    %v830 = vsub.f32 %v72, %v829
    %v831 = vand.u32 %v830, 4294901760
    %832 = vmatpush1.msra.mxu0 %v831
    %833 = vmatprep.subr.mxu0 0.0
    %v834 = vand.u32 %v73, 4294901760
    %v835 = vsub.f32 %v73, %v834
    %v836 = vand.u32 %v835, 4294901760
    %837 = vmatpush1.msra.mxu0 %v836
    %838 = vmatprep.subr.mxu0 0.0
    %v839 = vand.u32 %v74, 4294901760
    %v840 = vsub.f32 %v74, %v839
    %v841 = vand.u32 %v840, 4294901760
    %842 = vmatpush1.msra.mxu0 %v841
    %843 = vmatprep.subr.mxu0 0.0
    %v844 = vand.u32 %v75, 4294901760
    %v845 = vsub.f32 %v75, %v844
    %v846 = vand.u32 %v845, 4294901760
    %847 = vmatpush1.msra.mxu0 %v846
    %848 = vmatprep.subr.mxu0 0.0
    %v849 = vand.u32 %v76, 4294901760
    %v850 = vsub.f32 %v76, %v849
    %v851 = vand.u32 %v850, 4294901760
    %852 = vmatpush1.msra.mxu0 %v851
    %853 = vmatprep.subr.mxu0 0.0
    %v854 = vand.u32 %v77, 4294901760
    %v855 = vsub.f32 %v77, %v854
    %v856 = vand.u32 %v855, 4294901760
    %857 = vmatpush1.msra.mxu0 %v856
    %858 = vmatprep.subr.mxu0 0.0
    %v859 = vand.u32 %v78, 4294901760
    %v860 = vsub.f32 %v78, %v859
    %v861 = vand.u32 %v860, 4294901760
    %862 = vmatpush1.msra.mxu0 %v861
    %863 = vmatprep.subr.mxu0 0.0
    %v864 = vand.u32 %v79, 4294901760
    %v865 = vsub.f32 %v79, %v864
    %v866 = vand.u32 %v865, 4294901760
    %867 = vmatpush1.msra.mxu0 %v866
    %868 = vmatprep.subr.mxu0 0.0
    %v869 = vand.u32 %v80, 4294901760
    %v870 = vsub.f32 %v80, %v869
    %v871 = vand.u32 %v870, 4294901760
    %872 = vmatpush1.msra.mxu0 %v871
    %v873 = vand.u32 %v46, 4294901760
    %874 = vmatprep.mubr.f32.mxu0 %v873
    %v875 = vand.u32 %v45, 4294901760
    %876 = vmatmul.mubr.f32.gmra.mrb[0].mxu0 %v875
    %v877 = vpop.f32.mrb[0].mxu0
    %v878 = vadd.f32 %v699, %v877
    %v879 = vpop.f32.mrb[0].mxu0
    %v880 = vand.u32 %v48, 4294901760
    %881 = vmatprep.mubr.f32.mxu0 %v880
    %v882 = vand.u32 %v47, 4294901760
    %883 = vmatmul.mubr.f32.gmra.mrb[0].mxu0 %v882
    %v884 = vpop.f32.mrb[0].mxu0
    %v885 = vadd.f32 %v710, %v884
    %v886 = vpop.f32.mrb[0].mxu0
    %887 = vdwg.mxu0
    %888 = vmatprep.subr.mxu0 0.0
    %v889 = vand.u32 %v49, 4294901760
    %890 = vmatpush1.msra.mxu0 %v889
    %891 = vmatprep.subr.mxu0 0.0
    %v892 = vand.u32 %v50, 4294901760
    %893 = vmatpush1.msra.mxu0 %v892
    %894 = vmatprep.subr.mxu0 0.0
    %v895 = vand.u32 %v51, 4294901760
    %896 = vmatpush1.msra.mxu0 %v895
    %897 = vmatprep.subr.mxu0 0.0
    %v898 = vand.u32 %v52, 4294901760
    %899 = vmatpush1.msra.mxu0 %v898
    %900 = vmatprep.subr.mxu0 0.0
    %v901 = vand.u32 %v53, 4294901760
    %902 = vmatpush1.msra.mxu0 %v901
    %903 = vmatprep.subr.mxu0 0.0
    %v904 = vand.u32 %v54, 4294901760
    %905 = vmatpush1.msra.mxu0 %v904
    %906 = vmatprep.subr.mxu0 0.0
    %v907 = vand.u32 %v55, 4294901760
    %908 = vmatpush1.msra.mxu0 %v907
    %909 = vmatprep.subr.mxu0 0.0
    %v910 = vand.u32 %v56, 4294901760
    %911 = vmatpush1.msra.mxu0 %v910
    %912 = vmatprep.subr.mxu0 0.0
    %v913 = vand.u32 %v57, 4294901760
    %914 = vmatpush1.msra.mxu0 %v913
    %915 = vmatprep.subr.mxu0 0.0
    %v916 = vand.u32 %v58, 4294901760
    %917 = vmatpush1.msra.mxu0 %v916
    %918 = vmatprep.subr.mxu0 0.0
    %v919 = vand.u32 %v59, 4294901760
    %920 = vmatpush1.msra.mxu0 %v919
    %921 = vmatprep.subr.mxu0 0.0
    %v922 = vand.u32 %v60, 4294901760
    %923 = vmatpush1.msra.mxu0 %v922
    %924 = vmatprep.subr.mxu0 0.0
    %v925 = vand.u32 %v61, 4294901760
    %926 = vmatpush1.msra.mxu0 %v925
    %927 = vmatprep.subr.mxu0 0.0
    %v928 = vand.u32 %v62, 4294901760
    %929 = vmatpush1.msra.mxu0 %v928
    %930 = vmatprep.subr.mxu0 0.0
    %v931 = vand.u32 %v63, 4294901760
    %932 = vmatpush1.msra.mxu0 %v931
    %933 = vmatprep.subr.mxu0 0.0
    %v934 = vand.u32 %v64, 4294901760
    %935 = vmatpush1.msra.mxu0 %v934
    %936 = vmatprep.subr.mxu0 0.0
    %v937 = vand.u32 %v65, 4294901760
    %938 = vmatpush1.msra.mxu0 %v937
    %939 = vmatprep.subr.mxu0 0.0
    %v940 = vand.u32 %v66, 4294901760
    %941 = vmatpush1.msra.mxu0 %v940
    %942 = vmatprep.subr.mxu0 0.0
    %v943 = vand.u32 %v67, 4294901760
    %944 = vmatpush1.msra.mxu0 %v943
    %945 = vmatprep.subr.mxu0 0.0
    %v946 = vand.u32 %v68, 4294901760
    %947 = vmatpush1.msra.mxu0 %v946
    %948 = vmatprep.subr.mxu0 0.0
    %v949 = vand.u32 %v69, 4294901760
    %950 = vmatpush1.msra.mxu0 %v949
    %951 = vmatprep.subr.mxu0 0.0
    %v952 = vand.u32 %v70, 4294901760
    %953 = vmatpush1.msra.mxu0 %v952
    %954 = vmatprep.subr.mxu0 0.0
    %v955 = vand.u32 %v71, 4294901760
    %956 = vmatpush1.msra.mxu0 %v955
    %957 = vmatprep.subr.mxu0 0.0
    %v958 = vand.u32 %v72, 4294901760
    %959 = vmatpush1.msra.mxu0 %v958
    %960 = vmatprep.subr.mxu0 0.0
    %v961 = vand.u32 %v73, 4294901760
    %962 = vmatpush1.msra.mxu0 %v961
    %963 = vmatprep.subr.mxu0 0.0
    %v964 = vand.u32 %v74, 4294901760
    %965 = vmatpush1.msra.mxu0 %v964
    %966 = vmatprep.subr.mxu0 0.0
    %v967 = vand.u32 %v75, 4294901760
    %968 = vmatpush1.msra.mxu0 %v967
    %969 = vmatprep.subr.mxu0 0.0
    %v970 = vand.u32 %v76, 4294901760
    %971 = vmatpush1.msra.mxu0 %v970
    %972 = vmatprep.subr.mxu0 0.0
    %v973 = vand.u32 %v77, 4294901760
    %974 = vmatpush1.msra.mxu0 %v973
    %975 = vmatprep.subr.mxu0 0.0
    %v976 = vand.u32 %v78, 4294901760
    %977 = vmatpush1.msra.mxu0 %v976
    %978 = vmatprep.subr.mxu0 0.0
    %v979 = vand.u32 %v79, 4294901760
    %980 = vmatpush1.msra.mxu0 %v979
    %981 = vmatprep.subr.mxu0 0.0
    %v982 = vand.u32 %v80, 4294901760
    %983 = vmatpush1.msra.mxu0 %v982
    %v984 = vand.u32 %v46, 4294901760
    %985 = vmatprep.mubr.f32.mxu0 %v984
    %v986 = vand.u32 %v45, 4294901760
    %987 = vmatmul.mubr.f32.gmra.mrb[0].mxu0 %v986
    %v988 = vpop.f32.mrb[0].mxu0
    %v989 = vadd.f32 %v878, %v988
    %v990 = vpop.f32.mrb[0].mxu0
    %v991 = vand.u32 %v48, 4294901760
    %992 = vmatprep.mubr.f32.mxu0 %v991
    %v993 = vand.u32 %v47, 4294901760
    %994 = vmatmul.mubr.f32.gmra.mrb[0].mxu0 %v993
    %v995 = vpop.f32.mrb[0].mxu0
    %v996 = vadd.f32 %v885, %v995
    %v997 = vpop.f32.mrb[0].mxu0
    %998 = vdwg.mxu0
    %999 = vst [vmem:[#allocation5] sm:$0xff] %v989
    %1000 = vst [vmem:[#allocation5 + $0x8] sm:$0xff] %v996
    // Predicated region
    $region14: #{tpu_custom_call.1} parent=1 // pred_check
      _
    $region15: #{tpu_custom_call.1} parent=1 // pred_check_branch
      %1002 = sbr.rel (0) target = $region17
    $region16: #{tpu_custom_call.1} parent=1 // pred_region
      %s1004 = ssub.s32 256, 256
      %1005 = vsyncadd [#allocation4], %s1004
      %s1006 = sshll.u32 [#allocation5], 4
      %s1007 = int_to_ptr.vmem [resolvable:$true] %s1006
      %1012 = dma.vmem_to_hbm [thread:$0]  %s1007, 256, %s2, [#allocation4], 128, 128, 8
    $region17: #{tpu_custom_call.1} parent=1 // pred_fallthru
      _
    // Predicated region
    $region18: #{tpu_custom_call.1} parent=1 // pred_check
      _
    $region19: #{tpu_custom_call.1} parent=1 // pred_check_branch
      %1014 = sbr.rel (0) target = $region21
    $region20: #{tpu_custom_call.1} parent=1 // pred_region
      %1015 = dma.done [#allocation4], 256
    $region21: #{tpu_custom_call.1} parent=1 // pred_fallthru
      _
    %1016 = vsyncpa [#allocation3], 1
    %1017 = vsyncpa [#allocation4], 1

// kernel: tpu_custom_call.1
$region0: #{tpu_custom_call.1}
  #allocation0 [shape = 'u32[]', space=smem, size = 0x4, offset = 0x4, fixed_abs, tag = 'smem constant byte address 0x4 - core index']
  #allocation1 [shape = 'u32[144,128]{1,0:T(1,128)}', space=vmem, size = 0x12000, scoped, tag = 'internal scratch']
  %s0 = inlined_call_operand.vmem [shape: s32[16,1], index: 0, kind: input, shape index: {}]
  %s1 = inlined_call_operand.hbm [shape: f32[256,128], index: 1, kind: input, shape index: {}]
  %s2 = inlined_call_operand.hbm [shape: f32[16,128], index: 2, kind: output, shape index: {}]
  %s3 = sld [smem:[#allocation0]]
  $region22: #{tpu_custom_call.1} parent=0
    _
  %s5 = ssub.s32 1, %s3
  %s6 = scalar_select 0, %s5, %s3
  $region1: #{tpu_custom_call.1} parent=0
    #allocation2 [shape = 'u8[131072]{0}', space=vmem, size = 0x20000, scoped, tag = 'input window, operand 1, single buffered']
    #allocation3 [shape = 's32[1]{0}', space=sflag, size = 0x4, scoped, tag = 'scoped memory for tpu_custom_call.1']
    #allocation4 [shape = 's32[1]{0}', space=sflag, size = 0x4, scoped, tag = 'scoped memory for tpu_custom_call.1']
    #allocation5 [shape = 'u8[8192]{0}', space=vmem, size = 0x2000, scoped, tag = 'output window, operand 0, single buffered']
    %7 = vsyncpa [#allocation3], 0
    %8 = vsyncpa [#allocation4], 0
    // Predicated region
    $region2: #{tpu_custom_call.1} parent=1 // pred_check
      _
    $region3: #{tpu_custom_call.1} parent=1 // pred_check_branch
      %10 = sbr.rel (0) target = $region5
    $region4: #{tpu_custom_call.1} parent=1 // pred_region
      _
    $region5: #{tpu_custom_call.1} parent=1 // pred_fallthru
      _
    // Predicated region
    $region6: #{tpu_custom_call.1} parent=1 // pred_check
      _
    $region7: #{tpu_custom_call.1} parent=1 // pred_check_branch
      %12 = sbr.rel (0) target = $region9
    $region8: #{tpu_custom_call.1} parent=1 // pred_region
      %s14 = ssub.s32 4096, 4096
      %15 = vsyncadd [#allocation3], %s14
      %s16 = sshll.u32 [#allocation2], 4
      %s17 = int_to_ptr.vmem [resolvable:$true] %s16
      %22 = dma.hbm_to_vmem [thread:$0]  %s1, 4096, %s17, [#allocation3], 128, 128, 8
    $region9: #{tpu_custom_call.1} parent=1 // pred_fallthru
      _
    // Predicated region
    $region10: #{tpu_custom_call.1} parent=1 // pred_check
      _
    $region11: #{tpu_custom_call.1} parent=1 // pred_check_branch
      %24 = sbr.rel (0) target = $region13
    $region12: #{tpu_custom_call.1} parent=1 // pred_region
      %25 = dma.done [#allocation3], 4096
    $region13: #{tpu_custom_call.1} parent=1 // pred_fallthru
      _
    %v26 = vld [vmem:[%s0] sm:$0xff]
    %v27 = vld [vmem:[%s0 + $0x8] sm:$0xff]
    %v28 = vlaneseq
    %v29 = vand.u32 %v28, 127
    %v30 = vadd.s32 %v29, 128
    %31 = vset.pattern.permute.xlu0 0
    %32 = vperm.xlu0 %31, %v26
    %v33 = vpop.permute.xlu0 %32
    %34 = vset.pattern.permute.xlu0 0
    %35 = vperm.xlu0 %34, %v27
    %v36 = vpop.permute.xlu0 %35
    %vm37 = vcmp.eq.s32.totalorder %v33, %v29
    %vm38 = vcmp.eq.s32.totalorder %v33, %v30
    %vm39 = vcmp.eq.s32.totalorder %v36, %v29
    %vm40 = vcmp.eq.s32.totalorder %v36, %v30
    %v41 = vsel %vm37, 1, 0
    %v42 = vsel %vm38, 1, 0
    %v43 = vsel %vm39, 1, 0
    %v44 = vsel %vm40, 1, 0
    %v45 = vcvt.s32.f32 %v41
    %v46 = vcvt.s32.f32 %v42
    %v47 = vcvt.s32.f32 %v43
    %v48 = vcvt.s32.f32 %v44
    %v49 = vld [vmem:[#allocation2] sm:$0xff]
    %v50 = vld [vmem:[#allocation2 + $0x8] sm:$0xff]
    %v51 = vld [vmem:[#allocation2 + $0x10] sm:$0xff]
    %v52 = vld [vmem:[#allocation2 + $0x18] sm:$0xff]
    %v53 = vld [vmem:[#allocation2 + $0x20] sm:$0xff]
    %v54 = vld [vmem:[#allocation2 + $0x28] sm:$0xff]
    %v55 = vld [vmem:[#allocation2 + $0x30] sm:$0xff]
    %v56 = vld [vmem:[#allocation2 + $0x38] sm:$0xff]
    %v57 = vld [vmem:[#allocation2 + $0x40] sm:$0xff]
    %v58 = vld [vmem:[#allocation2 + $0x48] sm:$0xff]
    %v59 = vld [vmem:[#allocation2 + $0x50] sm:$0xff]
    %v60 = vld [vmem:[#allocation2 + $0x58] sm:$0xff]
    %v61 = vld [vmem:[#allocation2 + $0x60] sm:$0xff]
    %v62 = vld [vmem:[#allocation2 + $0x68] sm:$0xff]
    %v63 = vld [vmem:[#allocation2 + $0x70] sm:$0xff]
    %v64 = vld [vmem:[#allocation2 + $0x78] sm:$0xff]
    %v65 = vld [vmem:[#allocation2 + $0x80] sm:$0xff]
    %v66 = vld [vmem:[#allocation2 + $0x88] sm:$0xff]
    %v67 = vld [vmem:[#allocation2 + $0x90] sm:$0xff]
    %v68 = vld [vmem:[#allocation2 + $0x98] sm:$0xff]
    %v69 = vld [vmem:[#allocation2 + $0xa0] sm:$0xff]
    %v70 = vld [vmem:[#allocation2 + $0xa8] sm:$0xff]
    %v71 = vld [vmem:[#allocation2 + $0xb0] sm:$0xff]
    %v72 = vld [vmem:[#allocation2 + $0xb8] sm:$0xff]
    %v73 = vld [vmem:[#allocation2 + $0xc0] sm:$0xff]
    %v74 = vld [vmem:[#allocation2 + $0xc8] sm:$0xff]
    %v75 = vld [vmem:[#allocation2 + $0xd0] sm:$0xff]
    %v76 = vld [vmem:[#allocation2 + $0xd8] sm:$0xff]
    %v77 = vld [vmem:[#allocation2 + $0xe0] sm:$0xff]
    %v78 = vld [vmem:[#allocation2 + $0xe8] sm:$0xff]
    %v79 = vld [vmem:[#allocation2 + $0xf0] sm:$0xff]
    %v80 = vld [vmem:[#allocation2 + $0xf8] sm:$0xff]
    %81 = vmatprep.subr.mxu0 0.0
    %v82 = vand.u32 %v49, 4294901760
    %83 = vmatpush1.msra.mxu0 %v82
    %84 = vmatprep.subr.mxu0 0.0
    %v85 = vand.u32 %v50, 4294901760
    %86 = vmatpush1.msra.mxu0 %v85
    %87 = vmatprep.subr.mxu0 0.0
    %v88 = vand.u32 %v51, 4294901760
    %89 = vmatpush1.msra.mxu0 %v88
    %90 = vmatprep.subr.mxu0 0.0
    %v91 = vand.u32 %v52, 4294901760
    %92 = vmatpush1.msra.mxu0 %v91
    %93 = vmatprep.subr.mxu0 0.0
    %v94 = vand.u32 %v53, 4294901760
    %95 = vmatpush1.msra.mxu0 %v94
    %96 = vmatprep.subr.mxu0 0.0
    %v97 = vand.u32 %v54, 4294901760
    %98 = vmatpush1.msra.mxu0 %v97
    %99 = vmatprep.subr.mxu0 0.0
    %v100 = vand.u32 %v55, 4294901760
    %101 = vmatpush1.msra.mxu0 %v100
    %102 = vmatprep.subr.mxu0 0.0
    %v103 = vand.u32 %v56, 4294901760
    %104 = vmatpush1.msra.mxu0 %v103
    %105 = vmatprep.subr.mxu0 0.0
    %v106 = vand.u32 %v57, 4294901760
    %107 = vmatpush1.msra.mxu0 %v106
    %108 = vmatprep.subr.mxu0 0.0
    %v109 = vand.u32 %v58, 4294901760
    %110 = vmatpush1.msra.mxu0 %v109
    %111 = vmatprep.subr.mxu0 0.0
    %v112 = vand.u32 %v59, 4294901760
    %113 = vmatpush1.msra.mxu0 %v112
    %114 = vmatprep.subr.mxu0 0.0
    %v115 = vand.u32 %v60, 4294901760
    %116 = vmatpush1.msra.mxu0 %v115
    %117 = vmatprep.subr.mxu0 0.0
    %v118 = vand.u32 %v61, 4294901760
    %119 = vmatpush1.msra.mxu0 %v118
    %120 = vmatprep.subr.mxu0 0.0
    %v121 = vand.u32 %v62, 4294901760
    %122 = vmatpush1.msra.mxu0 %v121
    %123 = vmatprep.subr.mxu0 0.0
    %v124 = vand.u32 %v63, 4294901760
    %125 = vmatpush1.msra.mxu0 %v124
    %126 = vmatprep.subr.mxu0 0.0
    %v127 = vand.u32 %v64, 4294901760
    %128 = vmatpush1.msra.mxu0 %v127
    %129 = vmatprep.subr.mxu0 0.0
    %v130 = vand.u32 %v65, 4294901760
    %131 = vmatpush1.msra.mxu0 %v130
    %132 = vmatprep.subr.mxu0 0.0
    %v133 = vand.u32 %v66, 4294901760
    %134 = vmatpush1.msra.mxu0 %v133
    %135 = vmatprep.subr.mxu0 0.0
    %v136 = vand.u32 %v67, 4294901760
    %137 = vmatpush1.msra.mxu0 %v136
    %138 = vmatprep.subr.mxu0 0.0
    %v139 = vand.u32 %v68, 4294901760
    %140 = vmatpush1.msra.mxu0 %v139
    %141 = vmatprep.subr.mxu0 0.0
    %v142 = vand.u32 %v69, 4294901760
    %143 = vmatpush1.msra.mxu0 %v142
    %144 = vmatprep.subr.mxu0 0.0
    %v145 = vand.u32 %v70, 4294901760
    %146 = vmatpush1.msra.mxu0 %v145
    %147 = vmatprep.subr.mxu0 0.0
    %v148 = vand.u32 %v71, 4294901760
    %149 = vmatpush1.msra.mxu0 %v148
    %150 = vmatprep.subr.mxu0 0.0
    %v151 = vand.u32 %v72, 4294901760
    %152 = vmatpush1.msra.mxu0 %v151
    %153 = vmatprep.subr.mxu0 0.0
    %v154 = vand.u32 %v73, 4294901760
    %155 = vmatpush1.msra.mxu0 %v154
    %156 = vmatprep.subr.mxu0 0.0
    %v157 = vand.u32 %v74, 4294901760
    %158 = vmatpush1.msra.mxu0 %v157
    %159 = vmatprep.subr.mxu0 0.0
    %v160 = vand.u32 %v75, 4294901760
    %161 = vmatpush1.msra.mxu0 %v160
    %162 = vmatprep.subr.mxu0 0.0
    %v163 = vand.u32 %v76, 4294901760
    %164 = vmatpush1.msra.mxu0 %v163
    %165 = vmatprep.subr.mxu0 0.0
    %v166 = vand.u32 %v77, 4294901760
    %167 = vmatpush1.msra.mxu0 %v166
    %168 = vmatprep.subr.mxu0 0.0
    %v169 = vand.u32 %v78, 4294901760
    %170 = vmatpush1.msra.mxu0 %v169
    %171 = vmatprep.subr.mxu0 0.0
    %v172 = vand.u32 %v79, 4294901760
    %173 = vmatpush1.msra.mxu0 %v172
    %174 = vmatprep.subr.mxu0 0.0
    %v175 = vand.u32 %v80, 4294901760
    %176 = vmatpush1.msra.mxu0 %v175
    %v177 = vand.u32 %v46, 4294901760
    %v178 = vsub.f32 %v46, %v177
    %v179 = vand.u32 %v178, 4294901760
    %v180 = vsub.f32 %v178, %v179
    %v181 = vand.u32 %v180, 4294901760
    %182 = vmatprep.mubr.f32.mxu0 %v181
    %v183 = vand.u32 %v45, 4294901760
    %v184 = vsub.f32 %v45, %v183
    %v185 = vand.u32 %v184, 4294901760
    %v186 = vsub.f32 %v184, %v185
    %v187 = vand.u32 %v186, 4294901760
    %188 = vmatmul.mubr.f32.gmra.mrb[0].mxu0 %v187
    %v189 = vpop.f32.mrb[0].mxu0
    %v190 = vadd.f32 0.0, %v189
    %v191 = vpop.f32.mrb[0].mxu0
    %v192 = vand.u32 %v48, 4294901760
    %v193 = vsub.f32 %v48, %v192
    %v194 = vand.u32 %v193, 4294901760
    %v195 = vsub.f32 %v193, %v194
    %v196 = vand.u32 %v195, 4294901760
    %197 = vmatprep.mubr.f32.mxu0 %v196
    %v198 = vand.u32 %v47, 4294901760
    %v199 = vsub.f32 %v47, %v198
    %v200 = vand.u32 %v199, 4294901760
    %v201 = vsub.f32 %v199, %v200
    %v202 = vand.u32 %v201, 4294901760
    %203 = vmatmul.mubr.f32.gmra.mrb[0].mxu0 %v202
    %v204 = vpop.f32.mrb[0].mxu0
    %v205 = vadd.f32 0.0, %v204
    %v206 = vpop.f32.mrb[0].mxu0
    %207 = vdwg.mxu0
    %208 = vmatprep.subr.mxu0 0.0
    %v209 = vand.u32 %v49, 4294901760
    %v210 = vsub.f32 %v49, %v209
    %v211 = vand.u32 %v210, 4294901760
    %v212 = vsub.f32 %v210, %v211
    %v213 = vand.u32 %v212, 4294901760
    %214 = vmatpush1.msra.mxu0 %v213
    %215 = vmatprep.subr.mxu0 0.0
    %v216 = vand.u32 %v50, 4294901760
    %v217 = vsub.f32 %v50, %v216
    %v218 = vand.u32 %v217, 4294901760
    %v219 = vsub.f32 %v217, %v218
    %v220 = vand.u32 %v219, 4294901760
    %221 = vmatpush1.msra.mxu0 %v220
    %222 = vmatprep.subr.mxu0 0.0
    %v223 = vand.u32 %v51, 4294901760
    %v224 = vsub.f32 %v51, %v223
    %v225 = vand.u32 %v224, 4294901760
    %v226 = vsub.f32 %v224, %v225
    %v227 = vand.u32 %v226, 4294901760
    %228 = vmatpush1.msra.mxu0 %v227
    %229 = vmatprep.subr.mxu0 0.0
    %v230 = vand.u32 %v52, 4294901760
    %v231 = vsub.f32 %v52, %v230
    %v232 = vand.u32 %v231, 4294901760
    %v233 = vsub.f32 %v231, %v232
    %v234 = vand.u32 %v233, 4294901760
    %235 = vmatpush1.msra.mxu0 %v234
    %236 = vmatprep.subr.mxu0 0.0
    %v237 = vand.u32 %v53, 4294901760
    %v238 = vsub.f32 %v53, %v237
    %v239 = vand.u32 %v238, 4294901760
    %v240 = vsub.f32 %v238, %v239
    %v241 = vand.u32 %v240, 4294901760
    %242 = vmatpush1.msra.mxu0 %v241
    %243 = vmatprep.subr.mxu0 0.0
    %v244 = vand.u32 %v54, 4294901760
    %v245 = vsub.f32 %v54, %v244
    %v246 = vand.u32 %v245, 4294901760
    %v247 = vsub.f32 %v245, %v246
    %v248 = vand.u32 %v247, 4294901760
    %249 = vmatpush1.msra.mxu0 %v248
    %250 = vmatprep.subr.mxu0 0.0
    %v251 = vand.u32 %v55, 4294901760
    %v252 = vsub.f32 %v55, %v251
    %v253 = vand.u32 %v252, 4294901760
    %v254 = vsub.f32 %v252, %v253
    %v255 = vand.u32 %v254, 4294901760
    %256 = vmatpush1.msra.mxu0 %v255
    %257 = vmatprep.subr.mxu0 0.0
    %v258 = vand.u32 %v56, 4294901760
    %v259 = vsub.f32 %v56, %v258
    %v260 = vand.u32 %v259, 4294901760
    %v261 = vsub.f32 %v259, %v260
    %v262 = vand.u32 %v261, 4294901760
    %263 = vmatpush1.msra.mxu0 %v262
    %264 = vmatprep.subr.mxu0 0.0
    %v265 = vand.u32 %v57, 4294901760
    %v266 = vsub.f32 %v57, %v265
    %v267 = vand.u32 %v266, 4294901760
    %v268 = vsub.f32 %v266, %v267
    %v269 = vand.u32 %v268, 4294901760
    %270 = vmatpush1.msra.mxu0 %v269
    %271 = vmatprep.subr.mxu0 0.0
    %v272 = vand.u32 %v58, 4294901760
    %v273 = vsub.f32 %v58, %v272
    %v274 = vand.u32 %v273, 4294901760
    %v275 = vsub.f32 %v273, %v274
    %v276 = vand.u32 %v275, 4294901760
    %277 = vmatpush1.msra.mxu0 %v276
    %278 = vmatprep.subr.mxu0 0.0
    %v279 = vand.u32 %v59, 4294901760
    %v280 = vsub.f32 %v59, %v279
    %v281 = vand.u32 %v280, 4294901760
    %v282 = vsub.f32 %v280, %v281
    %v283 = vand.u32 %v282, 4294901760
    %284 = vmatpush1.msra.mxu0 %v283
    %285 = vmatprep.subr.mxu0 0.0
    %v286 = vand.u32 %v60, 4294901760
    %v287 = vsub.f32 %v60, %v286
    %v288 = vand.u32 %v287, 4294901760
    %v289 = vsub.f32 %v287, %v288
    %v290 = vand.u32 %v289, 4294901760
    %291 = vmatpush1.msra.mxu0 %v290
    %292 = vmatprep.subr.mxu0 0.0
    %v293 = vand.u32 %v61, 4294901760
    %v294 = vsub.f32 %v61, %v293
    %v295 = vand.u32 %v294, 4294901760
    %v296 = vsub.f32 %v294, %v295
    %v297 = vand.u32 %v296, 4294901760
    %298 = vmatpush1.msra.mxu0 %v297
    %299 = vmatprep.subr.mxu0 0.0
    %v300 = vand.u32 %v62, 4294901760
    %v301 = vsub.f32 %v62, %v300
    %v302 = vand.u32 %v301, 4294901760
    %v303 = vsub.f32 %v301, %v302
    %v304 = vand.u32 %v303, 4294901760
    %305 = vmatpush1.msra.mxu0 %v304
    %306 = vmatprep.subr.mxu0 0.0
    %v307 = vand.u32 %v63, 4294901760
    %v308 = vsub.f32 %v63, %v307
    %v309 = vand.u32 %v308, 4294901760
    %v310 = vsub.f32 %v308, %v309
    %v311 = vand.u32 %v310, 4294901760
    %312 = vmatpush1.msra.mxu0 %v311
    %313 = vmatprep.subr.mxu0 0.0
    %v314 = vand.u32 %v64, 4294901760
    %v315 = vsub.f32 %v64, %v314
    %v316 = vand.u32 %v315, 4294901760
    %v317 = vsub.f32 %v315, %v316
    %v318 = vand.u32 %v317, 4294901760
    %319 = vmatpush1.msra.mxu0 %v318
    %320 = vmatprep.subr.mxu0 0.0
    %v321 = vand.u32 %v65, 4294901760
    %v322 = vsub.f32 %v65, %v321
    %v323 = vand.u32 %v322, 4294901760
    %v324 = vsub.f32 %v322, %v323
    %v325 = vand.u32 %v324, 4294901760
    %326 = vmatpush1.msra.mxu0 %v325
    %327 = vmatprep.subr.mxu0 0.0
    %v328 = vand.u32 %v66, 4294901760
    %v329 = vsub.f32 %v66, %v328
    %v330 = vand.u32 %v329, 4294901760
    %v331 = vsub.f32 %v329, %v330
    %v332 = vand.u32 %v331, 4294901760
    %333 = vmatpush1.msra.mxu0 %v332
    %334 = vmatprep.subr.mxu0 0.0
    %v335 = vand.u32 %v67, 4294901760
    %v336 = vsub.f32 %v67, %v335
    %v337 = vand.u32 %v336, 4294901760
    %v338 = vsub.f32 %v336, %v337
    %v339 = vand.u32 %v338, 4294901760
    %340 = vmatpush1.msra.mxu0 %v339
    %341 = vmatprep.subr.mxu0 0.0
    %v342 = vand.u32 %v68, 4294901760
    %v343 = vsub.f32 %v68, %v342
    %v344 = vand.u32 %v343, 4294901760
    %v345 = vsub.f32 %v343, %v344
    %v346 = vand.u32 %v345, 4294901760
    %347 = vmatpush1.msra.mxu0 %v346
    %348 = vmatprep.subr.mxu0 0.0
    %v349 = vand.u32 %v69, 4294901760
    %v350 = vsub.f32 %v69, %v349
    %v351 = vand.u32 %v350, 4294901760
    %v352 = vsub.f32 %v350, %v351
    %v353 = vand.u32 %v352, 4294901760
    %354 = vmatpush1.msra.mxu0 %v353
    %355 = vmatprep.subr.mxu0 0.0
    %v356 = vand.u32 %v70, 4294901760
    %v357 = vsub.f32 %v70, %v356
    %v358 = vand.u32 %v357, 4294901760
    %v359 = vsub.f32 %v357, %v358
    %v360 = vand.u32 %v359, 4294901760
    %361 = vmatpush1.msra.mxu0 %v360
    %362 = vmatprep.subr.mxu0 0.0
    %v363 = vand.u32 %v71, 4294901760
    %v364 = vsub.f32 %v71, %v363
    %v365 = vand.u32 %v364, 4294901760
    %v366 = vsub.f32 %v364, %v365
    %v367 = vand.u32 %v366, 4294901760
    %368 = vmatpush1.msra.mxu0 %v367
    %369 = vmatprep.subr.mxu0 0.0
    %v370 = vand.u32 %v72, 4294901760
    %v371 = vsub.f32 %v72, %v370
    %v372 = vand.u32 %v371, 4294901760
    %v373 = vsub.f32 %v371, %v372
    %v374 = vand.u32 %v373, 4294901760
    %375 = vmatpush1.msra.mxu0 %v374
    %376 = vmatprep.subr.mxu0 0.0
    %v377 = vand.u32 %v73, 4294901760
    %v378 = vsub.f32 %v73, %v377
    %v379 = vand.u32 %v378, 4294901760
    %v380 = vsub.f32 %v378, %v379
    %v381 = vand.u32 %v380, 4294901760
    %382 = vmatpush1.msra.mxu0 %v381
    %383 = vmatprep.subr.mxu0 0.0
    %v384 = vand.u32 %v74, 4294901760
    %v385 = vsub.f32 %v74, %v384
    %v386 = vand.u32 %v385, 4294901760
    %v387 = vsub.f32 %v385, %v386
    %v388 = vand.u32 %v387, 4294901760
    %389 = vmatpush1.msra.mxu0 %v388
    %390 = vmatprep.subr.mxu0 0.0
    %v391 = vand.u32 %v75, 4294901760
    %v392 = vsub.f32 %v75, %v391
    %v393 = vand.u32 %v392, 4294901760
    %v394 = vsub.f32 %v392, %v393
    %v395 = vand.u32 %v394, 4294901760
    %396 = vmatpush1.msra.mxu0 %v395
    %397 = vmatprep.subr.mxu0 0.0
    %v398 = vand.u32 %v76, 4294901760
    %v399 = vsub.f32 %v76, %v398
    %v400 = vand.u32 %v399, 4294901760
    %v401 = vsub.f32 %v399, %v400
    %v402 = vand.u32 %v401, 4294901760
    %403 = vmatpush1.msra.mxu0 %v402
    %404 = vmatprep.subr.mxu0 0.0
    %v405 = vand.u32 %v77, 4294901760
    %v406 = vsub.f32 %v77, %v405
    %v407 = vand.u32 %v406, 4294901760
    %v408 = vsub.f32 %v406, %v407
    %v409 = vand.u32 %v408, 4294901760
    %410 = vmatpush1.msra.mxu0 %v409
    %411 = vmatprep.subr.mxu0 0.0
    %v412 = vand.u32 %v78, 4294901760
    %v413 = vsub.f32 %v78, %v412
    %v414 = vand.u32 %v413, 4294901760
    %v415 = vsub.f32 %v413, %v414
    %v416 = vand.u32 %v415, 4294901760
    %417 = vmatpush1.msra.mxu0 %v416
    %418 = vmatprep.subr.mxu0 0.0
    %v419 = vand.u32 %v79, 4294901760
    %v420 = vsub.f32 %v79, %v419
    %v421 = vand.u32 %v420, 4294901760
    %v422 = vsub.f32 %v420, %v421
    %v423 = vand.u32 %v422, 4294901760
    %424 = vmatpush1.msra.mxu0 %v423
    %425 = vmatprep.subr.mxu0 0.0
    %v426 = vand.u32 %v80, 4294901760
    %v427 = vsub.f32 %v80, %v426
    %v428 = vand.u32 %v427, 4294901760
    %v429 = vsub.f32 %v427, %v428
    %v430 = vand.u32 %v429, 4294901760
    %431 = vmatpush1.msra.mxu0 %v430
    %v432 = vand.u32 %v46, 4294901760
    %433 = vmatprep.mubr.f32.mxu0 %v432
    %v434 = vand.u32 %v45, 4294901760
    %435 = vmatmul.mubr.f32.gmra.mrb[0].mxu0 %v434
    %v436 = vpop.f32.mrb[0].mxu0
    %v437 = vadd.f32 %v190, %v436
    %v438 = vpop.f32.mrb[0].mxu0
    %v439 = vand.u32 %v48, 4294901760
    %440 = vmatprep.mubr.f32.mxu0 %v439
    %v441 = vand.u32 %v47, 4294901760
    %442 = vmatmul.mubr.f32.gmra.mrb[0].mxu0 %v441
    %v443 = vpop.f32.mrb[0].mxu0
    %v444 = vadd.f32 %v205, %v443
    %v445 = vpop.f32.mrb[0].mxu0
    %446 = vdwg.mxu0
    %447 = vmatprep.subr.mxu0 0.0
    %v448 = vand.u32 %v49, 4294901760
    %v449 = vsub.f32 %v49, %v448
    %450 = vmatpush1.msra.mxu0 %v449
    %451 = vmatprep.subr.mxu0 0.0
    %v452 = vand.u32 %v50, 4294901760
    %v453 = vsub.f32 %v50, %v452
    %454 = vmatpush1.msra.mxu0 %v453
    %455 = vmatprep.subr.mxu0 0.0
    %v456 = vand.u32 %v51, 4294901760
    %v457 = vsub.f32 %v51, %v456
    %458 = vmatpush1.msra.mxu0 %v457
    %459 = vmatprep.subr.mxu0 0.0
    %v460 = vand.u32 %v52, 4294901760
    %v461 = vsub.f32 %v52, %v460
    %462 = vmatpush1.msra.mxu0 %v461
    %463 = vmatprep.subr.mxu0 0.0
    %v464 = vand.u32 %v53, 4294901760
    %v465 = vsub.f32 %v53, %v464
    %466 = vmatpush1.msra.mxu0 %v465
    %467 = vmatprep.subr.mxu0 0.0
    %v468 = vand.u32 %v54, 4294901760
    %v469 = vsub.f32 %v54, %v468
    %470 = vmatpush1.msra.mxu0 %v469
    %471 = vmatprep.subr.mxu0 0.0
    %v472 = vand.u32 %v55, 4294901760
    %v473 = vsub.f32 %v55, %v472
    %474 = vmatpush1.msra.mxu0 %v473
    %475 = vmatprep.subr.mxu0 0.0
    %v476 = vand.u32 %v56, 4294901760
    %v477 = vsub.f32 %v56, %v476
    %478 = vmatpush1.msra.mxu0 %v477
    %479 = vmatprep.subr.mxu0 0.0
    %v480 = vand.u32 %v57, 4294901760
    %v481 = vsub.f32 %v57, %v480
    %482 = vmatpush1.msra.mxu0 %v481
    %483 = vmatprep.subr.mxu0 0.0
    %v484 = vand.u32 %v58, 4294901760
    %v485 = vsub.f32 %v58, %v484
    %486 = vmatpush1.msra.mxu0 %v485
    %487 = vmatprep.subr.mxu0 0.0
    %v488 = vand.u32 %v59, 4294901760
    %v489 = vsub.f32 %v59, %v488
    %490 = vmatpush1.msra.mxu0 %v489
    %491 = vmatprep.subr.mxu0 0.0
    %v492 = vand.u32 %v60, 4294901760
    %v493 = vsub.f32 %v60, %v492
    %494 = vmatpush1.msra.mxu0 %v493
    %495 = vmatprep.subr.mxu0 0.0
    %v496 = vand.u32 %v61, 4294901760
    %v497 = vsub.f32 %v61, %v496
    %498 = vmatpush1.msra.mxu0 %v497
    %499 = vmatprep.subr.mxu0 0.0
    %v500 = vand.u32 %v62, 4294901760
    %v501 = vsub.f32 %v62, %v500
    %502 = vmatpush1.msra.mxu0 %v501
    %503 = vmatprep.subr.mxu0 0.0
    %v504 = vand.u32 %v63, 4294901760
    %v505 = vsub.f32 %v63, %v504
    %506 = vmatpush1.msra.mxu0 %v505
    %507 = vmatprep.subr.mxu0 0.0
    %v508 = vand.u32 %v64, 4294901760
    %v509 = vsub.f32 %v64, %v508
    %510 = vmatpush1.msra.mxu0 %v509
    %511 = vmatprep.subr.mxu0 0.0
    %v512 = vand.u32 %v65, 4294901760
    %v513 = vsub.f32 %v65, %v512
    %514 = vmatpush1.msra.mxu0 %v513
    %515 = vmatprep.subr.mxu0 0.0
    %v516 = vand.u32 %v66, 4294901760
    %v517 = vsub.f32 %v66, %v516
    %518 = vmatpush1.msra.mxu0 %v517
    %519 = vmatprep.subr.mxu0 0.0
    %v520 = vand.u32 %v67, 4294901760
    %v521 = vsub.f32 %v67, %v520
    %522 = vmatpush1.msra.mxu0 %v521
    %523 = vmatprep.subr.mxu0 0.0
    %v524 = vand.u32 %v68, 4294901760
    %v525 = vsub.f32 %v68, %v524
    %526 = vmatpush1.msra.mxu0 %v525
    %527 = vmatprep.subr.mxu0 0.0
    %v528 = vand.u32 %v69, 4294901760
    %v529 = vsub.f32 %v69, %v528
    %530 = vmatpush1.msra.mxu0 %v529
    %531 = vmatprep.subr.mxu0 0.0
    %v532 = vand.u32 %v70, 4294901760
    %v533 = vsub.f32 %v70, %v532
    %534 = vmatpush1.msra.mxu0 %v533
    %535 = vmatprep.subr.mxu0 0.0
    %v536 = vand.u32 %v71, 4294901760
    %v537 = vsub.f32 %v71, %v536
    %538 = vmatpush1.msra.mxu0 %v537
    %539 = vmatprep.subr.mxu0 0.0
    %v540 = vand.u32 %v72, 4294901760
    %v541 = vsub.f32 %v72, %v540
    %542 = vmatpush1.msra.mxu0 %v541
    %543 = vmatprep.subr.mxu0 0.0
    %v544 = vand.u32 %v73, 4294901760
    %v545 = vsub.f32 %v73, %v544
    %546 = vmatpush1.msra.mxu0 %v545
    %547 = vmatprep.subr.mxu0 0.0
    %v548 = vand.u32 %v74, 4294901760
    %v549 = vsub.f32 %v74, %v548
    %550 = vmatpush1.msra.mxu0 %v549
    %551 = vmatprep.subr.mxu0 0.0
    %v552 = vand.u32 %v75, 4294901760
    %v553 = vsub.f32 %v75, %v552
    %554 = vmatpush1.msra.mxu0 %v553
    %555 = vmatprep.subr.mxu0 0.0
    %v556 = vand.u32 %v76, 4294901760
    %v557 = vsub.f32 %v76, %v556
    %558 = vmatpush1.msra.mxu0 %v557
    %559 = vmatprep.subr.mxu0 0.0
    %v560 = vand.u32 %v77, 4294901760
    %v561 = vsub.f32 %v77, %v560
    %562 = vmatpush1.msra.mxu0 %v561
    %563 = vmatprep.subr.mxu0 0.0
    %v564 = vand.u32 %v78, 4294901760
    %v565 = vsub.f32 %v78, %v564
    %566 = vmatpush1.msra.mxu0 %v565
    %567 = vmatprep.subr.mxu0 0.0
    %v568 = vand.u32 %v79, 4294901760
    %v569 = vsub.f32 %v79, %v568
    %570 = vmatpush1.msra.mxu0 %v569
    %571 = vmatprep.subr.mxu0 0.0
    %v572 = vand.u32 %v80, 4294901760
    %v573 = vsub.f32 %v80, %v572
    %574 = vmatpush1.msra.mxu0 %v573
    %v575 = vand.u32 %v46, 4294901760
    %v576 = vsub.f32 %v46, %v575
    %577 = vmatprep.mubr.f32.mxu0 %v576
    %v578 = vand.u32 %v45, 4294901760
    %v579 = vsub.f32 %v45, %v578
    %580 = vmatmul.mubr.f32.gmra.mrb[0].mxu0 %v579
    %v581 = vpop.f32.mrb[0].mxu0
    %v582 = vadd.f32 %v437, %v581
    %v583 = vpop.f32.mrb[0].mxu0
    %v584 = vand.u32 %v48, 4294901760
    %v585 = vsub.f32 %v48, %v584
    %586 = vmatprep.mubr.f32.mxu0 %v585
    %v587 = vand.u32 %v47, 4294901760
    %v588 = vsub.f32 %v47, %v587
    %589 = vmatmul.mubr.f32.gmra.mrb[0].mxu0 %v588
    %v590 = vpop.f32.mrb[0].mxu0
    %v591 = vadd.f32 %v444, %v590
    %v592 = vpop.f32.mrb[0].mxu0
    %593 = vdwg.mxu0
    %594 = vmatprep.subr.mxu0 0.0
    %v595 = vand.u32 %v49, 4294901760
    %596 = vmatpush1.msra.mxu0 %v595
    %597 = vmatprep.subr.mxu0 0.0
    %v598 = vand.u32 %v50, 4294901760
    %599 = vmatpush1.msra.mxu0 %v598
    %600 = vmatprep.subr.mxu0 0.0
    %v601 = vand.u32 %v51, 4294901760
    %602 = vmatpush1.msra.mxu0 %v601
    %603 = vmatprep.subr.mxu0 0.0
    %v604 = vand.u32 %v52, 4294901760
    %605 = vmatpush1.msra.mxu0 %v604
    %606 = vmatprep.subr.mxu0 0.0
    %v607 = vand.u32 %v53, 4294901760
    %608 = vmatpush1.msra.mxu0 %v607
    %609 = vmatprep.subr.mxu0 0.0
    %v610 = vand.u32 %v54, 4294901760
    %611 = vmatpush1.msra.mxu0 %v610
    %612 = vmatprep.subr.mxu0 0.0
    %v613 = vand.u32 %v55, 4294901760
    %614 = vmatpush1.msra.mxu0 %v613
    %615 = vmatprep.subr.mxu0 0.0
    %v616 = vand.u32 %v56, 4294901760
    %617 = vmatpush1.msra.mxu0 %v616
    %618 = vmatprep.subr.mxu0 0.0
    %v619 = vand.u32 %v57, 4294901760
    %620 = vmatpush1.msra.mxu0 %v619
    %621 = vmatprep.subr.mxu0 0.0
    %v622 = vand.u32 %v58, 4294901760
    %623 = vmatpush1.msra.mxu0 %v622
    %624 = vmatprep.subr.mxu0 0.0
    %v625 = vand.u32 %v59, 4294901760
    %626 = vmatpush1.msra.mxu0 %v625
    %627 = vmatprep.subr.mxu0 0.0
    %v628 = vand.u32 %v60, 4294901760
    %629 = vmatpush1.msra.mxu0 %v628
    %630 = vmatprep.subr.mxu0 0.0
    %v631 = vand.u32 %v61, 4294901760
    %632 = vmatpush1.msra.mxu0 %v631
    %633 = vmatprep.subr.mxu0 0.0
    %v634 = vand.u32 %v62, 4294901760
    %635 = vmatpush1.msra.mxu0 %v634
    %636 = vmatprep.subr.mxu0 0.0
    %v637 = vand.u32 %v63, 4294901760
    %638 = vmatpush1.msra.mxu0 %v637
    %639 = vmatprep.subr.mxu0 0.0
    %v640 = vand.u32 %v64, 4294901760
    %641 = vmatpush1.msra.mxu0 %v640
    %642 = vmatprep.subr.mxu0 0.0
    %v643 = vand.u32 %v65, 4294901760
    %644 = vmatpush1.msra.mxu0 %v643
    %645 = vmatprep.subr.mxu0 0.0
    %v646 = vand.u32 %v66, 4294901760
    %647 = vmatpush1.msra.mxu0 %v646
    %648 = vmatprep.subr.mxu0 0.0
    %v649 = vand.u32 %v67, 4294901760
    %650 = vmatpush1.msra.mxu0 %v649
    %651 = vmatprep.subr.mxu0 0.0
    %v652 = vand.u32 %v68, 4294901760
    %653 = vmatpush1.msra.mxu0 %v652
    %654 = vmatprep.subr.mxu0 0.0
    %v655 = vand.u32 %v69, 4294901760
    %656 = vmatpush1.msra.mxu0 %v655
    %657 = vmatprep.subr.mxu0 0.0
    %v658 = vand.u32 %v70, 4294901760
    %659 = vmatpush1.msra.mxu0 %v658
    %660 = vmatprep.subr.mxu0 0.0
    %v661 = vand.u32 %v71, 4294901760
    %662 = vmatpush1.msra.mxu0 %v661
    %663 = vmatprep.subr.mxu0 0.0
    %v664 = vand.u32 %v72, 4294901760
    %665 = vmatpush1.msra.mxu0 %v664
    %666 = vmatprep.subr.mxu0 0.0
    %v667 = vand.u32 %v73, 4294901760
    %668 = vmatpush1.msra.mxu0 %v667
    %669 = vmatprep.subr.mxu0 0.0
    %v670 = vand.u32 %v74, 4294901760
    %671 = vmatpush1.msra.mxu0 %v670
    %672 = vmatprep.subr.mxu0 0.0
    %v673 = vand.u32 %v75, 4294901760
    %674 = vmatpush1.msra.mxu0 %v673
    %675 = vmatprep.subr.mxu0 0.0
    %v676 = vand.u32 %v76, 4294901760
    %677 = vmatpush1.msra.mxu0 %v676
    %678 = vmatprep.subr.mxu0 0.0
    %v679 = vand.u32 %v77, 4294901760
    %680 = vmatpush1.msra.mxu0 %v679
    %681 = vmatprep.subr.mxu0 0.0
    %v682 = vand.u32 %v78, 4294901760
    %683 = vmatpush1.msra.mxu0 %v682
    %684 = vmatprep.subr.mxu0 0.0
    %v685 = vand.u32 %v79, 4294901760
    %686 = vmatpush1.msra.mxu0 %v685
    %687 = vmatprep.subr.mxu0 0.0
    %v688 = vand.u32 %v80, 4294901760
    %689 = vmatpush1.msra.mxu0 %v688
    %v690 = vand.u32 %v46, 4294901760
    %v691 = vsub.f32 %v46, %v690
    %v692 = vand.u32 %v691, 4294901760
    %693 = vmatprep.mubr.f32.mxu0 %v692
    %v694 = vand.u32 %v45, 4294901760
    %v695 = vsub.f32 %v45, %v694
    %v696 = vand.u32 %v695, 4294901760
    %697 = vmatmul.mubr.f32.gmra.mrb[0].mxu0 %v696
    %v698 = vpop.f32.mrb[0].mxu0
    %v699 = vadd.f32 %v582, %v698
    %v700 = vpop.f32.mrb[0].mxu0
    %v701 = vand.u32 %v48, 4294901760
    %v702 = vsub.f32 %v48, %v701
    %v703 = vand.u32 %v702, 4294901760
    %704 = vmatprep.mubr.f32.mxu0 %v703
    %v705 = vand.u32 %v47, 4294901760
    %v706 = vsub.f32 %v47, %v705
    %v707 = vand.u32 %v706, 4294901760
    %708 = vmatmul.mubr.f32.gmra.mrb[0].mxu0 %v707
    %v709 = vpop.f32.mrb[0].mxu0
    %v710 = vadd.f32 %v591, %v709
    %v711 = vpop.f32.mrb[0].mxu0
    %712 = vdwg.mxu0
    %713 = vmatprep.subr.mxu0 0.0
    %v714 = vand.u32 %v49, 4294901760
    %v715 = vsub.f32 %v49, %v714
    %v716 = vand.u32 %v715, 4294901760
    %717 = vmatpush1.msra.mxu0 %v716
    %718 = vmatprep.subr.mxu0 0.0
    %v719 = vand.u32 %v50, 4294901760
    %v720 = vsub.f32 %v50, %v719
    %v721 = vand.u32 %v720, 4294901760
    %722 = vmatpush1.msra.mxu0 %v721
    %723 = vmatprep.subr.mxu0 0.0
    %v724 = vand.u32 %v51, 4294901760
    %v725 = vsub.f32 %v51, %v724
    %v726 = vand.u32 %v725, 4294901760
    %727 = vmatpush1.msra.mxu0 %v726
    %728 = vmatprep.subr.mxu0 0.0
    %v729 = vand.u32 %v52, 4294901760
    %v730 = vsub.f32 %v52, %v729
    %v731 = vand.u32 %v730, 4294901760
    %732 = vmatpush1.msra.mxu0 %v731
    %733 = vmatprep.subr.mxu0 0.0
    %v734 = vand.u32 %v53, 4294901760
    %v735 = vsub.f32 %v53, %v734
    %v736 = vand.u32 %v735, 4294901760
    %737 = vmatpush1.msra.mxu0 %v736
    %738 = vmatprep.subr.mxu0 0.0
    %v739 = vand.u32 %v54, 4294901760
    %v740 = vsub.f32 %v54, %v739
    %v741 = vand.u32 %v740, 4294901760
    %742 = vmatpush1.msra.mxu0 %v741
    %743 = vmatprep.subr.mxu0 0.0
    %v744 = vand.u32 %v55, 4294901760
    %v745 = vsub.f32 %v55, %v744
    %v746 = vand.u32 %v745, 4294901760
    %747 = vmatpush1.msra.mxu0 %v746
    %748 = vmatprep.subr.mxu0 0.0
    %v749 = vand.u32 %v56, 4294901760
    %v750 = vsub.f32 %v56, %v749
    %v751 = vand.u32 %v750, 4294901760
    %752 = vmatpush1.msra.mxu0 %v751
    %753 = vmatprep.subr.mxu0 0.0
    %v754 = vand.u32 %v57, 4294901760
    %v755 = vsub.f32 %v57, %v754
    %v756 = vand.u32 %v755, 4294901760
    %757 = vmatpush1.msra.mxu0 %v756
    %758 = vmatprep.subr.mxu0 0.0
    %v759 = vand.u32 %v58, 4294901760
    %v760 = vsub.f32 %v58, %v759
    %v761 = vand.u32 %v760, 4294901760
    %762 = vmatpush1.msra.mxu0 %v761
    %763 = vmatprep.subr.mxu0 0.0
    %v764 = vand.u32 %v59, 4294901760
    %v765 = vsub.f32 %v59, %v764
    %v766 = vand.u32 %v765, 4294901760
    %767 = vmatpush1.msra.mxu0 %v766
    %768 = vmatprep.subr.mxu0 0.0
    %v769 = vand.u32 %v60, 4294901760
    %v770 = vsub.f32 %v60, %v769
    %v771 = vand.u32 %v770, 4294901760
    %772 = vmatpush1.msra.mxu0 %v771
    %773 = vmatprep.subr.mxu0 0.0
    %v774 = vand.u32 %v61, 4294901760
    %v775 = vsub.f32 %v61, %v774
    %v776 = vand.u32 %v775, 4294901760
    %777 = vmatpush1.msra.mxu0 %v776
    %778 = vmatprep.subr.mxu0 0.0
    %v779 = vand.u32 %v62, 4294901760
    %v780 = vsub.f32 %v62, %v779
    %v781 = vand.u32 %v780, 4294901760
    %782 = vmatpush1.msra.mxu0 %v781
    %783 = vmatprep.subr.mxu0 0.0
    %v784 = vand.u32 %v63, 4294901760
    %v785 = vsub.f32 %v63, %v784
    %v786 = vand.u32 %v785, 4294901760
    %787 = vmatpush1.msra.mxu0 %v786
    %788 = vmatprep.subr.mxu0 0.0
    %v789 = vand.u32 %v64, 4294901760
    %v790 = vsub.f32 %v64, %v789
    %v791 = vand.u32 %v790, 4294901760
    %792 = vmatpush1.msra.mxu0 %v791
    %793 = vmatprep.subr.mxu0 0.0
    %v794 = vand.u32 %v65, 4294901760
    %v795 = vsub.f32 %v65, %v794
    %v796 = vand.u32 %v795, 4294901760
    %797 = vmatpush1.msra.mxu0 %v796
    %798 = vmatprep.subr.mxu0 0.0
    %v799 = vand.u32 %v66, 4294901760
    %v800 = vsub.f32 %v66, %v799
    %v801 = vand.u32 %v800, 4294901760
    %802 = vmatpush1.msra.mxu0 %v801
    %803 = vmatprep.subr.mxu0 0.0
    %v804 = vand.u32 %v67, 4294901760
    %v805 = vsub.f32 %v67, %v804
    %v806 = vand.u32 %v805, 4294901760
    %807 = vmatpush1.msra.mxu0 %v806
    %808 = vmatprep.subr.mxu0 0.0
    %v809 = vand.u32 %v68, 4294901760
    %v810 = vsub.f32 %v68, %v809
    %v811 = vand.u32 %v810, 4294901760
    %812 = vmatpush1.msra.mxu0 %v811
    %813 = vmatprep.subr.mxu0 0.0
    %v814 = vand.u32 %v69, 4294901760
    %v815 = vsub.f32 %v69, %v814
    %v816 = vand.u32 %v815, 4294901760
    %817 = vmatpush1.msra.mxu0 %v816
    %818 = vmatprep.subr.mxu0 0.0
    %v819 = vand.u32 %v70, 4294901760
    %v820 = vsub.f32 %v70, %v819
    %v821 = vand.u32 %v820, 4294901760
    %822 = vmatpush1.msra.mxu0 %v821
    %823 = vmatprep.subr.mxu0 0.0
    %v824 = vand.u32 %v71, 4294901760
    %v825 = vsub.f32 %v71, %v824
    %v826 = vand.u32 %v825, 4294901760
    %827 = vmatpush1.msra.mxu0 %v826
    %828 = vmatprep.subr.mxu0 0.0
    %v829 = vand.u32 %v72, 4294901760
    %v830 = vsub.f32 %v72, %v829
    %v831 = vand.u32 %v830, 4294901760
    %832 = vmatpush1.msra.mxu0 %v831
    %833 = vmatprep.subr.mxu0 0.0
    %v834 = vand.u32 %v73, 4294901760
    %v835 = vsub.f32 %v73, %v834
    %v836 = vand.u32 %v835, 4294901760
    %837 = vmatpush1.msra.mxu0 %v836
    %838 = vmatprep.subr.mxu0 0.0
    %v839 = vand.u32 %v74, 4294901760
    %v840 = vsub.f32 %v74, %v839
    %v841 = vand.u32 %v840, 4294901760
    %842 = vmatpush1.msra.mxu0 %v841
    %843 = vmatprep.subr.mxu0 0.0
    %v844 = vand.u32 %v75, 4294901760
    %v845 = vsub.f32 %v75, %v844
    %v846 = vand.u32 %v845, 4294901760
    %847 = vmatpush1.msra.mxu0 %v846
    %848 = vmatprep.subr.mxu0 0.0
    %v849 = vand.u32 %v76, 4294901760
    %v850 = vsub.f32 %v76, %v849
    %v851 = vand.u32 %v850, 4294901760
    %852 = vmatpush1.msra.mxu0 %v851
    %853 = vmatprep.subr.mxu0 0.0
    %v854 = vand.u32 %v77, 4294901760
    %v855 = vsub.f32 %v77, %v854
    %v856 = vand.u32 %v855, 4294901760
    %857 = vmatpush1.msra.mxu0 %v856
    %858 = vmatprep.subr.mxu0 0.0
    %v859 = vand.u32 %v78, 4294901760
    %v860 = vsub.f32 %v78, %v859
    %v861 = vand.u32 %v860, 4294901760
    %862 = vmatpush1.msra.mxu0 %v861
    %863 = vmatprep.subr.mxu0 0.0
    %v864 = vand.u32 %v79, 4294901760
    %v865 = vsub.f32 %v79, %v864
    %v866 = vand.u32 %v865, 4294901760
    %867 = vmatpush1.msra.mxu0 %v866
    %868 = vmatprep.subr.mxu0 0.0
    %v869 = vand.u32 %v80, 4294901760
    %v870 = vsub.f32 %v80, %v869
    %v871 = vand.u32 %v870, 4294901760
    %872 = vmatpush1.msra.mxu0 %v871
    %v873 = vand.u32 %v46, 4294901760
    %874 = vmatprep.mubr.f32.mxu0 %v873
    %v875 = vand.u32 %v45, 4294901760
    %876 = vmatmul.mubr.f32.gmra.mrb[0].mxu0 %v875
    %v877 = vpop.f32.mrb[0].mxu0
    %v878 = vadd.f32 %v699, %v877
    %v879 = vpop.f32.mrb[0].mxu0
    %v880 = vand.u32 %v48, 4294901760
    %881 = vmatprep.mubr.f32.mxu0 %v880
    %v882 = vand.u32 %v47, 4294901760
    %883 = vmatmul.mubr.f32.gmra.mrb[0].mxu0 %v882
    %v884 = vpop.f32.mrb[0].mxu0
    %v885 = vadd.f32 %v710, %v884
    %v886 = vpop.f32.mrb[0].mxu0
    %887 = vdwg.mxu0
    %888 = vmatprep.subr.mxu0 0.0
    %v889 = vand.u32 %v49, 4294901760
    %890 = vmatpush1.msra.mxu0 %v889
    %891 = vmatprep.subr.mxu0 0.0
    %v892 = vand.u32 %v50, 4294901760
    %893 = vmatpush1.msra.mxu0 %v892
    %894 = vmatprep.subr.mxu0 0.0
    %v895 = vand.u32 %v51, 4294901760
    %896 = vmatpush1.msra.mxu0 %v895
    %897 = vmatprep.subr.mxu0 0.0
    %v898 = vand.u32 %v52, 4294901760
    %899 = vmatpush1.msra.mxu0 %v898
    %900 = vmatprep.subr.mxu0 0.0
    %v901 = vand.u32 %v53, 4294901760
    %902 = vmatpush1.msra.mxu0 %v901
    %903 = vmatprep.subr.mxu0 0.0
    %v904 = vand.u32 %v54, 4294901760
    %905 = vmatpush1.msra.mxu0 %v904
    %906 = vmatprep.subr.mxu0 0.0
    %v907 = vand.u32 %v55, 4294901760
    %908 = vmatpush1.msra.mxu0 %v907
    %909 = vmatprep.subr.mxu0 0.0
    %v910 = vand.u32 %v56, 4294901760
    %911 = vmatpush1.msra.mxu0 %v910
    %912 = vmatprep.subr.mxu0 0.0
    %v913 = vand.u32 %v57, 4294901760
    %914 = vmatpush1.msra.mxu0 %v913
    %915 = vmatprep.subr.mxu0 0.0
    %v916 = vand.u32 %v58, 4294901760
    %917 = vmatpush1.msra.mxu0 %v916
    %918 = vmatprep.subr.mxu0 0.0
    %v919 = vand.u32 %v59, 4294901760
    %920 = vmatpush1.msra.mxu0 %v919
    %921 = vmatprep.subr.mxu0 0.0
    %v922 = vand.u32 %v60, 4294901760
    %923 = vmatpush1.msra.mxu0 %v922
    %924 = vmatprep.subr.mxu0 0.0
    %v925 = vand.u32 %v61, 4294901760
    %926 = vmatpush1.msra.mxu0 %v925
    %927 = vmatprep.subr.mxu0 0.0
    %v928 = vand.u32 %v62, 4294901760
    %929 = vmatpush1.msra.mxu0 %v928
    %930 = vmatprep.subr.mxu0 0.0
    %v931 = vand.u32 %v63, 4294901760
    %932 = vmatpush1.msra.mxu0 %v931
    %933 = vmatprep.subr.mxu0 0.0
    %v934 = vand.u32 %v64, 4294901760
    %935 = vmatpush1.msra.mxu0 %v934
    %936 = vmatprep.subr.mxu0 0.0
    %v937 = vand.u32 %v65, 4294901760
    %938 = vmatpush1.msra.mxu0 %v937
    %939 = vmatprep.subr.mxu0 0.0
    %v940 = vand.u32 %v66, 4294901760
    %941 = vmatpush1.msra.mxu0 %v940
    %942 = vmatprep.subr.mxu0 0.0
    %v943 = vand.u32 %v67, 4294901760
    %944 = vmatpush1.msra.mxu0 %v943
    %945 = vmatprep.subr.mxu0 0.0
    %v946 = vand.u32 %v68, 4294901760
    %947 = vmatpush1.msra.mxu0 %v946
    %948 = vmatprep.subr.mxu0 0.0
    %v949 = vand.u32 %v69, 4294901760
    %950 = vmatpush1.msra.mxu0 %v949
    %951 = vmatprep.subr.mxu0 0.0
    %v952 = vand.u32 %v70, 4294901760
    %953 = vmatpush1.msra.mxu0 %v952
    %954 = vmatprep.subr.mxu0 0.0
    %v955 = vand.u32 %v71, 4294901760
    %956 = vmatpush1.msra.mxu0 %v955
    %957 = vmatprep.subr.mxu0 0.0
    %v958 = vand.u32 %v72, 4294901760
    %959 = vmatpush1.msra.mxu0 %v958
    %960 = vmatprep.subr.mxu0 0.0
    %v961 = vand.u32 %v73, 4294901760
    %962 = vmatpush1.msra.mxu0 %v961
    %963 = vmatprep.subr.mxu0 0.0
    %v964 = vand.u32 %v74, 4294901760
    %965 = vmatpush1.msra.mxu0 %v964
    %966 = vmatprep.subr.mxu0 0.0
    %v967 = vand.u32 %v75, 4294901760
    %968 = vmatpush1.msra.mxu0 %v967
    %969 = vmatprep.subr.mxu0 0.0
    %v970 = vand.u32 %v76, 4294901760
    %971 = vmatpush1.msra.mxu0 %v970
    %972 = vmatprep.subr.mxu0 0.0
    %v973 = vand.u32 %v77, 4294901760
    %974 = vmatpush1.msra.mxu0 %v973
    %975 = vmatprep.subr.mxu0 0.0
    %v976 = vand.u32 %v78, 4294901760
    %977 = vmatpush1.msra.mxu0 %v976
    %978 = vmatprep.subr.mxu0 0.0
    %v979 = vand.u32 %v79, 4294901760
    %980 = vmatpush1.msra.mxu0 %v979
    %981 = vmatprep.subr.mxu0 0.0
    %v982 = vand.u32 %v80, 4294901760
    %983 = vmatpush1.msra.mxu0 %v982
    %v984 = vand.u32 %v46, 4294901760
    %985 = vmatprep.mubr.f32.mxu0 %v984
    %v986 = vand.u32 %v45, 4294901760
    %987 = vmatmul.mubr.f32.gmra.mrb[0].mxu0 %v986
    %v988 = vpop.f32.mrb[0].mxu0
    %v989 = vadd.f32 %v878, %v988
    %v990 = vpop.f32.mrb[0].mxu0
    %v991 = vand.u32 %v48, 4294901760
    %992 = vmatprep.mubr.f32.mxu0 %v991
    %v993 = vand.u32 %v47, 4294901760
    %994 = vmatmul.mubr.f32.gmra.mrb[0].mxu0 %v993
    %v995 = vpop.f32.mrb[0].mxu0
    %v996 = vadd.f32 %v885, %v995
    %v997 = vpop.f32.mrb[0].mxu0
    %998 = vdwg.mxu0
    %999 = vst [vmem:[#allocation5] sm:$0xff] %v989
    %1000 = vst [vmem:[#allocation5 + $0x8] sm:$0xff] %v996
    // Predicated region
    $region14: #{tpu_custom_call.1} parent=1 // pred_check
      _
    $region15: #{tpu_custom_call.1} parent=1 // pred_check_branch
      %1002 = sbr.rel (0) target = $region17
    $region16: #{tpu_custom_call.1} parent=1 // pred_region
      %s1004 = ssub.s32 256, 256
      %1005 = vsyncadd [#allocation4], %s1004
      %s1006 = sshll.u32 [#allocation5], 4
      %s1007 = int_to_ptr.vmem [resolvable:$true] %s1006
      %1012 = dma.vmem_to_hbm [thread:$0]  %s1007, 256, %s2, [#allocation4], 128, 128, 8
    $region17: #{tpu_custom_call.1} parent=1 // pred_fallthru
      _
    // Predicated region
    $region18: #{tpu_custom_call.1} parent=1 // pred_check
      _
    $region19: #{tpu_custom_call.1} parent=1 // pred_check_branch
      %1014 = sbr.rel (0) target = $region21
    $region20: #{tpu_custom_call.1} parent=1 // pred_region
      %1015 = dma.done [#allocation4], 256
    $region21: #{tpu_custom_call.1} parent=1 // pred_fallthru
      _
    %1016 = vsyncpa [#allocation3], 1
    %1017 = vsyncpa [#allocation4], 1

// kernel: tpu_custom_call.1
$region0: #{tpu_custom_call.1}
  #allocation0 [shape = 'u32[]', space=smem, size = 0x4, offset = 0x4, fixed_abs, tag = 'smem constant byte address 0x4 - core index']
  #allocation1 [shape = 'u32[144,128]{1,0:T(1,128)}', space=vmem, size = 0x12000, scoped, tag = 'internal scratch']
  #allocation2 [shape = 's32[16]{0}', space=sflag, size = 0x40, scoped, tag = 'scratch operand']
  #allocation3 [shape = 's32[1]{0}', space=sflag, size = 0x4, scoped, tag = 'scoped memory for tpu_custom_call.1']
  #allocation4 [shape = 'u8[512]{0}', space=smem, size = 0x200, scoped, tag = 'prefetched SMEM operand 0']
  #allocation7 [shape = 's32[]', space=sflag, size = 0x4, offset = 0, fixed_abs, tag = 'sflag constant byte address 0x0 - dummy sync flag']
  #allocation8 [shape = 's32[]', space=sflag, size = 0x4, offset = 0, fixed_abs, tag = 'sflag constant byte address 0x0 - dummy sync flag']
  #allocation9 [shape = 'u32[]', space=smem, size = 0x4, offset = 0x44, fixed_abs, tag = 'smem constant byte address 0x44 - assertion arg 0']
  #allocation10 [shape = 'u32[]', space=smem, size = 0x4, offset = 0x48, fixed_abs, tag = 'smem constant byte address 0x48 - assertion arg 1']
  #allocation11 [shape = 's32[]', space=sflag, size = 0x4, offset = 0, fixed_abs, tag = 'sflag constant byte address 0x0 - dummy sync flag']
  #allocation12 [shape = 's32[]', space=sflag, size = 0x4, offset = 0, fixed_abs, tag = 'sflag constant byte address 0x0 - dummy sync flag']
  #allocation13 [shape = 's32[]', space=sflag, size = 0x4, offset = 0, fixed_abs, tag = 'sflag constant byte address 0x0 - dummy sync flag']
  #allocation14 [shape = 's32[]', space=sflag, size = 0x4, offset = 0, fixed_abs, tag = 'sflag constant byte address 0x0 - dummy sync flag']
  #allocation15 [shape = 's32[]', space=sflag, size = 0x4, offset = 0, fixed_abs, tag = 'sflag constant byte address 0x0 - dummy sync flag']
  #allocation16 [shape = 's32[]', space=sflag, size = 0x4, offset = 0, fixed_abs, tag = 'sflag constant byte address 0x0 - dummy sync flag']
  #allocation17 [shape = 's32[]', space=sflag, size = 0x4, offset = 0, fixed_abs, tag = 'sflag constant byte address 0x0 - dummy sync flag']
  #allocation18 [shape = 's32[]', space=sflag, size = 0x4, offset = 0, fixed_abs, tag = 'sflag constant byte address 0x0 - dummy sync flag']
  #allocation19 [shape = 's32[]', space=sflag, size = 0x4, offset = 0, fixed_abs, tag = 'sflag constant byte address 0x0 - dummy sync flag']
  #allocation20 [shape = 's32[]', space=sflag, size = 0x4, offset = 0, fixed_abs, tag = 'sflag constant byte address 0x0 - dummy sync flag']
  #allocation21 [shape = 's32[]', space=sflag, size = 0x4, offset = 0, fixed_abs, tag = 'sflag constant byte address 0x0 - dummy sync flag']
  #allocation22 [shape = 's32[]', space=sflag, size = 0x4, offset = 0, fixed_abs, tag = 'sflag constant byte address 0x0 - dummy sync flag']
  #allocation23 [shape = 's32[]', space=sflag, size = 0x4, offset = 0, fixed_abs, tag = 'sflag constant byte address 0x0 - dummy sync flag']
  #allocation24 [shape = 's32[]', space=sflag, size = 0x4, offset = 0, fixed_abs, tag = 'sflag constant byte address 0x0 - dummy sync flag']
  #allocation25 [shape = 's32[]', space=sflag, size = 0x4, offset = 0, fixed_abs, tag = 'sflag constant byte address 0x0 - dummy sync flag']
  #allocation26 [shape = 's32[]', space=sflag, size = 0x4, offset = 0, fixed_abs, tag = 'sflag constant byte address 0x0 - dummy sync flag']
  #allocation27 [shape = 's32[]', space=sflag, size = 0x4, offset = 0, fixed_abs, tag = 'sflag constant byte address 0x0 - dummy sync flag']
  #allocation28 [shape = 's32[]', space=sflag, size = 0x4, offset = 0, fixed_abs, tag = 'sflag constant byte address 0x0 - dummy sync flag']
  #allocation29 [shape = 's32[]', space=sflag, size = 0x4, offset = 0, fixed_abs, tag = 'sflag constant byte address 0x0 - dummy sync flag']
  #allocation30 [shape = 's32[]', space=sflag, size = 0x4, offset = 0, fixed_abs, tag = 'sflag constant byte address 0x0 - dummy sync flag']
  #allocation31 [shape = 's32[]', space=sflag, size = 0x4, offset = 0, fixed_abs, tag = 'sflag constant byte address 0x0 - dummy sync flag']
  #allocation32 [shape = 's32[]', space=sflag, size = 0x4, offset = 0, fixed_abs, tag = 'sflag constant byte address 0x0 - dummy sync flag']
  #allocation33 [shape = 's32[]', space=sflag, size = 0x4, offset = 0, fixed_abs, tag = 'sflag constant byte address 0x0 - dummy sync flag']
  #allocation34 [shape = 's32[]', space=sflag, size = 0x4, offset = 0, fixed_abs, tag = 'sflag constant byte address 0x0 - dummy sync flag']
  #allocation35 [shape = 's32[]', space=sflag, size = 0x4, offset = 0, fixed_abs, tag = 'sflag constant byte address 0x0 - dummy sync flag']
  #allocation36 [shape = 's32[]', space=sflag, size = 0x4, offset = 0, fixed_abs, tag = 'sflag constant byte address 0x0 - dummy sync flag']
  #allocation37 [shape = 's32[]', space=sflag, size = 0x4, offset = 0, fixed_abs, tag = 'sflag constant byte address 0x0 - dummy sync flag']
  #allocation38 [shape = 's32[]', space=sflag, size = 0x4, offset = 0, fixed_abs, tag = 'sflag constant byte address 0x0 - dummy sync flag']
  #allocation39 [shape = 's32[]', space=sflag, size = 0x4, offset = 0, fixed_abs, tag = 'sflag constant byte address 0x0 - dummy sync flag']
  #allocation40 [shape = 's32[]', space=sflag, size = 0x4, offset = 0, fixed_abs, tag = 'sflag constant byte address 0x0 - dummy sync flag']
  #allocation41 [shape = 's32[]', space=sflag, size = 0x4, offset = 0, fixed_abs, tag = 'sflag constant byte address 0x0 - dummy sync flag']
  #allocation42 [shape = 's32[]', space=sflag, size = 0x4, offset = 0, fixed_abs, tag = 'sflag constant byte address 0x0 - dummy sync flag']
  %s0 = inlined_call_operand.hbm [shape: s32[16], index: 0, kind: input, shape index: {}]
  %s1 = inlined_call_operand.hbm [shape: f32[256,128], index: 1, kind: input, shape index: {}]
  %s2 = inlined_call_operand.hbm [shape: f32[16,128], index: 2, kind: output, shape index: {}]
  %s3 = sld [smem:[#allocation0]]
  $region89: #{tpu_custom_call.1} parent=0
    _
  %s5 = ssub.s32 1, %s3
  %s6 = scalar_select 0, %s5, %s3
  %8 = dma.hbm_to_smem %s0, 16, [#allocation4], [#allocation3]
  %9 = dma.done [#allocation3], 16
  %10 = sfence
  $region1: #{tpu_custom_call.1} parent=0
    #allocation5 [shape = 'u8[8192]{0}', space=vmem, size = 0x2000, scoped, tag = 'output window, operand 0, single buffered']
    #allocation6 [shape = 's32[1]{0}', space=sflag, size = 0x4, scoped, tag = 'scoped memory for tpu_custom_call.1']
    %11 = vsyncpa [#allocation6], 0
    %s12 = smul.u32 0, 16
    %s13 = sld [smem:[#allocation4 + %s12]]
    %s14 = smul.addr %s13, 16
    %s15 = scalar_lea.hbm %s1, %s14
    // Predicated region
    $region2: #{tpu_custom_call.1} parent=1 // pred_check
      _
    $region3: #{tpu_custom_call.1} parent=1 // pred_check_branch
      %17 = sbr.rel target = $region5
    $region4: #{tpu_custom_call.1} parent=1 // pred_region
      %18 = sst [smem:[#allocation9]] [#allocation8]
      %19 = sst [smem:[#allocation10]] [#allocation7]
    $region5: #{tpu_custom_call.1} parent=1 // pred_fallthru
      _
    %21 = shalt.err (0)
    %s23 = sshll.u32 [#allocation5], 4
    %s24 = int_to_ptr.vmem [resolvable:$true] %s23
    %26 = dma.hbm_to_vmem [thread:$0]  %s15, 16, %s24, [#allocation2]
    %s27 = sadd.s32 %s12, 1
    %s28 = sld [smem:[#allocation4 + %s27]]
    %s29 = smul.addr %s28, 16
    %s30 = scalar_lea.hbm %s1, %s29
    %s31 = scalar_lea.vmem [#allocation5], 1
    %s32 = scalar_lea.sflag [#allocation2], 1
    // Predicated region
    $region6: #{tpu_custom_call.1} parent=1 // pred_check
      _
    $region7: #{tpu_custom_call.1} parent=1 // pred_check_branch
      %34 = sbr.rel target = $region9
    $region8: #{tpu_custom_call.1} parent=1 // pred_region
      %35 = sst [smem:[#allocation9]] [#allocation12]
      %36 = sst [smem:[#allocation10]] [#allocation11]
    $region9: #{tpu_custom_call.1} parent=1 // pred_fallthru
      _
    %38 = shalt.err (0)
    %s40 = sshll.u32 %s31, 4
    %s41 = int_to_ptr.vmem [resolvable:$true] %s40
    %43 = dma.hbm_to_vmem [thread:$0]  %s30, 16, %s41, %s32
    %s44 = sadd.s32 %s12, 2
    %s45 = sld [smem:[#allocation4 + %s44]]
    %s46 = smul.addr %s45, 16
    %s47 = scalar_lea.hbm %s1, %s46
    %s48 = scalar_lea.vmem [#allocation5], 2
    %s49 = scalar_lea.sflag [#allocation2], 2
    // Predicated region
    $region10: #{tpu_custom_call.1} parent=1 // pred_check
      _
    $region11: #{tpu_custom_call.1} parent=1 // pred_check_branch
      %51 = sbr.rel target = $region13
    $region12: #{tpu_custom_call.1} parent=1 // pred_region
      %52 = sst [smem:[#allocation9]] [#allocation14]
      %53 = sst [smem:[#allocation10]] [#allocation13]
    $region13: #{tpu_custom_call.1} parent=1 // pred_fallthru
      _
    %55 = shalt.err (0)
    %s57 = sshll.u32 %s48, 4
    %s58 = int_to_ptr.vmem [resolvable:$true] %s57
    %60 = dma.hbm_to_vmem [thread:$0]  %s47, 16, %s58, %s49
    %s61 = sadd.s32 %s12, 3
    %s62 = sld [smem:[#allocation4 + %s61]]
    %s63 = smul.addr %s62, 16
    %s64 = scalar_lea.hbm %s1, %s63
    %s65 = scalar_lea.vmem [#allocation5], 3
    %s66 = scalar_lea.sflag [#allocation2], 3
    // Predicated region
    $region14: #{tpu_custom_call.1} parent=1 // pred_check
      _
    $region15: #{tpu_custom_call.1} parent=1 // pred_check_branch
      %68 = sbr.rel target = $region17
    $region16: #{tpu_custom_call.1} parent=1 // pred_region
      %69 = sst [smem:[#allocation9]] [#allocation16]
      %70 = sst [smem:[#allocation10]] [#allocation15]
    $region17: #{tpu_custom_call.1} parent=1 // pred_fallthru
      _
    %72 = shalt.err (0)
    %s74 = sshll.u32 %s65, 4
    %s75 = int_to_ptr.vmem [resolvable:$true] %s74
    %77 = dma.hbm_to_vmem [thread:$0]  %s64, 16, %s75, %s66
    %s78 = sadd.s32 %s12, 4
    %s79 = sld [smem:[#allocation4 + %s78]]
    %s80 = smul.addr %s79, 16
    %s81 = scalar_lea.hbm %s1, %s80
    %s82 = scalar_lea.vmem [#allocation5], 4
    %s83 = scalar_lea.sflag [#allocation2], 4
    // Predicated region
    $region18: #{tpu_custom_call.1} parent=1 // pred_check
      _
    $region19: #{tpu_custom_call.1} parent=1 // pred_check_branch
      %85 = sbr.rel target = $region21
    $region20: #{tpu_custom_call.1} parent=1 // pred_region
      %86 = sst [smem:[#allocation9]] [#allocation18]
      %87 = sst [smem:[#allocation10]] [#allocation17]
    $region21: #{tpu_custom_call.1} parent=1 // pred_fallthru
      _
    %89 = shalt.err (0)
    %s91 = sshll.u32 %s82, 4
    %s92 = int_to_ptr.vmem [resolvable:$true] %s91
    %94 = dma.hbm_to_vmem [thread:$0]  %s81, 16, %s92, %s83
    %s95 = sadd.s32 %s12, 5
    %s96 = sld [smem:[#allocation4 + %s95]]
    %s97 = smul.addr %s96, 16
    %s98 = scalar_lea.hbm %s1, %s97
    %s99 = scalar_lea.vmem [#allocation5], 5
    %s100 = scalar_lea.sflag [#allocation2], 5
    // Predicated region
    $region22: #{tpu_custom_call.1} parent=1 // pred_check
      _
    $region23: #{tpu_custom_call.1} parent=1 // pred_check_branch
      %102 = sbr.rel target = $region25
    $region24: #{tpu_custom_call.1} parent=1 // pred_region
      %103 = sst [smem:[#allocation9]] [#allocation20]
      %104 = sst [smem:[#allocation10]] [#allocation19]
    $region25: #{tpu_custom_call.1} parent=1 // pred_fallthru
      _
    %106 = shalt.err (0)
    %s108 = sshll.u32 %s99, 4
    %s109 = int_to_ptr.vmem [resolvable:$true] %s108
    %111 = dma.hbm_to_vmem [thread:$0]  %s98, 16, %s109, %s100
    %s112 = sadd.s32 %s12, 6
    %s113 = sld [smem:[#allocation4 + %s112]]
    %s114 = smul.addr %s113, 16
    %s115 = scalar_lea.hbm %s1, %s114
    %s116 = scalar_lea.vmem [#allocation5], 6
    %s117 = scalar_lea.sflag [#allocation2], 6
    // Predicated region
    $region26: #{tpu_custom_call.1} parent=1 // pred_check
      _
    $region27: #{tpu_custom_call.1} parent=1 // pred_check_branch
      %119 = sbr.rel target = $region29
    $region28: #{tpu_custom_call.1} parent=1 // pred_region
      %120 = sst [smem:[#allocation9]] [#allocation22]
      %121 = sst [smem:[#allocation10]] [#allocation21]
    $region29: #{tpu_custom_call.1} parent=1 // pred_fallthru
      _
    %123 = shalt.err (0)
    %s125 = sshll.u32 %s116, 4
    %s126 = int_to_ptr.vmem [resolvable:$true] %s125
    %128 = dma.hbm_to_vmem [thread:$0]  %s115, 16, %s126, %s117
    %s129 = sadd.s32 %s12, 7
    %s130 = sld [smem:[#allocation4 + %s129]]
    %s131 = smul.addr %s130, 16
    %s132 = scalar_lea.hbm %s1, %s131
    %s133 = scalar_lea.vmem [#allocation5], 7
    %s134 = scalar_lea.sflag [#allocation2], 7
    // Predicated region
    $region30: #{tpu_custom_call.1} parent=1 // pred_check
      _
    $region31: #{tpu_custom_call.1} parent=1 // pred_check_branch
      %136 = sbr.rel target = $region33
    $region32: #{tpu_custom_call.1} parent=1 // pred_region
      %137 = sst [smem:[#allocation9]] [#allocation24]
      %138 = sst [smem:[#allocation10]] [#allocation23]
    $region33: #{tpu_custom_call.1} parent=1 // pred_fallthru
      _
    %140 = shalt.err (0)
    %s142 = sshll.u32 %s133, 4
    %s143 = int_to_ptr.vmem [resolvable:$true] %s142
    %145 = dma.hbm_to_vmem [thread:$0]  %s132, 16, %s143, %s134
    %s146 = sadd.s32 %s12, 8
    %s147 = sld [smem:[#allocation4 + %s146]]
    %s148 = smul.addr %s147, 16
    %s149 = scalar_lea.hbm %s1, %s148
    %s150 = scalar_lea.vmem [#allocation5], 8
    %s151 = scalar_lea.sflag [#allocation2], 8
    // Predicated region
    $region34: #{tpu_custom_call.1} parent=1 // pred_check
      _
    $region35: #{tpu_custom_call.1} parent=1 // pred_check_branch
      %153 = sbr.rel target = $region37
    $region36: #{tpu_custom_call.1} parent=1 // pred_region
      %154 = sst [smem:[#allocation9]] [#allocation26]
      %155 = sst [smem:[#allocation10]] [#allocation25]
    $region37: #{tpu_custom_call.1} parent=1 // pred_fallthru
      _
    %157 = shalt.err (0)
    %s159 = sshll.u32 %s150, 4
    %s160 = int_to_ptr.vmem [resolvable:$true] %s159
    %162 = dma.hbm_to_vmem [thread:$0]  %s149, 16, %s160, %s151
    %s163 = sadd.s32 %s12, 9
    %s164 = sld [smem:[#allocation4 + %s163]]
    %s165 = smul.addr %s164, 16
    %s166 = scalar_lea.hbm %s1, %s165
    %s167 = scalar_lea.vmem [#allocation5], 9
    %s168 = scalar_lea.sflag [#allocation2], 9
    // Predicated region
    $region38: #{tpu_custom_call.1} parent=1 // pred_check
      _
    $region39: #{tpu_custom_call.1} parent=1 // pred_check_branch
      %170 = sbr.rel target = $region41
    $region40: #{tpu_custom_call.1} parent=1 // pred_region
      %171 = sst [smem:[#allocation9]] [#allocation28]
      %172 = sst [smem:[#allocation10]] [#allocation27]
    $region41: #{tpu_custom_call.1} parent=1 // pred_fallthru
      _
    %174 = shalt.err (0)
    %s176 = sshll.u32 %s167, 4
    %s177 = int_to_ptr.vmem [resolvable:$true] %s176
    %179 = dma.hbm_to_vmem [thread:$0]  %s166, 16, %s177, %s168
    %s180 = sadd.s32 %s12, 10
    %s181 = sld [smem:[#allocation4 + %s180]]
    %s182 = smul.addr %s181, 16
    %s183 = scalar_lea.hbm %s1, %s182
    %s184 = scalar_lea.vmem [#allocation5], 10
    %s185 = scalar_lea.sflag [#allocation2], 10
    // Predicated region
    $region42: #{tpu_custom_call.1} parent=1 // pred_check
      _
    $region43: #{tpu_custom_call.1} parent=1 // pred_check_branch
      %187 = sbr.rel target = $region45
    $region44: #{tpu_custom_call.1} parent=1 // pred_region
      %188 = sst [smem:[#allocation9]] [#allocation30]
      %189 = sst [smem:[#allocation10]] [#allocation29]
    $region45: #{tpu_custom_call.1} parent=1 // pred_fallthru
      _
    %191 = shalt.err (0)
    %s193 = sshll.u32 %s184, 4
    %s194 = int_to_ptr.vmem [resolvable:$true] %s193
    %196 = dma.hbm_to_vmem [thread:$0]  %s183, 16, %s194, %s185
    %s197 = sadd.s32 %s12, 11
    %s198 = sld [smem:[#allocation4 + %s197]]
    %s199 = smul.addr %s198, 16
    %s200 = scalar_lea.hbm %s1, %s199
    %s201 = scalar_lea.vmem [#allocation5], 11
    %s202 = scalar_lea.sflag [#allocation2], 11
    // Predicated region
    $region46: #{tpu_custom_call.1} parent=1 // pred_check
      _
    $region47: #{tpu_custom_call.1} parent=1 // pred_check_branch
      %204 = sbr.rel target = $region49
    $region48: #{tpu_custom_call.1} parent=1 // pred_region
      %205 = sst [smem:[#allocation9]] [#allocation32]
      %206 = sst [smem:[#allocation10]] [#allocation31]
    $region49: #{tpu_custom_call.1} parent=1 // pred_fallthru
      _
    %208 = shalt.err (0)
    %s210 = sshll.u32 %s201, 4
    %s211 = int_to_ptr.vmem [resolvable:$true] %s210
    %213 = dma.hbm_to_vmem [thread:$0]  %s200, 16, %s211, %s202
    %s214 = sadd.s32 %s12, 12
    %s215 = sld [smem:[#allocation4 + %s214]]
    %s216 = smul.addr %s215, 16
    %s217 = scalar_lea.hbm %s1, %s216
    %s218 = scalar_lea.vmem [#allocation5], 12
    %s219 = scalar_lea.sflag [#allocation2], 12
    // Predicated region
    $region50: #{tpu_custom_call.1} parent=1 // pred_check
      _
    $region51: #{tpu_custom_call.1} parent=1 // pred_check_branch
      %221 = sbr.rel target = $region53
    $region52: #{tpu_custom_call.1} parent=1 // pred_region
      %222 = sst [smem:[#allocation9]] [#allocation34]
      %223 = sst [smem:[#allocation10]] [#allocation33]
    $region53: #{tpu_custom_call.1} parent=1 // pred_fallthru
      _
    %225 = shalt.err (0)
    %s227 = sshll.u32 %s218, 4
    %s228 = int_to_ptr.vmem [resolvable:$true] %s227
    %230 = dma.hbm_to_vmem [thread:$0]  %s217, 16, %s228, %s219
    %s231 = sadd.s32 %s12, 13
    %s232 = sld [smem:[#allocation4 + %s231]]
    %s233 = smul.addr %s232, 16
    %s234 = scalar_lea.hbm %s1, %s233
    %s235 = scalar_lea.vmem [#allocation5], 13
    %s236 = scalar_lea.sflag [#allocation2], 13
    // Predicated region
    $region54: #{tpu_custom_call.1} parent=1 // pred_check
      _
    $region55: #{tpu_custom_call.1} parent=1 // pred_check_branch
      %238 = sbr.rel target = $region57
    $region56: #{tpu_custom_call.1} parent=1 // pred_region
      %239 = sst [smem:[#allocation9]] [#allocation36]
      %240 = sst [smem:[#allocation10]] [#allocation35]
    $region57: #{tpu_custom_call.1} parent=1 // pred_fallthru
      _
    %242 = shalt.err (0)
    %s244 = sshll.u32 %s235, 4
    %s245 = int_to_ptr.vmem [resolvable:$true] %s244
    %247 = dma.hbm_to_vmem [thread:$0]  %s234, 16, %s245, %s236
    %s248 = sadd.s32 %s12, 14
    %s249 = sld [smem:[#allocation4 + %s248]]
    %s250 = smul.addr %s249, 16
    %s251 = scalar_lea.hbm %s1, %s250
    %s252 = scalar_lea.vmem [#allocation5], 14
    %s253 = scalar_lea.sflag [#allocation2], 14
    // Predicated region
    $region58: #{tpu_custom_call.1} parent=1 // pred_check
      _
    $region59: #{tpu_custom_call.1} parent=1 // pred_check_branch
      %255 = sbr.rel target = $region61
    $region60: #{tpu_custom_call.1} parent=1 // pred_region
      %256 = sst [smem:[#allocation9]] [#allocation38]
      %257 = sst [smem:[#allocation10]] [#allocation37]
    $region61: #{tpu_custom_call.1} parent=1 // pred_fallthru
      _
    %259 = shalt.err (0)
    %s261 = sshll.u32 %s252, 4
    %s262 = int_to_ptr.vmem [resolvable:$true] %s261
    %264 = dma.hbm_to_vmem [thread:$0]  %s251, 16, %s262, %s253
    %s265 = sadd.s32 %s12, 15
    %s266 = sld [smem:[#allocation4 + %s265]]
    %s267 = smul.addr %s266, 16
    %s268 = scalar_lea.hbm %s1, %s267
    %s269 = scalar_lea.vmem [#allocation5], 15
    %s270 = scalar_lea.sflag [#allocation2], 15
    // Predicated region
    $region62: #{tpu_custom_call.1} parent=1 // pred_check
      _
    $region63: #{tpu_custom_call.1} parent=1 // pred_check_branch
      %272 = sbr.rel target = $region65
    $region64: #{tpu_custom_call.1} parent=1 // pred_region
      %273 = sst [smem:[#allocation9]] [#allocation40]
      %274 = sst [smem:[#allocation10]] [#allocation39]
    $region65: #{tpu_custom_call.1} parent=1 // pred_fallthru
      _
    %276 = shalt.err (0)
    %s278 = sshll.u32 %s269, 4
    %s279 = int_to_ptr.vmem [resolvable:$true] %s278
    %281 = dma.hbm_to_vmem [thread:$0]  %s268, 16, %s279, %s270
    loop: start=0, step=1, limit=16
    $region66: #{tpu_custom_call.1} parent=1 // loop_pre_header
      _
    $region67: #{tpu_custom_call.1} parent=1 // loop_header
      %s283 = sphi 0, %s287
      %p284 = scmp.ge.s32.totalorder %s283, 16
    $region68: #{tpu_custom_call.1} parent=1 // loop_header_branch
      %286 = sbr.rel (%p284) target = $region72
    $region69: #{tpu_custom_call.1} parent=1 // loop_body
      %s288 = sadd.s32 %s12, %s283
      %s289 = sld [smem:[#allocation4 + %s288]]
      %s290 = sadd.s32 %s288, 16
      %p291 = scmp.lt.s32.totalorder %s290, 15
      %s292 = scalar_select %p291, %s290, 15
      %s293 = sld [smem:[#allocation4 + %s292]]
      %p294 = scmp.lt.s32.totalorder %s283, 0
      %s295 = ssub.s32 0, %s283
      %s296 = scalar_select %p294, %s295, %s283
      %s297 = sand.u32 %s296, 15
      %s298 = ssub.s32 0, %s297
      %s299 = scalar_select %p294, %s298, %s297
      %p300 = scmp.ne.s32.totalorder %s299, 0
      %p301 = scmp.lt.s32.totalorder %s299, 0
      %p302 = pnand %p301, %p300
      %p303 = pneg %p302
      %s304 = sadd.s32 %s299, 16
      %s305 = scalar_select %p303, %s304, %s299
      %s306 = scalar_lea.sflag [#allocation2], %s305
      %s307 = smul.u32 1, 1
      %s308 = sshll.u32 %s307, 4
      %309 = dma.done %s306, %s308
      %s310 = sadd.s32 %s283, 16
      %p311 = scmp.lt.s32.totalorder %s310, 16
      // Predicated region
      $region73: #{tpu_custom_call.1} parent=69 // pred_check
        %p312 = pneg %p311
      $region74: #{tpu_custom_call.1} parent=69 // pred_check_branch
        %314 = sbr.rel (%p312) target = $region76
      $region75: #{tpu_custom_call.1} parent=69 // pred_region
        %p315 = scmp.lt.s32.totalorder %s310, 0
        %s316 = ssub.s32 0, %s310
        %s317 = scalar_select %p315, %s316, %s310
        %s318 = sand.u32 %s317, 15
        %s319 = ssub.s32 0, %s318
        %s320 = scalar_select %p315, %s319, %s318
        %p321 = scmp.ne.s32.totalorder %s320, 0
        %p322 = scmp.lt.s32.totalorder %s320, 0
        %p323 = pnand %p322, %p321
        %p324 = pneg %p323
        %s325 = sadd.s32 %s320, 16
        %s326 = scalar_select %p324, %s325, %s320
        %s327 = smul.addr %s293, 16
        %s328 = scalar_lea.hbm %s1, %s327
        %s329 = scalar_lea.vmem [#allocation5], %s310
        %s330 = scalar_lea.sflag [#allocation2], %s326
        // Predicated region
        $region77: #{tpu_custom_call.1} parent=75 // pred_check
          _
        $region78: #{tpu_custom_call.1} parent=75 // pred_check_branch
          %332 = sbr.rel target = $region80
        $region79: #{tpu_custom_call.1} parent=75 // pred_region
          %333 = sst [smem:[#allocation9]] [#allocation42]
          %334 = sst [smem:[#allocation10]] [#allocation41]
        $region80: #{tpu_custom_call.1} parent=75 // pred_fallthru
          _
        %336 = shalt.err (0)
        %s338 = sshll.u32 %s329, 4
        %s339 = int_to_ptr.vmem [resolvable:$true] %s338
        %341 = dma.hbm_to_vmem [thread:$0]  %s328, 16, %s339, %s330
      $region76: #{tpu_custom_call.1} parent=69 // pred_fallthru
        _
    $region70: #{tpu_custom_call.1} parent=1 // loop_footer
      %s287 = sadd.s32 1, %s283
    $region71: #{tpu_custom_call.1} parent=1 // loop_footer_branch
      %282 = sbr.rel target = $region67
    $region72: #{tpu_custom_call.1} parent=1 // loop_exit
      _
    // Predicated region
    $region81: #{tpu_custom_call.1} parent=1 // pred_check
      _
    $region82: #{tpu_custom_call.1} parent=1 // pred_check_branch
      %343 = sbr.rel (0) target = $region84
    $region83: #{tpu_custom_call.1} parent=1 // pred_region
      %s345 = ssub.s32 256, 256
      %346 = vsyncadd [#allocation6], %s345
      %s347 = sshll.u32 [#allocation5], 4
      %s348 = int_to_ptr.vmem [resolvable:$true] %s347
      %353 = dma.vmem_to_hbm [thread:$0]  %s348, 256, %s2, [#allocation6], 128, 128, 8
    $region84: #{tpu_custom_call.1} parent=1 // pred_fallthru
      _
    // Predicated region
    $region85: #{tpu_custom_call.1} parent=1 // pred_check
      _
    $region86: #{tpu_custom_call.1} parent=1 // pred_check_branch
      %355 = sbr.rel (0) target = $region88
    $region87: #{tpu_custom_call.1} parent=1 // pred_region
      %356 = dma.done [#allocation6], 256
    $region88: #{tpu_custom_call.1} parent=1 // pred_fallthru
      _
    %357 = vsyncpa [#allocation6], 1
  %358 = vsyncmov [#allocation2]
  %s359 = vpop.sfrf %358
  %p360 = scmp.eq.s32.totalorder %s359, 0
  %p361 = pneg %p360
  %363 = shalt.err (%p361)
  %s364 = scalar_lea.sflag [#allocation2], 1
  %365 = vsyncmov %s364
  %s366 = vpop.sfrf %365
  %p367 = scmp.eq.s32.totalorder %s366, 0
  %p368 = pneg %p367
  %370 = shalt.err (%p368)
  %s371 = scalar_lea.sflag [#allocation2], 2
  %372 = vsyncmov %s371
  %s373 = vpop.sfrf %372
  %p374 = scmp.eq.s32.totalorder %s373, 0
  %p375 = pneg %p374
  %377 = shalt.err (%p375)
  %s378 = scalar_lea.sflag [#allocation2], 3
  %379 = vsyncmov %s378
  %s380 = vpop.sfrf %379
  %p381 = scmp.eq.s32.totalorder %s380, 0
  %p382 = pneg %p381
  %384 = shalt.err (%p382)
  %s385 = scalar_lea.sflag [#allocation2], 4
  %386 = vsyncmov %s385
  %s387 = vpop.sfrf %386
  %p388 = scmp.eq.s32.totalorder %s387, 0
  %p389 = pneg %p388
  %391 = shalt.err (%p389)
  %s392 = scalar_lea.sflag [#allocation2], 5
  %393 = vsyncmov %s392
  %s394 = vpop.sfrf %393
  %p395 = scmp.eq.s32.totalorder %s394, 0
  %p396 = pneg %p395
  %398 = shalt.err (%p396)
  %s399 = scalar_lea.sflag [#allocation2], 6
  %400 = vsyncmov %s399
  %s401 = vpop.sfrf %400
  %p402 = scmp.eq.s32.totalorder %s401, 0
  %p403 = pneg %p402
  %405 = shalt.err (%p403)
  %s406 = scalar_lea.sflag [#allocation2], 7
  %407 = vsyncmov %s406
  %s408 = vpop.sfrf %407
  %p409 = scmp.eq.s32.totalorder %s408, 0
  %p410 = pneg %p409
  %412 = shalt.err (%p410)
  %s413 = scalar_lea.sflag [#allocation2], 8
  %414 = vsyncmov %s413
  %s415 = vpop.sfrf %414
  %p416 = scmp.eq.s32.totalorder %s415, 0
  %p417 = pneg %p416
  %419 = shalt.err (%p417)
  %s420 = scalar_lea.sflag [#allocation2], 9
  %421 = vsyncmov %s420
  %s422 = vpop.sfrf %421
  %p423 = scmp.eq.s32.totalorder %s422, 0
  %p424 = pneg %p423
  %426 = shalt.err (%p424)
  %s427 = scalar_lea.sflag [#allocation2], 10
  %428 = vsyncmov %s427
  %s429 = vpop.sfrf %428
  %p430 = scmp.eq.s32.totalorder %s429, 0
  %p431 = pneg %p430
  %433 = shalt.err (%p431)
  %s434 = scalar_lea.sflag [#allocation2], 11
  %435 = vsyncmov %s434
  %s436 = vpop.sfrf %435
  %p437 = scmp.eq.s32.totalorder %s436, 0
  %p438 = pneg %p437
  %440 = shalt.err (%p438)
  %s441 = scalar_lea.sflag [#allocation2], 12
  %442 = vsyncmov %s441
  %s443 = vpop.sfrf %442
  %p444 = scmp.eq.s32.totalorder %s443, 0
  %p445 = pneg %p444
  %447 = shalt.err (%p445)
  %s448 = scalar_lea.sflag [#allocation2], 13
  %449 = vsyncmov %s448
  %s450 = vpop.sfrf %449
  %p451 = scmp.eq.s32.totalorder %s450, 0
  %p452 = pneg %p451
  %454 = shalt.err (%p452)
  %s455 = scalar_lea.sflag [#allocation2], 14
  %456 = vsyncmov %s455
  %s457 = vpop.sfrf %456
  %p458 = scmp.eq.s32.totalorder %s457, 0
  %p459 = pneg %p458
  %461 = shalt.err (%p459)
  %s462 = scalar_lea.sflag [#allocation2], 15
  %463 = vsyncmov %s462
  %s464 = vpop.sfrf %463
  %p465 = scmp.eq.s32.totalorder %s464, 0
  %p466 = pneg %p465
  %468 = shalt.err (%p466)

</llo_original>
